<compile_context>
chip_gen: v7x
topology: tpu7x:2x2x1
jax: 0.10.0
libtpu: 0.0.40
codegen_flags: <defaults>
</compile_context>

<pallas_src>
import functools

import jax
import jax.numpy as jnp
from jax.experimental import pallas as pl
from jax.experimental.pallas import tpu as pltpu


def _round_up(x, m):
    return (x + m - 1) // m * m


def _denoiser_kernel(sigma_ref, x_ref, w1_ref, b1_ref, w2_ref, b2_ref,
                     out_ref, xpad_ref, hpad_ref, res_ref, *, h, w, pad0):
    """Fused conv3x3 -> ReLU -> conv3x3 residual denoiser, one image per step.

    Activation layout: value (i, j) of an (H, W) plane lives at flat lane
    position pad0 + i*(W+2) + j of a (channels, LB) buffer whose remaining
    positions are zero (this is exactly a zero SAME-padding halo).  Every 3x3
    tap is then a pure lane-window slice buf[:, s : s + H*(W+2)], so each conv
    is 9 shifted matmuls with the spatial axis lane-dense on the MXU.

    sigma_ref : SMEM (N,) f32          scalar prefetch, per-image noise level
    x_ref     : (C, H*W)    f32        input image block (channels-first, flat)
    w1_ref    : (9, F, Cin) bf16       conv1 tap weights (already transposed)
    b1_ref    : (F, 1)      f32
    w2_ref    : (9, C, F)   bf16       conv2 tap weights
    b2_ref    : (C, 1)      f32
    out_ref   : (C, H*W)    f32
    xpad_ref  : VMEM (Cin, LB) bf16    padded input (image + noise channel)
    hpad_ref  : VMEM (F,  LB)  bf16    padded hidden activations
    res_ref   : VMEM (C, >=H*(W+2)) f32  residual staging (width-padded frame)
    """
    c = x_ref.shape[0]
    cin, lb = xpad_ref.shape
    f = hpad_ref.shape[0]
    wp = w + 2
    lout = h * wp
    base = pad0 - (wp + 1)            # flat position of padded-coords (0, 0)

    n = pl.program_id(0)
    sigma = sigma_ref[n]

    # Halo zeroing.  xpad: full clear (its interior is written row-wise below,
    # leaving the two zero pad columns per row untouched); hpad: head and tail
    # only (its interior is fully overwritten by one dense store).  Done every
    # step so the "parallel" grid axis stays safe under megacore sharding;
    # all clears are contiguous lane-range stores (no column-strided stores).
    xpad_ref[...] = jnp.zeros_like(xpad_ref)
    hpad_ref[:, :pad0] = jnp.zeros((f, pad0), jnp.bfloat16)
    hpad_ref[:, pad0 + lout:] = jnp.zeros((f, lb - pad0 - lout), jnp.bfloat16)

    # Width mask over the flat frame: 1.0 on the W valid columns of each
    # (W+2)-wide row, 0.0 on the 2 pad columns (built without int div/mod).
    idx = jax.lax.broadcasted_iota(jnp.int32, (1, lout), 1).astype(jnp.float32)
    col = idx - jnp.floor((idx + 0.5) * (1.0 / wp)) * wp
    wmask = (col < w).astype(jnp.float32)                       # (1, lout)

    # Assemble the padded network input directly in VMEM: image channels row by
    # row (each row is a W-wide lane window of the flat input block) plus the
    # constant noise-level channel as a single masked lane-dense store.
    for i in range(h):
        xpad_ref[:c, pad0 + i * wp: pad0 + i * wp + w] = (
            x_ref[:, i * w:(i + 1) * w].astype(jnp.bfloat16))
    xpad_ref[c:, pad0:pad0 + lout] = (sigma * wmask).astype(jnp.bfloat16)

    # conv1 (3x3 SAME) + bias + ReLU: 9 shifted lane-window matmuls accumulated
    # in f32 on the MXU (no im2col patch materialization).
    acc1 = jnp.zeros((f, lout), jnp.float32)
    for t in range(9):
        ky, kx = t // 3, t % 3
        s = base + ky * wp + kx
        acc1 = acc1 + jnp.dot(w1_ref[t], xpad_ref[:, s:s + lout],
                              preferred_element_type=jnp.float32)
    hid = jnp.maximum(acc1 + b1_ref[...], 0.0)                  # (F, lout) f32
    # The 2 junk columns per row land exactly on hpad's zero-padding positions,
    # so mask them before the single lane-dense interior store.
    hpad_ref[:, pad0:pad0 + lout] = (hid * wmask).astype(jnp.bfloat16)

    # conv2 (3x3 SAME) + bias: same scheme, contraction K = F per tap.
    acc2 = jnp.zeros((c, lout), jnp.float32)
    for t in range(9):
        ky, kx = t // 3, t % 3
        s = base + ky * wp + kx
        acc2 = acc2 + jnp.dot(w2_ref[t], hpad_ref[:, s:s + lout],
                              preferred_element_type=jnp.float32)
    res_ref[:, :lout] = acc2 + b2_ref[...]                      # (C, lout) f32

    # DnCNN residual output: x - predicted noise (x stays f32).  Row-wise
    # lane-window copies drop the 2 pad columns per row of the flat frame.
    # (For very large H these unrolled row loops would become a fori_loop.)
    for i in range(h):
        out_ref[:, i * w:(i + 1) * w] = (
            x_ref[:, i * w:(i + 1) * w] - res_ref[:, i * wp:i * wp + w])


def denoise_nchw(x_nchw, sigma, params):
    """x_nchw: (N, C, H, W) f32, sigma: (N,) f32 -> (N, C, H, W) f32."""
    n, c, h, w = x_nchw.shape
    w1, b1, w2, b2 = params                  # HWIO conv weights, (1, ch) biases
    cin, feat = w1.shape[2], w1.shape[3]
    assert cin == c + 1 and w2.shape[2] == feat and w2.shape[3] == c

    wp = w + 2
    lout = h * wp
    pad0 = _round_up(wp + 1, 128)            # lane-aligned interior start
    lb = _round_up(pad0 + lout + wp + 1, 128)
    lres = _round_up(lout, 128)
    hw = h * w

    # Per-tap transposed weights: w1t[t, f, c] = w1[ky, kx, c, f], t = 3*ky+kx.
    w1t = jnp.transpose(w1, (0, 1, 3, 2)).reshape(9, feat, cin).astype(jnp.bfloat16)
    w2t = jnp.transpose(w2, (0, 1, 3, 2)).reshape(9, c, feat).astype(jnp.bfloat16)
    b1c = b1.reshape(feat, 1).astype(jnp.float32)
    b2c = b2.reshape(c, 1).astype(jnp.float32)

    x_flat = x_nchw.astype(jnp.float32).reshape(n, c, hw)   # contiguous: free

    # VMEM budget derived from the actual tile sizes (double-buffered in/out
    # blocks + scratch + weights) plus headroom; keeps the request well under
    # v7x's 64 MiB while still scaling with image size on v5e/v6e.
    vmem_bytes = (4 * c * hw * 4                   # 2x double-buffered blocks
                  + (cin + feat) * lb * 2          # bf16 padded scratches
                  + c * lres * 4                   # f32 residual staging
                  + (9 * feat * cin + 9 * c * feat) * 2 + (feat + c) * 4)
    vmem_limit = int(min(vmem_bytes * 3 + (8 << 20), 48 << 20))

    kernel = functools.partial(_denoiser_kernel, h=h, w=w, pad0=pad0)

    out_flat = pl.pallas_call(
        kernel,
        out_shape=jax.ShapeDtypeStruct((n, c, hw), jnp.float32),
        grid_spec=pltpu.PrefetchScalarGridSpec(
            num_scalar_prefetch=1,                 # sigma -> SMEM
            grid=(n,),                             # one image per step
            in_specs=[
                pl.BlockSpec((None, c, hw), lambda i, s: (i, 0, 0)),
                pl.BlockSpec((9, feat, cin), lambda i, s: (0, 0, 0)),
                pl.BlockSpec((feat, 1), lambda i, s: (0, 0)),
                pl.BlockSpec((9, c, feat), lambda i, s: (0, 0, 0)),
                pl.BlockSpec((c, 1), lambda i, s: (0, 0)),
            ],
            out_specs=pl.BlockSpec((None, c, hw), lambda i, s: (i, 0, 0)),
            scratch_shapes=[
                pltpu.VMEM((cin, lb), jnp.bfloat16),
                pltpu.VMEM((feat, lb), jnp.bfloat16),
                pltpu.VMEM((c, lres), jnp.float32),
            ],
        ),
        compiler_params=pltpu.CompilerParams(
            dimension_semantics=("parallel",),
            vmem_limit_bytes=vmem_limit,
        ),
    )(sigma.astype(jnp.float32), x_flat, w1t, b1c, w2t, b2c)

    return out_flat.reshape(n, c, h, w)            # contiguous: free


def make_denoiser(params):
    """Returns a denoiser callable with the PyTorch NCHW calling convention."""
    @jax.jit
    def denoiser(x_nchw, sigma):
        return denoise_nchw(x_nchw, sigma, params)
    return denoiser


class PnPSolver:
    """JAX/Pallas mirror of tfpnp.pnp.solver.base.PnPSolver."""

    def __init__(self, denoiser):
        self.denoiser = denoiser

    def prox_mapping(self, x, sigma):
        return self.denoiser(x, sigma)

    # TODO(synk): reset/forward/get_output/num_var/filter_* are abstract
    # (raise NotImplementedError) in the PyTorch base class; kept abstract.
    def reset(self, data):
        raise NotImplementedError

    def forward(self, inputs, parameters, iter_num):
        raise NotImplementedError

    def get_output(self, state):
        raise NotImplementedError

    @property
    def num_var(self):
        raise NotImplementedError

    def filter_aux_inputs(self, state):
        raise NotImplementedError

    def filter_hyperparameter(self, action):
        raise NotImplementedError


def _reference_denoise_nhwc(x_nhwc, sigma, params):
    """Pure-JAX reference (same numeric recipe: bf16 conv operands, f32 acc)."""
    w1, b1, w2, b2 = params
    N, H, W, C = x_nhwc.shape
    nmap = jnp.broadcast_to(sigma.reshape(N, 1, 1, 1),
                            (N, H, W, 1)).astype(x_nhwc.dtype)
    xin = jnp.concatenate([x_nhwc, nmap], axis=-1)
    dn = ('NHWC', 'HWIO', 'NHWC')
    h = jax.lax.conv_general_dilated(
        xin.astype(jnp.bfloat16), w1.astype(jnp.bfloat16), (1, 1), 'SAME',
        dimension_numbers=dn, preferred_element_type=jnp.float32)
    h = jnp.maximum(h + b1[0], 0.0)
    r = jax.lax.conv_general_dilated(
        h.astype(jnp.bfloat16), w2.astype(jnp.bfloat16), (1, 1), 'SAME',
        dimension_numbers=dn, preferred_element_type=jnp.float32)
    r = r + b2[0]
    return x_nhwc - r


if __name__ == "__main__":
    N, C, H, W = 2, 4, 16, 16
    FEAT = 32
    CIN = C + 1  # image channels + noise-level map

    key = jax.random.PRNGKey(0)
    k_x, k_s, k_w1, k_b1, k_w2, k_b2 = jax.random.split(key, 6)

    # deterministic synthetic denoiser parameters (HWIO conv weights)
    w1 = 0.05 * jax.random.normal(k_w1, (3, 3, CIN, FEAT), jnp.float32)
    b1 = 0.01 * jax.random.normal(k_b1, (1, FEAT), jnp.float32)
    w2 = 0.05 * jax.random.normal(k_w2, (3, 3, FEAT, C), jnp.float32)
    b2 = 0.01 * jax.random.normal(k_b2, (1, C), jnp.float32)
    params = (w1, b1, w2, b2)

    # deterministic example inputs (NCHW, like the PyTorch module)
    x = jax.random.normal(k_x, (N, C, H, W), jnp.float32)
    sigma = 0.1 * jax.random.uniform(k_s, (N,), jnp.float32) + 0.05

    solver = PnPSolver(make_denoiser(params))
    out = solver.prox_mapping(x, sigma)
    out = jax.block_until_ready(out)

    # correctness check against a pure-JAX conv reference (same bf16/f32 recipe)
    ref_nhwc = _reference_denoise_nhwc(
        jnp.transpose(x, (0, 2, 3, 1)), sigma, params)
    ref = jnp.transpose(ref_nhwc, (0, 3, 1, 2))
    assert out.shape == (N, C, H, W)
    max_err = float(jnp.max(jnp.abs(out - ref)))
    assert jnp.allclose(out, ref, rtol=1e-3, atol=3e-3), max_err

    print("KERNEL_OK")
</pallas_src>

<mosaic_0001>
module attributes {stable_mosaic.version = 11 : i64} {
  func.func @_denoiser_kernel(%arg0: i32, %arg1: memref<2xf32, #tpu.memory_space<smem>>, %arg2: memref<1x4x256xf32, #tpu.memory_space<vmem>>, %arg3: memref<9x32x5xbf16, #tpu.memory_space<vmem>>, %arg4: memref<32x1xf32, #tpu.memory_space<vmem>>, %arg5: memref<9x4x32xbf16, #tpu.memory_space<vmem>>, %arg6: memref<4x1xf32, #tpu.memory_space<vmem>>, %arg7: memref<1x4x256xf32, #tpu.memory_space<vmem>>, %arg8: memref<5x512xbf16, #tpu.memory_space<vmem>>, %arg9: memref<32x512xbf16, #tpu.memory_space<vmem>>, %arg10: memref<4x384xf32, #tpu.memory_space<vmem>>) attributes {dimension_semantics = [#tpu.dimension_semantics<parallel>], iteration_bounds = array<i64: 2>, scalar_prefetch = 1 : i64, scratch_operands = 3 : i64, tpu.core_type = #tpu.core_type<tc>, window_params = [{transform_indices = @transform_0, window_bounds = array<i64: 1, 4, 256>}, {pipeline_mode = #tpu.pipeline_mode<synchronous>, transform_indices = @transform_1, window_bounds = array<i64: 9, 32, 5>}, {pipeline_mode = #tpu.pipeline_mode<synchronous>, transform_indices = @transform_2, window_bounds = array<i64: 32, 1>}, {pipeline_mode = #tpu.pipeline_mode<synchronous>, transform_indices = @transform_3, window_bounds = array<i64: 9, 4, 32>}, {pipeline_mode = #tpu.pipeline_mode<synchronous>, transform_indices = @transform_4, window_bounds = array<i64: 4, 1>}, {transform_indices = @transform_5, window_bounds = array<i64: 1, 4, 256>}]} {
    %0 = arith.index_cast %arg0 : i32 to index
    %1 = memref.load %arg1[%0] : memref<2xf32, #tpu.memory_space<smem>>
    %cst = arith.constant 0.000000e+00 : bf16
    %2 = vector.broadcast %cst : bf16 to vector<5x512xbf16>
    %c0 = arith.constant 0 : index
    %c0_0 = arith.constant 0 : index
    %3 = vector.load %arg8[%c0, %c0_0] : memref<5x512xbf16, #tpu.memory_space<vmem>>, vector<5x512xbf16>
    tpu.vector_store %arg8[%c0, %c0_0], %2 {strides = array<i32>} : memref<5x512xbf16, #tpu.memory_space<vmem>>, vector<5x512xbf16>,
    %cst_1 = arith.constant 0.000000e+00 : bf16
    %4 = vector.broadcast %cst_1 : bf16 to vector<32x128xbf16>
    %c0_2 = arith.constant 0 : index
    %c0_3 = arith.constant 0 : index
    %5 = vector.load %arg9[%c0_2, %c0_3] : memref<32x512xbf16, #tpu.memory_space<vmem>>, vector<32x128xbf16>
    tpu.vector_store %arg9[%c0_2, %c0_3], %4 {strides = array<i32>} : memref<32x512xbf16, #tpu.memory_space<vmem>>, vector<32x128xbf16>,
    %cst_4 = arith.constant 0.000000e+00 : bf16
    %6 = vector.broadcast %cst_4 : bf16 to vector<32x96xbf16>
    %c0_5 = arith.constant 0 : index
    %c416 = arith.constant 416 : index
    %7 = vector.load %arg9[%c0_5, %c416] : memref<32x512xbf16, #tpu.memory_space<vmem>>, vector<32x96xbf16>
    tpu.vector_store %arg9[%c0_5, %c416], %6 {strides = array<i32>} : memref<32x512xbf16, #tpu.memory_space<vmem>>, vector<32x96xbf16>,
    %8 = tpu.iota {dimensions = array<i32: 1>} : vector<1x288xi32>
    %9 = arith.sitofp %8 : vector<1x288xi32> to vector<1x288xf32>
    %cst_6 = arith.constant 5.000000e-01 : f32
    %10 = vector.broadcast %cst_6 : f32 to vector<1x288xf32>
    %11 = arith.addf %9, %10 : vector<1x288xf32>
    %cst_7 = arith.constant 0.055555556 : f32
    %12 = vector.broadcast %cst_7 : f32 to vector<1x288xf32>
    %13 = arith.mulf %11, %12 : vector<1x288xf32>
    %14 = math.floor %13 : vector<1x288xf32>
    %cst_8 = arith.constant 1.800000e+01 : f32
    %15 = vector.broadcast %cst_8 : f32 to vector<1x288xf32>
    %16 = arith.mulf %14, %15 : vector<1x288xf32>
    %17 = arith.subf %9, %16 : vector<1x288xf32>
    %cst_9 = arith.constant 1.600000e+01 : f32
    %18 = vector.broadcast %cst_9 : f32 to vector<1x288xf32>
    %19 = arith.cmpf olt, %17, %18 : vector<1x288xf32>
    %20 = arith.extui %19 : vector<1x288xi1> to vector<1x288xi32>
    %21 = arith.sitofp %20 : vector<1x288xi32> to vector<1x288xf32>
    %c0_10 = arith.constant 0 : index
    %c0_11 = arith.constant 0 : index
    %c0_12 = arith.constant 0 : index
    %22 = vector.load %arg2[%c0_10, %c0_11, %c0_12] : memref<1x4x256xf32, #tpu.memory_space<vmem>>, vector<1x4x16xf32>
    %23 = vector.shape_cast %22 : vector<1x4x16xf32> to vector<4x16xf32>
    %24 = arith.truncf %23 : vector<4x16xf32> to vector<4x16xbf16>
    %c0_13 = arith.constant 0 : index
    %c128 = arith.constant 128 : index
    %25 = vector.load %arg8[%c0_13, %c128] : memref<5x512xbf16, #tpu.memory_space<vmem>>, vector<4x16xbf16>
    tpu.vector_store %arg8[%c0_13, %c128], %24 {strides = array<i32>} : memref<5x512xbf16, #tpu.memory_space<vmem>>, vector<4x16xbf16>,
    %c0_14 = arith.constant 0 : index
    %c0_15 = arith.constant 0 : index
    %c16 = arith.constant 16 : index
    %26 = vector.load %arg2[%c0_14, %c0_15, %c16] : memref<1x4x256xf32, #tpu.memory_space<vmem>>, vector<1x4x16xf32>
    %27 = vector.shape_cast %26 : vector<1x4x16xf32> to vector<4x16xf32>
    %28 = arith.truncf %27 : vector<4x16xf32> to vector<4x16xbf16>
    %c0_16 = arith.constant 0 : index
    %c146 = arith.constant 146 : index
    %29 = vector.load %arg8[%c0_16, %c146] : memref<5x512xbf16, #tpu.memory_space<vmem>>, vector<4x16xbf16>
    tpu.vector_store %arg8[%c0_16, %c146], %28 {strides = array<i32>} : memref<5x512xbf16, #tpu.memory_space<vmem>>, vector<4x16xbf16>,
    %c0_17 = arith.constant 0 : index
    %c0_18 = arith.constant 0 : index
    %c32 = arith.constant 32 : index
    %30 = vector.load %arg2[%c0_17, %c0_18, %c32] : memref<1x4x256xf32, #tpu.memory_space<vmem>>, vector<1x4x16xf32>
    %31 = vector.shape_cast %30 : vector<1x4x16xf32> to vector<4x16xf32>
    %32 = arith.truncf %31 : vector<4x16xf32> to vector<4x16xbf16>
    %c0_19 = arith.constant 0 : index
    %c164 = arith.constant 164 : index
    %33 = vector.load %arg8[%c0_19, %c164] : memref<5x512xbf16, #tpu.memory_space<vmem>>, vector<4x16xbf16>
    tpu.vector_store %arg8[%c0_19, %c164], %32 {strides = array<i32>} : memref<5x512xbf16, #tpu.memory_space<vmem>>, vector<4x16xbf16>,
    %c0_20 = arith.constant 0 : index
    %c0_21 = arith.constant 0 : index
    %c48 = arith.constant 48 : index
    %34 = vector.load %arg2[%c0_20, %c0_21, %c48] : memref<1x4x256xf32, #tpu.memory_space<vmem>>, vector<1x4x16xf32>
    %35 = vector.shape_cast %34 : vector<1x4x16xf32> to vector<4x16xf32>
    %36 = arith.truncf %35 : vector<4x16xf32> to vector<4x16xbf16>
    %c0_22 = arith.constant 0 : index
    %c182 = arith.constant 182 : index
    %37 = vector.load %arg8[%c0_22, %c182] : memref<5x512xbf16, #tpu.memory_space<vmem>>, vector<4x16xbf16>
    tpu.vector_store %arg8[%c0_22, %c182], %36 {strides = array<i32>} : memref<5x512xbf16, #tpu.memory_space<vmem>>, vector<4x16xbf16>,
    %c0_23 = arith.constant 0 : index
    %c0_24 = arith.constant 0 : index
    %c64 = arith.constant 64 : index
    %38 = vector.load %arg2[%c0_23, %c0_24, %c64] : memref<1x4x256xf32, #tpu.memory_space<vmem>>, vector<1x4x16xf32>
    %39 = vector.shape_cast %38 : vector<1x4x16xf32> to vector<4x16xf32>
    %40 = arith.truncf %39 : vector<4x16xf32> to vector<4x16xbf16>
    %c0_25 = arith.constant 0 : index
    %c200 = arith.constant 200 : index
    %41 = vector.load %arg8[%c0_25, %c200] : memref<5x512xbf16, #tpu.memory_space<vmem>>, vector<4x16xbf16>
    tpu.vector_store %arg8[%c0_25, %c200], %40 {strides = array<i32>} : memref<5x512xbf16, #tpu.memory_space<vmem>>, vector<4x16xbf16>,
    %c0_26 = arith.constant 0 : index
    %c0_27 = arith.constant 0 : index
    %c80 = arith.constant 80 : index
    %42 = vector.load %arg2[%c0_26, %c0_27, %c80] : memref<1x4x256xf32, #tpu.memory_space<vmem>>, vector<1x4x16xf32>
    %43 = vector.shape_cast %42 : vector<1x4x16xf32> to vector<4x16xf32>
    %44 = arith.truncf %43 : vector<4x16xf32> to vector<4x16xbf16>
    %c0_28 = arith.constant 0 : index
    %c218 = arith.constant 218 : index
    %45 = vector.load %arg8[%c0_28, %c218] : memref<5x512xbf16, #tpu.memory_space<vmem>>, vector<4x16xbf16>
    tpu.vector_store %arg8[%c0_28, %c218], %44 {strides = array<i32>} : memref<5x512xbf16, #tpu.memory_space<vmem>>, vector<4x16xbf16>,
    %c0_29 = arith.constant 0 : index
    %c0_30 = arith.constant 0 : index
    %c96 = arith.constant 96 : index
    %46 = vector.load %arg2[%c0_29, %c0_30, %c96] : memref<1x4x256xf32, #tpu.memory_space<vmem>>, vector<1x4x16xf32>
    %47 = vector.shape_cast %46 : vector<1x4x16xf32> to vector<4x16xf32>
    %48 = arith.truncf %47 : vector<4x16xf32> to vector<4x16xbf16>
    %c0_31 = arith.constant 0 : index
    %c236 = arith.constant 236 : index
    %49 = vector.load %arg8[%c0_31, %c236] : memref<5x512xbf16, #tpu.memory_space<vmem>>, vector<4x16xbf16>
    tpu.vector_store %arg8[%c0_31, %c236], %48 {strides = array<i32>} : memref<5x512xbf16, #tpu.memory_space<vmem>>, vector<4x16xbf16>,
    %c0_32 = arith.constant 0 : index
    %c0_33 = arith.constant 0 : index
    %c112 = arith.constant 112 : index
    %50 = vector.load %arg2[%c0_32, %c0_33, %c112] : memref<1x4x256xf32, #tpu.memory_space<vmem>>, vector<1x4x16xf32>
    %51 = vector.shape_cast %50 : vector<1x4x16xf32> to vector<4x16xf32>
    %52 = arith.truncf %51 : vector<4x16xf32> to vector<4x16xbf16>
    %c0_34 = arith.constant 0 : index
    %c254 = arith.constant 254 : index
    %53 = vector.load %arg8[%c0_34, %c254] : memref<5x512xbf16, #tpu.memory_space<vmem>>, vector<4x16xbf16>
    tpu.vector_store %arg8[%c0_34, %c254], %52 {strides = array<i32>} : memref<5x512xbf16, #tpu.memory_space<vmem>>, vector<4x16xbf16>,
    %c0_35 = arith.constant 0 : index
    %c0_36 = arith.constant 0 : index
    %c128_37 = arith.constant 128 : index
    %54 = vector.load %arg2[%c0_35, %c0_36, %c128_37] : memref<1x4x256xf32, #tpu.memory_space<vmem>>, vector<1x4x16xf32>
    %55 = vector.shape_cast %54 : vector<1x4x16xf32> to vector<4x16xf32>
    %56 = arith.truncf %55 : vector<4x16xf32> to vector<4x16xbf16>
    %c0_38 = arith.constant 0 : index
    %c272 = arith.constant 272 : index
    %57 = vector.load %arg8[%c0_38, %c272] : memref<5x512xbf16, #tpu.memory_space<vmem>>, vector<4x16xbf16>
    tpu.vector_store %arg8[%c0_38, %c272], %56 {strides = array<i32>} : memref<5x512xbf16, #tpu.memory_space<vmem>>, vector<4x16xbf16>,
    %c0_39 = arith.constant 0 : index
    %c0_40 = arith.constant 0 : index
    %c144 = arith.constant 144 : index
    %58 = vector.load %arg2[%c0_39, %c0_40, %c144] : memref<1x4x256xf32, #tpu.memory_space<vmem>>, vector<1x4x16xf32>
    %59 = vector.shape_cast %58 : vector<1x4x16xf32> to vector<4x16xf32>
    %60 = arith.truncf %59 : vector<4x16xf32> to vector<4x16xbf16>
    %c0_41 = arith.constant 0 : index
    %c290 = arith.constant 290 : index
    %61 = vector.load %arg8[%c0_41, %c290] : memref<5x512xbf16, #tpu.memory_space<vmem>>, vector<4x16xbf16>
    tpu.vector_store %arg8[%c0_41, %c290], %60 {strides = array<i32>} : memref<5x512xbf16, #tpu.memory_space<vmem>>, vector<4x16xbf16>,
    %c0_42 = arith.constant 0 : index
    %c0_43 = arith.constant 0 : index
    %c160 = arith.constant 160 : index
    %62 = vector.load %arg2[%c0_42, %c0_43, %c160] : memref<1x4x256xf32, #tpu.memory_space<vmem>>, vector<1x4x16xf32>
    %63 = vector.shape_cast %62 : vector<1x4x16xf32> to vector<4x16xf32>
    %64 = arith.truncf %63 : vector<4x16xf32> to vector<4x16xbf16>
    %c0_44 = arith.constant 0 : index
    %c308 = arith.constant 308 : index
    %65 = vector.load %arg8[%c0_44, %c308] : memref<5x512xbf16, #tpu.memory_space<vmem>>, vector<4x16xbf16>
    tpu.vector_store %arg8[%c0_44, %c308], %64 {strides = array<i32>} : memref<5x512xbf16, #tpu.memory_space<vmem>>, vector<4x16xbf16>,
    %c0_45 = arith.constant 0 : index
    %c0_46 = arith.constant 0 : index
    %c176 = arith.constant 176 : index
    %66 = vector.load %arg2[%c0_45, %c0_46, %c176] : memref<1x4x256xf32, #tpu.memory_space<vmem>>, vector<1x4x16xf32>
    %67 = vector.shape_cast %66 : vector<1x4x16xf32> to vector<4x16xf32>
    %68 = arith.truncf %67 : vector<4x16xf32> to vector<4x16xbf16>
    %c0_47 = arith.constant 0 : index
    %c326 = arith.constant 326 : index
    %69 = vector.load %arg8[%c0_47, %c326] : memref<5x512xbf16, #tpu.memory_space<vmem>>, vector<4x16xbf16>
    tpu.vector_store %arg8[%c0_47, %c326], %68 {strides = array<i32>} : memref<5x512xbf16, #tpu.memory_space<vmem>>, vector<4x16xbf16>,
    %c0_48 = arith.constant 0 : index
    %c0_49 = arith.constant 0 : index
    %c192 = arith.constant 192 : index
    %70 = vector.load %arg2[%c0_48, %c0_49, %c192] : memref<1x4x256xf32, #tpu.memory_space<vmem>>, vector<1x4x16xf32>
    %71 = vector.shape_cast %70 : vector<1x4x16xf32> to vector<4x16xf32>
    %72 = arith.truncf %71 : vector<4x16xf32> to vector<4x16xbf16>
    %c0_50 = arith.constant 0 : index
    %c344 = arith.constant 344 : index
    %73 = vector.load %arg8[%c0_50, %c344] : memref<5x512xbf16, #tpu.memory_space<vmem>>, vector<4x16xbf16>
    tpu.vector_store %arg8[%c0_50, %c344], %72 {strides = array<i32>} : memref<5x512xbf16, #tpu.memory_space<vmem>>, vector<4x16xbf16>,
    %c0_51 = arith.constant 0 : index
    %c0_52 = arith.constant 0 : index
    %c208 = arith.constant 208 : index
    %74 = vector.load %arg2[%c0_51, %c0_52, %c208] : memref<1x4x256xf32, #tpu.memory_space<vmem>>, vector<1x4x16xf32>
    %75 = vector.shape_cast %74 : vector<1x4x16xf32> to vector<4x16xf32>
    %76 = arith.truncf %75 : vector<4x16xf32> to vector<4x16xbf16>
    %c0_53 = arith.constant 0 : index
    %c362 = arith.constant 362 : index
    %77 = vector.load %arg8[%c0_53, %c362] : memref<5x512xbf16, #tpu.memory_space<vmem>>, vector<4x16xbf16>
    tpu.vector_store %arg8[%c0_53, %c362], %76 {strides = array<i32>} : memref<5x512xbf16, #tpu.memory_space<vmem>>, vector<4x16xbf16>,
    %c0_54 = arith.constant 0 : index
    %c0_55 = arith.constant 0 : index
    %c224 = arith.constant 224 : index
    %78 = vector.load %arg2[%c0_54, %c0_55, %c224] : memref<1x4x256xf32, #tpu.memory_space<vmem>>, vector<1x4x16xf32>
    %79 = vector.shape_cast %78 : vector<1x4x16xf32> to vector<4x16xf32>
    %80 = arith.truncf %79 : vector<4x16xf32> to vector<4x16xbf16>
    %c0_56 = arith.constant 0 : index
    %c380 = arith.constant 380 : index
    %81 = vector.load %arg8[%c0_56, %c380] : memref<5x512xbf16, #tpu.memory_space<vmem>>, vector<4x16xbf16>
    tpu.vector_store %arg8[%c0_56, %c380], %80 {strides = array<i32>} : memref<5x512xbf16, #tpu.memory_space<vmem>>, vector<4x16xbf16>,
    %c0_57 = arith.constant 0 : index
    %c0_58 = arith.constant 0 : index
    %c240 = arith.constant 240 : index
    %82 = vector.load %arg2[%c0_57, %c0_58, %c240] : memref<1x4x256xf32, #tpu.memory_space<vmem>>, vector<1x4x16xf32>
    %83 = vector.shape_cast %82 : vector<1x4x16xf32> to vector<4x16xf32>
    %84 = arith.truncf %83 : vector<4x16xf32> to vector<4x16xbf16>
    %c0_59 = arith.constant 0 : index
    %c398 = arith.constant 398 : index
    %85 = vector.load %arg8[%c0_59, %c398] : memref<5x512xbf16, #tpu.memory_space<vmem>>, vector<4x16xbf16>
    tpu.vector_store %arg8[%c0_59, %c398], %84 {strides = array<i32>} : memref<5x512xbf16, #tpu.memory_space<vmem>>, vector<4x16xbf16>,
    %86 = vector.broadcast %1 : f32 to vector<1x288xf32>
    %87 = arith.mulf %86, %21 : vector<1x288xf32>
    %88 = arith.truncf %87 : vector<1x288xf32> to vector<1x288xbf16>
    %c4 = arith.constant 4 : index
    %c128_60 = arith.constant 128 : index
    %89 = vector.load %arg8[%c4, %c128_60] : memref<5x512xbf16, #tpu.memory_space<vmem>>, vector<1x288xbf16>
    tpu.vector_store %arg8[%c4, %c128_60], %88 {strides = array<i32>} : memref<5x512xbf16, #tpu.memory_space<vmem>>, vector<1x288xbf16>,
    %cst_61 = arith.constant 0.000000e+00 : f32
    %90 = vector.broadcast %cst_61 : f32 to vector<32x288xf32>
    %c0_62 = arith.constant 0 : index
    %c0_63 = arith.constant 0 : index
    %c0_64 = arith.constant 0 : index
    %91 = vector.load %arg3[%c0_62, %c0_63, %c0_64] : memref<9x32x5xbf16, #tpu.memory_space<vmem>>, vector<1x32x5xbf16>
    %92 = vector.shape_cast %91 : vector<1x32x5xbf16> to vector<32x5xbf16>
    %c0_65 = arith.constant 0 : index
    %c109 = arith.constant 109 : index
    %93 = vector.load %arg8[%c0_65, %c109] : memref<5x512xbf16, #tpu.memory_space<vmem>>, vector<5x288xbf16>
    %cst_66 = arith.constant dense<0.000000e+00> : vector<32x288xf32>
    %94 = tpu.matmul %92, %93, %cst_66 {dimension_numbers = #tpu.dot_dimension_numbers<[1], [0], [0], [1], [0, 0, 1, 1], [], []>} : vector<32x5xbf16>, vector<5x288xbf16>, vector<32x288xf32> -> vector<32x288xf32>
    %95 = arith.addf %90, %94 : vector<32x288xf32>
    %c1 = arith.constant 1 : index
    %c0_67 = arith.constant 0 : index
    %c0_68 = arith.constant 0 : index
    %96 = vector.load %arg3[%c1, %c0_67, %c0_68] : memref<9x32x5xbf16, #tpu.memory_space<vmem>>, vector<1x32x5xbf16>
    %97 = vector.shape_cast %96 : vector<1x32x5xbf16> to vector<32x5xbf16>
    %c0_69 = arith.constant 0 : index
    %c110 = arith.constant 110 : index
    %98 = vector.load %arg8[%c0_69, %c110] : memref<5x512xbf16, #tpu.memory_space<vmem>>, vector<5x288xbf16>
    %cst_70 = arith.constant dense<0.000000e+00> : vector<32x288xf32>
    %99 = tpu.matmul %97, %98, %cst_70 {dimension_numbers = #tpu.dot_dimension_numbers<[1], [0], [0], [1], [0, 0, 1, 1], [], []>} : vector<32x5xbf16>, vector<5x288xbf16>, vector<32x288xf32> -> vector<32x288xf32>
    %100 = arith.addf %95, %99 : vector<32x288xf32>
    %c2 = arith.constant 2 : index
    %c0_71 = arith.constant 0 : index
    %c0_72 = arith.constant 0 : index
    %101 = vector.load %arg3[%c2, %c0_71, %c0_72] : memref<9x32x5xbf16, #tpu.memory_space<vmem>>, vector<1x32x5xbf16>
    %102 = vector.shape_cast %101 : vector<1x32x5xbf16> to vector<32x5xbf16>
    %c0_73 = arith.constant 0 : index
    %c111 = arith.constant 111 : index
    %103 = vector.load %arg8[%c0_73, %c111] : memref<5x512xbf16, #tpu.memory_space<vmem>>, vector<5x288xbf16>
    %cst_74 = arith.constant dense<0.000000e+00> : vector<32x288xf32>
    %104 = tpu.matmul %102, %103, %cst_74 {dimension_numbers = #tpu.dot_dimension_numbers<[1], [0], [0], [1], [0, 0, 1, 1], [], []>} : vector<32x5xbf16>, vector<5x288xbf16>, vector<32x288xf32> -> vector<32x288xf32>
    %105 = arith.addf %100, %104 : vector<32x288xf32>
    %c3 = arith.constant 3 : index
    %c0_75 = arith.constant 0 : index
    %c0_76 = arith.constant 0 : index
    %106 = vector.load %arg3[%c3, %c0_75, %c0_76] : memref<9x32x5xbf16, #tpu.memory_space<vmem>>, vector<1x32x5xbf16>
    %107 = vector.shape_cast %106 : vector<1x32x5xbf16> to vector<32x5xbf16>
    %c0_77 = arith.constant 0 : index
    %c127 = arith.constant 127 : index
    %108 = vector.load %arg8[%c0_77, %c127] : memref<5x512xbf16, #tpu.memory_space<vmem>>, vector<5x288xbf16>
    %cst_78 = arith.constant dense<0.000000e+00> : vector<32x288xf32>
    %109 = tpu.matmul %107, %108, %cst_78 {dimension_numbers = #tpu.dot_dimension_numbers<[1], [0], [0], [1], [0, 0, 1, 1], [], []>} : vector<32x5xbf16>, vector<5x288xbf16>, vector<32x288xf32> -> vector<32x288xf32>
    %110 = arith.addf %105, %109 : vector<32x288xf32>
    %c4_79 = arith.constant 4 : index
    %c0_80 = arith.constant 0 : index
    %c0_81 = arith.constant 0 : index
    %111 = vector.load %arg3[%c4_79, %c0_80, %c0_81] : memref<9x32x5xbf16, #tpu.memory_space<vmem>>, vector<1x32x5xbf16>
    %112 = vector.shape_cast %111 : vector<1x32x5xbf16> to vector<32x5xbf16>
    %c0_82 = arith.constant 0 : index
    %c128_83 = arith.constant 128 : index
    %113 = vector.load %arg8[%c0_82, %c128_83] : memref<5x512xbf16, #tpu.memory_space<vmem>>, vector<5x288xbf16>
    %cst_84 = arith.constant dense<0.000000e+00> : vector<32x288xf32>
    %114 = tpu.matmul %112, %113, %cst_84 {dimension_numbers = #tpu.dot_dimension_numbers<[1], [0], [0], [1], [0, 0, 1, 1], [], []>} : vector<32x5xbf16>, vector<5x288xbf16>, vector<32x288xf32> -> vector<32x288xf32>
    %115 = arith.addf %110, %114 : vector<32x288xf32>
    %c5 = arith.constant 5 : index
    %c0_85 = arith.constant 0 : index
    %c0_86 = arith.constant 0 : index
    %116 = vector.load %arg3[%c5, %c0_85, %c0_86] : memref<9x32x5xbf16, #tpu.memory_space<vmem>>, vector<1x32x5xbf16>
    %117 = vector.shape_cast %116 : vector<1x32x5xbf16> to vector<32x5xbf16>
    %c0_87 = arith.constant 0 : index
    %c129 = arith.constant 129 : index
    %118 = vector.load %arg8[%c0_87, %c129] : memref<5x512xbf16, #tpu.memory_space<vmem>>, vector<5x288xbf16>
    %cst_88 = arith.constant dense<0.000000e+00> : vector<32x288xf32>
    %119 = tpu.matmul %117, %118, %cst_88 {dimension_numbers = #tpu.dot_dimension_numbers<[1], [0], [0], [1], [0, 0, 1, 1], [], []>} : vector<32x5xbf16>, vector<5x288xbf16>, vector<32x288xf32> -> vector<32x288xf32>
    %120 = arith.addf %115, %119 : vector<32x288xf32>
    %c6 = arith.constant 6 : index
    %c0_89 = arith.constant 0 : index
    %c0_90 = arith.constant 0 : index
    %121 = vector.load %arg3[%c6, %c0_89, %c0_90] : memref<9x32x5xbf16, #tpu.memory_space<vmem>>, vector<1x32x5xbf16>
    %122 = vector.shape_cast %121 : vector<1x32x5xbf16> to vector<32x5xbf16>
    %c0_91 = arith.constant 0 : index
    %c145 = arith.constant 145 : index
    %123 = vector.load %arg8[%c0_91, %c145] : memref<5x512xbf16, #tpu.memory_space<vmem>>, vector<5x288xbf16>
    %cst_92 = arith.constant dense<0.000000e+00> : vector<32x288xf32>
    %124 = tpu.matmul %122, %123, %cst_92 {dimension_numbers = #tpu.dot_dimension_numbers<[1], [0], [0], [1], [0, 0, 1, 1], [], []>} : vector<32x5xbf16>, vector<5x288xbf16>, vector<32x288xf32> -> vector<32x288xf32>
    %125 = arith.addf %120, %124 : vector<32x288xf32>
    %c7 = arith.constant 7 : index
    %c0_93 = arith.constant 0 : index
    %c0_94 = arith.constant 0 : index
    %126 = vector.load %arg3[%c7, %c0_93, %c0_94] : memref<9x32x5xbf16, #tpu.memory_space<vmem>>, vector<1x32x5xbf16>
    %127 = vector.shape_cast %126 : vector<1x32x5xbf16> to vector<32x5xbf16>
    %c0_95 = arith.constant 0 : index
    %c146_96 = arith.constant 146 : index
    %128 = vector.load %arg8[%c0_95, %c146_96] : memref<5x512xbf16, #tpu.memory_space<vmem>>, vector<5x288xbf16>
    %cst_97 = arith.constant dense<0.000000e+00> : vector<32x288xf32>
    %129 = tpu.matmul %127, %128, %cst_97 {dimension_numbers = #tpu.dot_dimension_numbers<[1], [0], [0], [1], [0, 0, 1, 1], [], []>} : vector<32x5xbf16>, vector<5x288xbf16>, vector<32x288xf32> -> vector<32x288xf32>
    %130 = arith.addf %125, %129 : vector<32x288xf32>
    %c8 = arith.constant 8 : index
    %c0_98 = arith.constant 0 : index
    %c0_99 = arith.constant 0 : index
    %131 = vector.load %arg3[%c8, %c0_98, %c0_99] : memref<9x32x5xbf16, #tpu.memory_space<vmem>>, vector<1x32x5xbf16>
    %132 = vector.shape_cast %131 : vector<1x32x5xbf16> to vector<32x5xbf16>
    %c0_100 = arith.constant 0 : index
    %c147 = arith.constant 147 : index
    %133 = vector.load %arg8[%c0_100, %c147] : memref<5x512xbf16, #tpu.memory_space<vmem>>, vector<5x288xbf16>
    %cst_101 = arith.constant dense<0.000000e+00> : vector<32x288xf32>
    %134 = tpu.matmul %132, %133, %cst_101 {dimension_numbers = #tpu.dot_dimension_numbers<[1], [0], [0], [1], [0, 0, 1, 1], [], []>} : vector<32x5xbf16>, vector<5x288xbf16>, vector<32x288xf32> -> vector<32x288xf32>
    %135 = arith.addf %130, %134 : vector<32x288xf32>
    %c0_102 = arith.constant 0 : index
    %c0_103 = arith.constant 0 : index
    %136 = vector.load %arg4[%c0_102, %c0_103] : memref<32x1xf32, #tpu.memory_space<vmem>>, vector<32x1xf32>
    %137 = vector.broadcast %136 : vector<32x1xf32> to vector<32x288xf32>
    %138 = arith.addf %135, %137 : vector<32x288xf32>
    %cst_104 = arith.constant 0.000000e+00 : f32
    %139 = vector.broadcast %cst_104 : f32 to vector<32x288xf32>
    %140 = arith.maximumf %138, %139 : vector<32x288xf32>
    %141 = vector.broadcast %21 : vector<1x288xf32> to vector<32x288xf32>
    %142 = arith.mulf %140, %141 : vector<32x288xf32>
    %143 = arith.truncf %142 : vector<32x288xf32> to vector<32x288xbf16>
    %c0_105 = arith.constant 0 : index
    %c128_106 = arith.constant 128 : index
    %144 = vector.load %arg9[%c0_105, %c128_106] : memref<32x512xbf16, #tpu.memory_space<vmem>>, vector<32x288xbf16>
    tpu.vector_store %arg9[%c0_105, %c128_106], %143 {strides = array<i32>} : memref<32x512xbf16, #tpu.memory_space<vmem>>, vector<32x288xbf16>,
    %cst_107 = arith.constant 0.000000e+00 : f32
    %145 = vector.broadcast %cst_107 : f32 to vector<4x288xf32>
    %c0_108 = arith.constant 0 : index
    %c0_109 = arith.constant 0 : index
    %c0_110 = arith.constant 0 : index
    %146 = vector.load %arg5[%c0_108, %c0_109, %c0_110] : memref<9x4x32xbf16, #tpu.memory_space<vmem>>, vector<1x4x32xbf16>
    %147 = vector.shape_cast %146 : vector<1x4x32xbf16> to vector<4x32xbf16>
    %c0_111 = arith.constant 0 : index
    %c109_112 = arith.constant 109 : index
    %148 = vector.load %arg9[%c0_111, %c109_112] : memref<32x512xbf16, #tpu.memory_space<vmem>>, vector<32x288xbf16>
    %cst_113 = arith.constant dense<0.000000e+00> : vector<4x288xf32>
    %149 = tpu.matmul %147, %148, %cst_113 {dimension_numbers = #tpu.dot_dimension_numbers<[1], [0], [0], [1], [0, 0, 1, 1], [], []>} : vector<4x32xbf16>, vector<32x288xbf16>, vector<4x288xf32> -> vector<4x288xf32>
    %150 = arith.addf %145, %149 : vector<4x288xf32>
    %c1_114 = arith.constant 1 : index
    %c0_115 = arith.constant 0 : index
    %c0_116 = arith.constant 0 : index
    %151 = vector.load %arg5[%c1_114, %c0_115, %c0_116] : memref<9x4x32xbf16, #tpu.memory_space<vmem>>, vector<1x4x32xbf16>
    %152 = vector.shape_cast %151 : vector<1x4x32xbf16> to vector<4x32xbf16>
    %c0_117 = arith.constant 0 : index
    %c110_118 = arith.constant 110 : index
    %153 = vector.load %arg9[%c0_117, %c110_118] : memref<32x512xbf16, #tpu.memory_space<vmem>>, vector<32x288xbf16>
    %cst_119 = arith.constant dense<0.000000e+00> : vector<4x288xf32>
    %154 = tpu.matmul %152, %153, %cst_119 {dimension_numbers = #tpu.dot_dimension_numbers<[1], [0], [0], [1], [0, 0, 1, 1], [], []>} : vector<4x32xbf16>, vector<32x288xbf16>, vector<4x288xf32> -> vector<4x288xf32>
    %155 = arith.addf %150, %154 : vector<4x288xf32>
    %c2_120 = arith.constant 2 : index
    %c0_121 = arith.constant 0 : index
    %c0_122 = arith.constant 0 : index
    %156 = vector.load %arg5[%c2_120, %c0_121, %c0_122] : memref<9x4x32xbf16, #tpu.memory_space<vmem>>, vector<1x4x32xbf16>
    %157 = vector.shape_cast %156 : vector<1x4x32xbf16> to vector<4x32xbf16>
    %c0_123 = arith.constant 0 : index
    %c111_124 = arith.constant 111 : index
    %158 = vector.load %arg9[%c0_123, %c111_124] : memref<32x512xbf16, #tpu.memory_space<vmem>>, vector<32x288xbf16>
    %cst_125 = arith.constant dense<0.000000e+00> : vector<4x288xf32>
    %159 = tpu.matmul %157, %158, %cst_125 {dimension_numbers = #tpu.dot_dimension_numbers<[1], [0], [0], [1], [0, 0, 1, 1], [], []>} : vector<4x32xbf16>, vector<32x288xbf16>, vector<4x288xf32> -> vector<4x288xf32>
    %160 = arith.addf %155, %159 : vector<4x288xf32>
    %c3_126 = arith.constant 3 : index
    %c0_127 = arith.constant 0 : index
    %c0_128 = arith.constant 0 : index
    %161 = vector.load %arg5[%c3_126, %c0_127, %c0_128] : memref<9x4x32xbf16, #tpu.memory_space<vmem>>, vector<1x4x32xbf16>
    %162 = vector.shape_cast %161 : vector<1x4x32xbf16> to vector<4x32xbf16>
    %c0_129 = arith.constant 0 : index
    %c127_130 = arith.constant 127 : index
    %163 = vector.load %arg9[%c0_129, %c127_130] : memref<32x512xbf16, #tpu.memory_space<vmem>>, vector<32x288xbf16>
    %cst_131 = arith.constant dense<0.000000e+00> : vector<4x288xf32>
    %164 = tpu.matmul %162, %163, %cst_131 {dimension_numbers = #tpu.dot_dimension_numbers<[1], [0], [0], [1], [0, 0, 1, 1], [], []>} : vector<4x32xbf16>, vector<32x288xbf16>, vector<4x288xf32> -> vector<4x288xf32>
    %165 = arith.addf %160, %164 : vector<4x288xf32>
    %c4_132 = arith.constant 4 : index
    %c0_133 = arith.constant 0 : index
    %c0_134 = arith.constant 0 : index
    %166 = vector.load %arg5[%c4_132, %c0_133, %c0_134] : memref<9x4x32xbf16, #tpu.memory_space<vmem>>, vector<1x4x32xbf16>
    %167 = vector.shape_cast %166 : vector<1x4x32xbf16> to vector<4x32xbf16>
    %c0_135 = arith.constant 0 : index
    %c128_136 = arith.constant 128 : index
    %168 = vector.load %arg9[%c0_135, %c128_136] : memref<32x512xbf16, #tpu.memory_space<vmem>>, vector<32x288xbf16>
    %cst_137 = arith.constant dense<0.000000e+00> : vector<4x288xf32>
    %169 = tpu.matmul %167, %168, %cst_137 {dimension_numbers = #tpu.dot_dimension_numbers<[1], [0], [0], [1], [0, 0, 1, 1], [], []>} : vector<4x32xbf16>, vector<32x288xbf16>, vector<4x288xf32> -> vector<4x288xf32>
    %170 = arith.addf %165, %169 : vector<4x288xf32>
    %c5_138 = arith.constant 5 : index
    %c0_139 = arith.constant 0 : index
    %c0_140 = arith.constant 0 : index
    %171 = vector.load %arg5[%c5_138, %c0_139, %c0_140] : memref<9x4x32xbf16, #tpu.memory_space<vmem>>, vector<1x4x32xbf16>
    %172 = vector.shape_cast %171 : vector<1x4x32xbf16> to vector<4x32xbf16>
    %c0_141 = arith.constant 0 : index
    %c129_142 = arith.constant 129 : index
    %173 = vector.load %arg9[%c0_141, %c129_142] : memref<32x512xbf16, #tpu.memory_space<vmem>>, vector<32x288xbf16>
    %cst_143 = arith.constant dense<0.000000e+00> : vector<4x288xf32>
    %174 = tpu.matmul %172, %173, %cst_143 {dimension_numbers = #tpu.dot_dimension_numbers<[1], [0], [0], [1], [0, 0, 1, 1], [], []>} : vector<4x32xbf16>, vector<32x288xbf16>, vector<4x288xf32> -> vector<4x288xf32>
    %175 = arith.addf %170, %174 : vector<4x288xf32>
    %c6_144 = arith.constant 6 : index
    %c0_145 = arith.constant 0 : index
    %c0_146 = arith.constant 0 : index
    %176 = vector.load %arg5[%c6_144, %c0_145, %c0_146] : memref<9x4x32xbf16, #tpu.memory_space<vmem>>, vector<1x4x32xbf16>
    %177 = vector.shape_cast %176 : vector<1x4x32xbf16> to vector<4x32xbf16>
    %c0_147 = arith.constant 0 : index
    %c145_148 = arith.constant 145 : index
    %178 = vector.load %arg9[%c0_147, %c145_148] : memref<32x512xbf16, #tpu.memory_space<vmem>>, vector<32x288xbf16>
    %cst_149 = arith.constant dense<0.000000e+00> : vector<4x288xf32>
    %179 = tpu.matmul %177, %178, %cst_149 {dimension_numbers = #tpu.dot_dimension_numbers<[1], [0], [0], [1], [0, 0, 1, 1], [], []>} : vector<4x32xbf16>, vector<32x288xbf16>, vector<4x288xf32> -> vector<4x288xf32>
    %180 = arith.addf %175, %179 : vector<4x288xf32>
    %c7_150 = arith.constant 7 : index
    %c0_151 = arith.constant 0 : index
    %c0_152 = arith.constant 0 : index
    %181 = vector.load %arg5[%c7_150, %c0_151, %c0_152] : memref<9x4x32xbf16, #tpu.memory_space<vmem>>, vector<1x4x32xbf16>
    %182 = vector.shape_cast %181 : vector<1x4x32xbf16> to vector<4x32xbf16>
    %c0_153 = arith.constant 0 : index
    %c146_154 = arith.constant 146 : index
    %183 = vector.load %arg9[%c0_153, %c146_154] : memref<32x512xbf16, #tpu.memory_space<vmem>>, vector<32x288xbf16>
    %cst_155 = arith.constant dense<0.000000e+00> : vector<4x288xf32>
    %184 = tpu.matmul %182, %183, %cst_155 {dimension_numbers = #tpu.dot_dimension_numbers<[1], [0], [0], [1], [0, 0, 1, 1], [], []>} : vector<4x32xbf16>, vector<32x288xbf16>, vector<4x288xf32> -> vector<4x288xf32>
    %185 = arith.addf %180, %184 : vector<4x288xf32>
    %c8_156 = arith.constant 8 : index
    %c0_157 = arith.constant 0 : index
    %c0_158 = arith.constant 0 : index
    %186 = vector.load %arg5[%c8_156, %c0_157, %c0_158] : memref<9x4x32xbf16, #tpu.memory_space<vmem>>, vector<1x4x32xbf16>
    %187 = vector.shape_cast %186 : vector<1x4x32xbf16> to vector<4x32xbf16>
    %c0_159 = arith.constant 0 : index
    %c147_160 = arith.constant 147 : index
    %188 = vector.load %arg9[%c0_159, %c147_160] : memref<32x512xbf16, #tpu.memory_space<vmem>>, vector<32x288xbf16>
    %cst_161 = arith.constant dense<0.000000e+00> : vector<4x288xf32>
    %189 = tpu.matmul %187, %188, %cst_161 {dimension_numbers = #tpu.dot_dimension_numbers<[1], [0], [0], [1], [0, 0, 1, 1], [], []>} : vector<4x32xbf16>, vector<32x288xbf16>, vector<4x288xf32> -> vector<4x288xf32>
    %190 = arith.addf %185, %189 : vector<4x288xf32>
    %c0_162 = arith.constant 0 : index
    %c0_163 = arith.constant 0 : index
    %191 = vector.load %arg6[%c0_162, %c0_163] : memref<4x1xf32, #tpu.memory_space<vmem>>, vector<4x1xf32>
    %192 = vector.broadcast %191 : vector<4x1xf32> to vector<4x288xf32>
    %193 = arith.addf %190, %192 : vector<4x288xf32>
    %c0_164 = arith.constant 0 : index
    %c0_165 = arith.constant 0 : index
    %194 = vector.load %arg10[%c0_164, %c0_165] : memref<4x384xf32, #tpu.memory_space<vmem>>, vector<4x288xf32>
    tpu.vector_store %arg10[%c0_164, %c0_165], %193 {strides = array<i32>} : memref<4x384xf32, #tpu.memory_space<vmem>>, vector<4x288xf32>,
    %c0_166 = arith.constant 0 : index
    %c0_167 = arith.constant 0 : index
    %c0_168 = arith.constant 0 : index
    %195 = vector.load %arg2[%c0_166, %c0_167, %c0_168] : memref<1x4x256xf32, #tpu.memory_space<vmem>>, vector<1x4x16xf32>
    %196 = vector.shape_cast %195 : vector<1x4x16xf32> to vector<4x16xf32>
    %c0_169 = arith.constant 0 : index
    %c0_170 = arith.constant 0 : index
    %197 = vector.load %arg10[%c0_169, %c0_170] : memref<4x384xf32, #tpu.memory_space<vmem>>, vector<4x16xf32>
    %198 = arith.subf %196, %197 : vector<4x16xf32>
    %c0_171 = arith.constant 0 : index
    %c0_172 = arith.constant 0 : index
    %c0_173 = arith.constant 0 : index
    %199 = vector.load %arg7[%c0_171, %c0_172, %c0_173] : memref<1x4x256xf32, #tpu.memory_space<vmem>>, vector<1x4x16xf32>
    %200 = vector.shape_cast %199 : vector<1x4x16xf32> to vector<4x16xf32>
    %201 = vector.shape_cast %198 : vector<4x16xf32> to vector<1x4x16xf32>
    tpu.vector_store %arg7[%c0_171, %c0_172, %c0_173], %201 {strides = array<i32>} : memref<1x4x256xf32, #tpu.memory_space<vmem>>, vector<1x4x16xf32>,
    %c0_174 = arith.constant 0 : index
    %c0_175 = arith.constant 0 : index
    %c16_176 = arith.constant 16 : index
    %202 = vector.load %arg2[%c0_174, %c0_175, %c16_176] : memref<1x4x256xf32, #tpu.memory_space<vmem>>, vector<1x4x16xf32>
    %203 = vector.shape_cast %202 : vector<1x4x16xf32> to vector<4x16xf32>
    %c0_177 = arith.constant 0 : index
    %c18 = arith.constant 18 : index
    %204 = vector.load %arg10[%c0_177, %c18] : memref<4x384xf32, #tpu.memory_space<vmem>>, vector<4x16xf32>
    %205 = arith.subf %203, %204 : vector<4x16xf32>
    %c0_178 = arith.constant 0 : index
    %c0_179 = arith.constant 0 : index
    %c16_180 = arith.constant 16 : index
    %206 = vector.load %arg7[%c0_178, %c0_179, %c16_180] : memref<1x4x256xf32, #tpu.memory_space<vmem>>, vector<1x4x16xf32>
    %207 = vector.shape_cast %206 : vector<1x4x16xf32> to vector<4x16xf32>
    %208 = vector.shape_cast %205 : vector<4x16xf32> to vector<1x4x16xf32>
    tpu.vector_store %arg7[%c0_178, %c0_179, %c16_180], %208 {strides = array<i32>} : memref<1x4x256xf32, #tpu.memory_space<vmem>>, vector<1x4x16xf32>,
    %c0_181 = arith.constant 0 : index
    %c0_182 = arith.constant 0 : index
    %c32_183 = arith.constant 32 : index
    %209 = vector.load %arg2[%c0_181, %c0_182, %c32_183] : memref<1x4x256xf32, #tpu.memory_space<vmem>>, vector<1x4x16xf32>
    %210 = vector.shape_cast %209 : vector<1x4x16xf32> to vector<4x16xf32>
    %c0_184 = arith.constant 0 : index
    %c36 = arith.constant 36 : index
    %211 = vector.load %arg10[%c0_184, %c36] : memref<4x384xf32, #tpu.memory_space<vmem>>, vector<4x16xf32>
    %212 = arith.subf %210, %211 : vector<4x16xf32>
    %c0_185 = arith.constant 0 : index
    %c0_186 = arith.constant 0 : index
    %c32_187 = arith.constant 32 : index
    %213 = vector.load %arg7[%c0_185, %c0_186, %c32_187] : memref<1x4x256xf32, #tpu.memory_space<vmem>>, vector<1x4x16xf32>
    %214 = vector.shape_cast %213 : vector<1x4x16xf32> to vector<4x16xf32>
    %215 = vector.shape_cast %212 : vector<4x16xf32> to vector<1x4x16xf32>
    tpu.vector_store %arg7[%c0_185, %c0_186, %c32_187], %215 {strides = array<i32>} : memref<1x4x256xf32, #tpu.memory_space<vmem>>, vector<1x4x16xf32>,
    %c0_188 = arith.constant 0 : index
    %c0_189 = arith.constant 0 : index
    %c48_190 = arith.constant 48 : index
    %216 = vector.load %arg2[%c0_188, %c0_189, %c48_190] : memref<1x4x256xf32, #tpu.memory_space<vmem>>, vector<1x4x16xf32>
    %217 = vector.shape_cast %216 : vector<1x4x16xf32> to vector<4x16xf32>
    %c0_191 = arith.constant 0 : index
    %c54 = arith.constant 54 : index
    %218 = vector.load %arg10[%c0_191, %c54] : memref<4x384xf32, #tpu.memory_space<vmem>>, vector<4x16xf32>
    %219 = arith.subf %217, %218 : vector<4x16xf32>
    %c0_192 = arith.constant 0 : index
    %c0_193 = arith.constant 0 : index
    %c48_194 = arith.constant 48 : index
    %220 = vector.load %arg7[%c0_192, %c0_193, %c48_194] : memref<1x4x256xf32, #tpu.memory_space<vmem>>, vector<1x4x16xf32>
    %221 = vector.shape_cast %220 : vector<1x4x16xf32> to vector<4x16xf32>
    %222 = vector.shape_cast %219 : vector<4x16xf32> to vector<1x4x16xf32>
    tpu.vector_store %arg7[%c0_192, %c0_193, %c48_194], %222 {strides = array<i32>} : memref<1x4x256xf32, #tpu.memory_space<vmem>>, vector<1x4x16xf32>,
    %c0_195 = arith.constant 0 : index
    %c0_196 = arith.constant 0 : index
    %c64_197 = arith.constant 64 : index
    %223 = vector.load %arg2[%c0_195, %c0_196, %c64_197] : memref<1x4x256xf32, #tpu.memory_space<vmem>>, vector<1x4x16xf32>
    %224 = vector.shape_cast %223 : vector<1x4x16xf32> to vector<4x16xf32>
    %c0_198 = arith.constant 0 : index
    %c72 = arith.constant 72 : index
    %225 = vector.load %arg10[%c0_198, %c72] : memref<4x384xf32, #tpu.memory_space<vmem>>, vector<4x16xf32>
    %226 = arith.subf %224, %225 : vector<4x16xf32>
    %c0_199 = arith.constant 0 : index
    %c0_200 = arith.constant 0 : index
    %c64_201 = arith.constant 64 : index
    %227 = vector.load %arg7[%c0_199, %c0_200, %c64_201] : memref<1x4x256xf32, #tpu.memory_space<vmem>>, vector<1x4x16xf32>
    %228 = vector.shape_cast %227 : vector<1x4x16xf32> to vector<4x16xf32>
    %229 = vector.shape_cast %226 : vector<4x16xf32> to vector<1x4x16xf32>
    tpu.vector_store %arg7[%c0_199, %c0_200, %c64_201], %229 {strides = array<i32>} : memref<1x4x256xf32, #tpu.memory_space<vmem>>, vector<1x4x16xf32>,
    %c0_202 = arith.constant 0 : index
    %c0_203 = arith.constant 0 : index
    %c80_204 = arith.constant 80 : index
    %230 = vector.load %arg2[%c0_202, %c0_203, %c80_204] : memref<1x4x256xf32, #tpu.memory_space<vmem>>, vector<1x4x16xf32>
    %231 = vector.shape_cast %230 : vector<1x4x16xf32> to vector<4x16xf32>
    %c0_205 = arith.constant 0 : index
    %c90 = arith.constant 90 : index
    %232 = vector.load %arg10[%c0_205, %c90] : memref<4x384xf32, #tpu.memory_space<vmem>>, vector<4x16xf32>
    %233 = arith.subf %231, %232 : vector<4x16xf32>
    %c0_206 = arith.constant 0 : index
    %c0_207 = arith.constant 0 : index
    %c80_208 = arith.constant 80 : index
    %234 = vector.load %arg7[%c0_206, %c0_207, %c80_208] : memref<1x4x256xf32, #tpu.memory_space<vmem>>, vector<1x4x16xf32>
    %235 = vector.shape_cast %234 : vector<1x4x16xf32> to vector<4x16xf32>
    %236 = vector.shape_cast %233 : vector<4x16xf32> to vector<1x4x16xf32>
    tpu.vector_store %arg7[%c0_206, %c0_207, %c80_208], %236 {strides = array<i32>} : memref<1x4x256xf32, #tpu.memory_space<vmem>>, vector<1x4x16xf32>,
    %c0_209 = arith.constant 0 : index
    %c0_210 = arith.constant 0 : index
    %c96_211 = arith.constant 96 : index
    %237 = vector.load %arg2[%c0_209, %c0_210, %c96_211] : memref<1x4x256xf32, #tpu.memory_space<vmem>>, vector<1x4x16xf32>
    %238 = vector.shape_cast %237 : vector<1x4x16xf32> to vector<4x16xf32>
    %c0_212 = arith.constant 0 : index
    %c108 = arith.constant 108 : index
    %239 = vector.load %arg10[%c0_212, %c108] : memref<4x384xf32, #tpu.memory_space<vmem>>, vector<4x16xf32>
    %240 = arith.subf %238, %239 : vector<4x16xf32>
    %c0_213 = arith.constant 0 : index
    %c0_214 = arith.constant 0 : index
    %c96_215 = arith.constant 96 : index
    %241 = vector.load %arg7[%c0_213, %c0_214, %c96_215] : memref<1x4x256xf32, #tpu.memory_space<vmem>>, vector<1x4x16xf32>
    %242 = vector.shape_cast %241 : vector<1x4x16xf32> to vector<4x16xf32>
    %243 = vector.shape_cast %240 : vector<4x16xf32> to vector<1x4x16xf32>
    tpu.vector_store %arg7[%c0_213, %c0_214, %c96_215], %243 {strides = array<i32>} : memref<1x4x256xf32, #tpu.memory_space<vmem>>, vector<1x4x16xf32>,
    %c0_216 = arith.constant 0 : index
    %c0_217 = arith.constant 0 : index
    %c112_218 = arith.constant 112 : index
    %244 = vector.load %arg2[%c0_216, %c0_217, %c112_218] : memref<1x4x256xf32, #tpu.memory_space<vmem>>, vector<1x4x16xf32>
    %245 = vector.shape_cast %244 : vector<1x4x16xf32> to vector<4x16xf32>
    %c0_219 = arith.constant 0 : index
    %c126 = arith.constant 126 : index
    %246 = vector.load %arg10[%c0_219, %c126] : memref<4x384xf32, #tpu.memory_space<vmem>>, vector<4x16xf32>
    %247 = arith.subf %245, %246 : vector<4x16xf32>
    %c0_220 = arith.constant 0 : index
    %c0_221 = arith.constant 0 : index
    %c112_222 = arith.constant 112 : index
    %248 = vector.load %arg7[%c0_220, %c0_221, %c112_222] : memref<1x4x256xf32, #tpu.memory_space<vmem>>, vector<1x4x16xf32>
    %249 = vector.shape_cast %248 : vector<1x4x16xf32> to vector<4x16xf32>
    %250 = vector.shape_cast %247 : vector<4x16xf32> to vector<1x4x16xf32>
    tpu.vector_store %arg7[%c0_220, %c0_221, %c112_222], %250 {strides = array<i32>} : memref<1x4x256xf32, #tpu.memory_space<vmem>>, vector<1x4x16xf32>,
    %c0_223 = arith.constant 0 : index
    %c0_224 = arith.constant 0 : index
    %c128_225 = arith.constant 128 : index
    %251 = vector.load %arg2[%c0_223, %c0_224, %c128_225] : memref<1x4x256xf32, #tpu.memory_space<vmem>>, vector<1x4x16xf32>
    %252 = vector.shape_cast %251 : vector<1x4x16xf32> to vector<4x16xf32>
    %c0_226 = arith.constant 0 : index
    %c144_227 = arith.constant 144 : index
    %253 = vector.load %arg10[%c0_226, %c144_227] : memref<4x384xf32, #tpu.memory_space<vmem>>, vector<4x16xf32>
    %254 = arith.subf %252, %253 : vector<4x16xf32>
    %c0_228 = arith.constant 0 : index
    %c0_229 = arith.constant 0 : index
    %c128_230 = arith.constant 128 : index
    %255 = vector.load %arg7[%c0_228, %c0_229, %c128_230] : memref<1x4x256xf32, #tpu.memory_space<vmem>>, vector<1x4x16xf32>
    %256 = vector.shape_cast %255 : vector<1x4x16xf32> to vector<4x16xf32>
    %257 = vector.shape_cast %254 : vector<4x16xf32> to vector<1x4x16xf32>
    tpu.vector_store %arg7[%c0_228, %c0_229, %c128_230], %257 {strides = array<i32>} : memref<1x4x256xf32, #tpu.memory_space<vmem>>, vector<1x4x16xf32>,
    %c0_231 = arith.constant 0 : index
    %c0_232 = arith.constant 0 : index
    %c144_233 = arith.constant 144 : index
    %258 = vector.load %arg2[%c0_231, %c0_232, %c144_233] : memref<1x4x256xf32, #tpu.memory_space<vmem>>, vector<1x4x16xf32>
    %259 = vector.shape_cast %258 : vector<1x4x16xf32> to vector<4x16xf32>
    %c0_234 = arith.constant 0 : index
    %c162 = arith.constant 162 : index
    %260 = vector.load %arg10[%c0_234, %c162] : memref<4x384xf32, #tpu.memory_space<vmem>>, vector<4x16xf32>
    %261 = arith.subf %259, %260 : vector<4x16xf32>
    %c0_235 = arith.constant 0 : index
    %c0_236 = arith.constant 0 : index
    %c144_237 = arith.constant 144 : index
    %262 = vector.load %arg7[%c0_235, %c0_236, %c144_237] : memref<1x4x256xf32, #tpu.memory_space<vmem>>, vector<1x4x16xf32>
    %263 = vector.shape_cast %262 : vector<1x4x16xf32> to vector<4x16xf32>
    %264 = vector.shape_cast %261 : vector<4x16xf32> to vector<1x4x16xf32>
    tpu.vector_store %arg7[%c0_235, %c0_236, %c144_237], %264 {strides = array<i32>} : memref<1x4x256xf32, #tpu.memory_space<vmem>>, vector<1x4x16xf32>,
    %c0_238 = arith.constant 0 : index
    %c0_239 = arith.constant 0 : index
    %c160_240 = arith.constant 160 : index
    %265 = vector.load %arg2[%c0_238, %c0_239, %c160_240] : memref<1x4x256xf32, #tpu.memory_space<vmem>>, vector<1x4x16xf32>
    %266 = vector.shape_cast %265 : vector<1x4x16xf32> to vector<4x16xf32>
    %c0_241 = arith.constant 0 : index
    %c180 = arith.constant 180 : index
    %267 = vector.load %arg10[%c0_241, %c180] : memref<4x384xf32, #tpu.memory_space<vmem>>, vector<4x16xf32>
    %268 = arith.subf %266, %267 : vector<4x16xf32>
    %c0_242 = arith.constant 0 : index
    %c0_243 = arith.constant 0 : index
    %c160_244 = arith.constant 160 : index
    %269 = vector.load %arg7[%c0_242, %c0_243, %c160_244] : memref<1x4x256xf32, #tpu.memory_space<vmem>>, vector<1x4x16xf32>
    %270 = vector.shape_cast %269 : vector<1x4x16xf32> to vector<4x16xf32>
    %271 = vector.shape_cast %268 : vector<4x16xf32> to vector<1x4x16xf32>
    tpu.vector_store %arg7[%c0_242, %c0_243, %c160_244], %271 {strides = array<i32>} : memref<1x4x256xf32, #tpu.memory_space<vmem>>, vector<1x4x16xf32>,
    %c0_245 = arith.constant 0 : index
    %c0_246 = arith.constant 0 : index
    %c176_247 = arith.constant 176 : index
    %272 = vector.load %arg2[%c0_245, %c0_246, %c176_247] : memref<1x4x256xf32, #tpu.memory_space<vmem>>, vector<1x4x16xf32>
    %273 = vector.shape_cast %272 : vector<1x4x16xf32> to vector<4x16xf32>
    %c0_248 = arith.constant 0 : index
    %c198 = arith.constant 198 : index
    %274 = vector.load %arg10[%c0_248, %c198] : memref<4x384xf32, #tpu.memory_space<vmem>>, vector<4x16xf32>
    %275 = arith.subf %273, %274 : vector<4x16xf32>
    %c0_249 = arith.constant 0 : index
    %c0_250 = arith.constant 0 : index
    %c176_251 = arith.constant 176 : index
    %276 = vector.load %arg7[%c0_249, %c0_250, %c176_251] : memref<1x4x256xf32, #tpu.memory_space<vmem>>, vector<1x4x16xf32>
    %277 = vector.shape_cast %276 : vector<1x4x16xf32> to vector<4x16xf32>
    %278 = vector.shape_cast %275 : vector<4x16xf32> to vector<1x4x16xf32>
    tpu.vector_store %arg7[%c0_249, %c0_250, %c176_251], %278 {strides = array<i32>} : memref<1x4x256xf32, #tpu.memory_space<vmem>>, vector<1x4x16xf32>,
    %c0_252 = arith.constant 0 : index
    %c0_253 = arith.constant 0 : index
    %c192_254 = arith.constant 192 : index
    %279 = vector.load %arg2[%c0_252, %c0_253, %c192_254] : memref<1x4x256xf32, #tpu.memory_space<vmem>>, vector<1x4x16xf32>
    %280 = vector.shape_cast %279 : vector<1x4x16xf32> to vector<4x16xf32>
    %c0_255 = arith.constant 0 : index
    %c216 = arith.constant 216 : index
    %281 = vector.load %arg10[%c0_255, %c216] : memref<4x384xf32, #tpu.memory_space<vmem>>, vector<4x16xf32>
    %282 = arith.subf %280, %281 : vector<4x16xf32>
    %c0_256 = arith.constant 0 : index
    %c0_257 = arith.constant 0 : index
    %c192_258 = arith.constant 192 : index
    %283 = vector.load %arg7[%c0_256, %c0_257, %c192_258] : memref<1x4x256xf32, #tpu.memory_space<vmem>>, vector<1x4x16xf32>
    %284 = vector.shape_cast %283 : vector<1x4x16xf32> to vector<4x16xf32>
    %285 = vector.shape_cast %282 : vector<4x16xf32> to vector<1x4x16xf32>
    tpu.vector_store %arg7[%c0_256, %c0_257, %c192_258], %285 {strides = array<i32>} : memref<1x4x256xf32, #tpu.memory_space<vmem>>, vector<1x4x16xf32>,
    %c0_259 = arith.constant 0 : index
    %c0_260 = arith.constant 0 : index
    %c208_261 = arith.constant 208 : index
    %286 = vector.load %arg2[%c0_259, %c0_260, %c208_261] : memref<1x4x256xf32, #tpu.memory_space<vmem>>, vector<1x4x16xf32>
    %287 = vector.shape_cast %286 : vector<1x4x16xf32> to vector<4x16xf32>
    %c0_262 = arith.constant 0 : index
    %c234 = arith.constant 234 : index
    %288 = vector.load %arg10[%c0_262, %c234] : memref<4x384xf32, #tpu.memory_space<vmem>>, vector<4x16xf32>
    %289 = arith.subf %287, %288 : vector<4x16xf32>
    %c0_263 = arith.constant 0 : index
    %c0_264 = arith.constant 0 : index
    %c208_265 = arith.constant 208 : index
    %290 = vector.load %arg7[%c0_263, %c0_264, %c208_265] : memref<1x4x256xf32, #tpu.memory_space<vmem>>, vector<1x4x16xf32>
    %291 = vector.shape_cast %290 : vector<1x4x16xf32> to vector<4x16xf32>
    %292 = vector.shape_cast %289 : vector<4x16xf32> to vector<1x4x16xf32>
    tpu.vector_store %arg7[%c0_263, %c0_264, %c208_265], %292 {strides = array<i32>} : memref<1x4x256xf32, #tpu.memory_space<vmem>>, vector<1x4x16xf32>,
    %c0_266 = arith.constant 0 : index
    %c0_267 = arith.constant 0 : index
    %c224_268 = arith.constant 224 : index
    %293 = vector.load %arg2[%c0_266, %c0_267, %c224_268] : memref<1x4x256xf32, #tpu.memory_space<vmem>>, vector<1x4x16xf32>
    %294 = vector.shape_cast %293 : vector<1x4x16xf32> to vector<4x16xf32>
    %c0_269 = arith.constant 0 : index
    %c252 = arith.constant 252 : index
    %295 = vector.load %arg10[%c0_269, %c252] : memref<4x384xf32, #tpu.memory_space<vmem>>, vector<4x16xf32>
    %296 = arith.subf %294, %295 : vector<4x16xf32>
    %c0_270 = arith.constant 0 : index
    %c0_271 = arith.constant 0 : index
    %c224_272 = arith.constant 224 : index
    %297 = vector.load %arg7[%c0_270, %c0_271, %c224_272] : memref<1x4x256xf32, #tpu.memory_space<vmem>>, vector<1x4x16xf32>
    %298 = vector.shape_cast %297 : vector<1x4x16xf32> to vector<4x16xf32>
    %299 = vector.shape_cast %296 : vector<4x16xf32> to vector<1x4x16xf32>
    tpu.vector_store %arg7[%c0_270, %c0_271, %c224_272], %299 {strides = array<i32>} : memref<1x4x256xf32, #tpu.memory_space<vmem>>, vector<1x4x16xf32>,
    %c0_273 = arith.constant 0 : index
    %c0_274 = arith.constant 0 : index
    %c240_275 = arith.constant 240 : index
    %300 = vector.load %arg2[%c0_273, %c0_274, %c240_275] : memref<1x4x256xf32, #tpu.memory_space<vmem>>, vector<1x4x16xf32>
    %301 = vector.shape_cast %300 : vector<1x4x16xf32> to vector<4x16xf32>
    %c0_276 = arith.constant 0 : index
    %c270 = arith.constant 270 : index
    %302 = vector.load %arg10[%c0_276, %c270] : memref<4x384xf32, #tpu.memory_space<vmem>>, vector<4x16xf32>
    %303 = arith.subf %301, %302 : vector<4x16xf32>
    %c0_277 = arith.constant 0 : index
    %c0_278 = arith.constant 0 : index
    %c240_279 = arith.constant 240 : index
    %304 = vector.load %arg7[%c0_277, %c0_278, %c240_279] : memref<1x4x256xf32, #tpu.memory_space<vmem>>, vector<1x4x16xf32>
    %305 = vector.shape_cast %304 : vector<1x4x16xf32> to vector<4x16xf32>
    %306 = vector.shape_cast %303 : vector<4x16xf32> to vector<1x4x16xf32>
    tpu.vector_store %arg7[%c0_277, %c0_278, %c240_279], %306 {strides = array<i32>} : memref<1x4x256xf32, #tpu.memory_space<vmem>>, vector<1x4x16xf32>,
    return
  }
  func.func @transform_0(%arg0: i32, %arg1: memref<2xf32, #tpu.memory_space<smem>>) -> (i32, i32, i32) {
    %c0_i32 = arith.constant 0 : i32
    %c0_i32_0 = arith.constant 0 : i32
    %c0_i32_1 = arith.constant 0 : i32
    return %arg0, %c0_i32, %c0_i32_0 : i32, i32, i32
  }
  func.func @transform_1(%arg0: i32, %arg1: memref<2xf32, #tpu.memory_space<smem>>) -> (i32, i32, i32) {
    %c0_i32 = arith.constant 0 : i32
    %c0_i32_0 = arith.constant 0 : i32
    %c0_i32_1 = arith.constant 0 : i32
    %c0_i32_2 = arith.constant 0 : i32
    return %c0_i32, %c0_i32_0, %c0_i32_1 : i32, i32, i32
  }
  func.func @transform_2(%arg0: i32, %arg1: memref<2xf32, #tpu.memory_space<smem>>) -> (i32, i32) {
    %c0_i32 = arith.constant 0 : i32
    %c0_i32_0 = arith.constant 0 : i32
    %c0_i32_1 = arith.constant 0 : i32
    return %c0_i32, %c0_i32_0 : i32, i32
  }
  func.func @transform_3(%arg0: i32, %arg1: memref<2xf32, #tpu.memory_space<smem>>) -> (i32, i32, i32) {
    %c0_i32 = arith.constant 0 : i32
    %c0_i32_0 = arith.constant 0 : i32
    %c0_i32_1 = arith.constant 0 : i32
    %c0_i32_2 = arith.constant 0 : i32
    return %c0_i32, %c0_i32_0, %c0_i32_1 : i32, i32, i32
  }
  func.func @transform_4(%arg0: i32, %arg1: memref<2xf32, #tpu.memory_space<smem>>) -> (i32, i32) {
    %c0_i32 = arith.constant 0 : i32
    %c0_i32_0 = arith.constant 0 : i32
    %c0_i32_1 = arith.constant 0 : i32
    return %c0_i32, %c0_i32_0 : i32, i32
  }
  func.func @transform_5(%arg0: i32, %arg1: memref<2xf32, #tpu.memory_space<smem>>) -> (i32, i32, i32) {
    %c0_i32 = arith.constant 0 : i32
    %c0_i32_0 = arith.constant 0 : i32
    %c0_i32_1 = arith.constant 0 : i32
    return %arg0, %c0_i32, %c0_i32_0 : i32, i32, i32
  }
}

</mosaic_0001>

<llo_original>
// kernel: denoiser.1
$region0: #{denoiser.1}
  #allocation0 [shape = 'u32[]', space=smem, size = 0x4, offset = 0x4, fixed_abs, tag = 'smem constant byte address 0x4 - core index']
  #allocation1 [shape = 'u32[144,128]{1,0:T(1,128)}', space=vmem, size = 0x12000, scoped, tag = 'internal scratch']
  #allocation2 [shape = 'bf16[5,512]{1,0:T(8,128)(2,1)}', space=vmem, size = 0x2000, scoped, tag = 'scratch operand']
  #allocation3 [shape = 'bf16[32,512]{1,0:T(16,128)(2,1)}', space=vmem, size = 0x8000, scoped, tag = 'scratch operand']
  #allocation4 [shape = 'f32[4,384]{1,0:T(4,128)}', space=vmem, size = 0x1800, scoped, tag = 'scratch operand']
  #allocation5 [shape = 's32[1]{0}', space=sflag, size = 0x4, scoped, tag = 'scoped memory for denoiser.1']
  #allocation6 [shape = 'u8[512]{0}', space=smem, size = 0x200, scoped, tag = 'prefetched SMEM operand 0']
  %s0 = inlined_call_operand.hbm [shape: f32[2], index: 0, kind: input, shape index: {}]
  %s1 = inlined_call_operand.vmem [shape: f32[2,4,256], index: 1, kind: input, shape index: {}]
  %s2 = inlined_call_operand.vmem [shape: bf16[9,32,5], index: 2, kind: input, shape index: {}]
  %s3 = inlined_call_operand.hbm [shape: f32[32,1], index: 3, kind: input, shape index: {}]
  %s4 = inlined_call_operand.vmem [shape: bf16[9,4,32], index: 4, kind: input, shape index: {}]
  %s5 = inlined_call_operand.vmem [shape: f32[4,1], index: 5, kind: input, shape index: {}]
  %s6 = inlined_call_operand.vmem [shape: f32[2,4,256], index: 6, kind: output, shape index: {}]
  %s7 = sld [smem:[#allocation0]]
  $region57: #{denoiser.1} parent=0
    _
  %s9 = ssub.s32 1, %s7
  %s10 = scalar_select 0, %s9, %s7
  %12 = dma.hbm_to_smem %s0, 16, [#allocation6], [#allocation5]
  %13 = dma.done [#allocation5], 16
  %14 = sfence
  $region1: #{denoiser.1} parent=0
    #allocation7 [shape = 'u8[16384]{0}', space=vmem, size = 0x4000, scoped, tag = 'input window, operand 3, single buffered']
    #allocation8 [shape = 's32[2]{0}', space=sflag, size = 0x8, scoped, tag = 'scoped memory for denoiser.1']
    %15 = vsyncpa [#allocation8], 0
    loop: start=0, step=1, limit=4
    $region2: #{denoiser.1} parent=1 // loop_pre_header
      _
    $region3: #{denoiser.1} parent=1 // loop_header
      %s17 = sphi 0, %s21
      %p18 = scmp.ge.s32.totalorder %s17, 4
      %s27 = sphi 0, %s29
      %s30 = sphi 0, %s27
      %s31 = sphi 0, %s30
      %s47 = sphi 0, %s31
      %s51 = sphi 0, %s51
      %s53 = sphi 0, %s51
      %s54 = sphi 0, %s53
      %s68 = sphi 0, %s54
      %s72 = sphi 0, %s72
      %s74 = sphi 0, %s72
      %s75 = sphi 0, %s74
      %s89 = sphi 0, %s75
      %s93 = sphi 0, %s93
      %s95 = sphi 0, %s93
      %s96 = sphi 0, %s95
      %s110 = sphi 0, %s96
      %s114 = sphi 0, %s114
      %s116 = sphi 0, %s114
      %s117 = sphi 0, %s116
      %s131 = sphi 0, %s117
      %s137 = sphi 0, %s139
      %s140 = sphi 0, %s137
      %s141 = sphi 0, %s140
      %s157 = sphi 0, %s141
    $region4: #{denoiser.1} parent=1 // loop_header_branch
      %20 = sbr.rel (%p18) target = $region8
    $region5: #{denoiser.1} parent=1 // loop_body
      %s22 = ssub.s32 %s17, 1
      %s23 = ssub.s32 %s17, 2
      %s24 = sadd.s32 %s17, 1
      %s25 = ssub.s32 %s17, %s24
      %p26 = scmp.eq.s32.totalorder %s25, 0
      %s28 = sadd.s32 %s27, 1
      %s29 = scalar_select %p26, %s27, %s28
      %p32 = pneg %p26
      %p33 = scmp.eq.s32.totalorder %s17, 1
      %p34 = por %p32, %p33
      %p35 = scmp.ne.s32.totalorder %s27, %s30
      %p36 = scmp.eq.s32.totalorder %s17, 0
      %p37 = por %p35, %p36
      %p38 = scmp.ne.s32.totalorder %s27, %s30
      %p39 = scmp.eq.s32.totalorder %s22, 1
      %p40 = por %p38, %p39
      %p41 = scmp.ne.s32.totalorder %s30, %s31
      %p42 = scmp.eq.s32.totalorder %s22, 0
      %p43 = por %p41, %p42
      %p44 = scmp.ne.s32.totalorder %s30, %s31
      %p45 = scmp.eq.s32.totalorder %s23, 1
      %p46 = por %p44, %p45
      %p48 = scmp.ne.s32.totalorder %s31, %s47
      %p49 = scmp.eq.s32.totalorder %s23, 0
      %p50 = por %p48, %p49
      %s52 = sadd.s32 %s51, 1
      %p55 = scmp.eq.s32.totalorder %s17, 1
      %p56 = scmp.ne.s32.totalorder %s51, %s53
      %p57 = scmp.eq.s32.totalorder %s17, 0
      %p58 = por %p56, %p57
      %p59 = scmp.ne.s32.totalorder %s51, %s53
      %p60 = scmp.eq.s32.totalorder %s22, 1
      %p61 = por %p59, %p60
      %p62 = scmp.ne.s32.totalorder %s53, %s54
      %p63 = scmp.eq.s32.totalorder %s22, 0
      %p64 = por %p62, %p63
      %p65 = scmp.ne.s32.totalorder %s53, %s54
      %p66 = scmp.eq.s32.totalorder %s23, 1
      %p67 = por %p65, %p66
      %p69 = scmp.ne.s32.totalorder %s54, %s68
      %p70 = scmp.eq.s32.totalorder %s23, 0
      %p71 = por %p69, %p70
      %s73 = sadd.s32 %s72, 1
      %p76 = scmp.eq.s32.totalorder %s17, 1
      %p77 = scmp.ne.s32.totalorder %s72, %s74
      %p78 = scmp.eq.s32.totalorder %s17, 0
      %p79 = por %p77, %p78
      %p80 = scmp.ne.s32.totalorder %s72, %s74
      %p81 = scmp.eq.s32.totalorder %s22, 1
      %p82 = por %p80, %p81
      %p83 = scmp.ne.s32.totalorder %s74, %s75
      %p84 = scmp.eq.s32.totalorder %s22, 0
      %p85 = por %p83, %p84
      %p86 = scmp.ne.s32.totalorder %s74, %s75
      %p87 = scmp.eq.s32.totalorder %s23, 1
      %p88 = por %p86, %p87
      %p90 = scmp.ne.s32.totalorder %s75, %s89
      %p91 = scmp.eq.s32.totalorder %s23, 0
      %p92 = por %p90, %p91
      %s94 = sadd.s32 %s93, 1
      %p97 = scmp.eq.s32.totalorder %s17, 1
      %p98 = scmp.ne.s32.totalorder %s93, %s95
      %p99 = scmp.eq.s32.totalorder %s17, 0
      %p100 = por %p98, %p99
      %p101 = scmp.ne.s32.totalorder %s93, %s95
      %p102 = scmp.eq.s32.totalorder %s22, 1
      %p103 = por %p101, %p102
      %p104 = scmp.ne.s32.totalorder %s95, %s96
      %p105 = scmp.eq.s32.totalorder %s22, 0
      %p106 = por %p104, %p105
      %p107 = scmp.ne.s32.totalorder %s95, %s96
      %p108 = scmp.eq.s32.totalorder %s23, 1
      %p109 = por %p107, %p108
      %p111 = scmp.ne.s32.totalorder %s96, %s110
      %p112 = scmp.eq.s32.totalorder %s23, 0
      %p113 = por %p111, %p112
      %s115 = sadd.s32 %s114, 1
      %p118 = scmp.eq.s32.totalorder %s17, 1
      %p119 = scmp.ne.s32.totalorder %s114, %s116
      %p120 = scmp.eq.s32.totalorder %s17, 0
      %p121 = por %p119, %p120
      %p122 = scmp.ne.s32.totalorder %s114, %s116
      %p123 = scmp.eq.s32.totalorder %s22, 1
      %p124 = por %p122, %p123
      %p125 = scmp.ne.s32.totalorder %s116, %s117
      %p126 = scmp.eq.s32.totalorder %s22, 0
      %p127 = por %p125, %p126
      %p128 = scmp.ne.s32.totalorder %s116, %s117
      %p129 = scmp.eq.s32.totalorder %s23, 1
      %p130 = por %p128, %p129
      %p132 = scmp.ne.s32.totalorder %s117, %s131
      %p133 = scmp.eq.s32.totalorder %s23, 0
      %p134 = por %p132, %p133
      %s135 = ssub.s32 %s17, %s24
      %p136 = scmp.eq.s32.totalorder %s135, 0
      %s138 = sadd.s32 %s137, 1
      %s139 = scalar_select %p136, %s137, %s138
      %p142 = pneg %p136
      %p143 = scmp.eq.s32.totalorder %s17, 1
      %p144 = por %p142, %p143
      %p145 = scmp.ne.s32.totalorder %s137, %s140
      %p146 = scmp.eq.s32.totalorder %s17, 0
      %p147 = por %p145, %p146
      %p148 = scmp.ne.s32.totalorder %s137, %s140
      %p149 = scmp.eq.s32.totalorder %s22, 1
      %p150 = por %p148, %p149
      %p151 = scmp.ne.s32.totalorder %s140, %s141
      %p152 = scmp.eq.s32.totalorder %s22, 0
      %p153 = por %p151, %p152
      %p154 = scmp.ne.s32.totalorder %s140, %s141
      %p155 = scmp.eq.s32.totalorder %s23, 1
      %p156 = por %p154, %p155
      %p158 = scmp.ne.s32.totalorder %s141, %s157
      %p159 = scmp.eq.s32.totalorder %s23, 0
      %p160 = por %p158, %p159
      %p161 = scmp.le.s32.totalorder 1, %s17
      %p162 = scmp.lt.s32.totalorder %s17, 3
      %p163 = pnand %p161, %p162
      %p164 = pneg %p163
      // Predicated region
      $region9: #{denoiser.1} parent=5 // pred_check
        _
      $region10: #{denoiser.1} parent=5 // pred_check_branch
        %166 = sbr.rel (%p163) target = $region12
      $region11: #{denoiser.1} parent=5 // pred_region
        %s167 = ssub.s32 %s17, 1
        // Predicated region
        $region13: #{denoiser.1} parent=11 // pred_check
          %p168 = pneg %p64
        $region14: #{denoiser.1} parent=11 // pred_check_branch
          %170 = sbr.rel (%p168) target = $region16
        $region15: #{denoiser.1} parent=11 // pred_region
          _
        $region16: #{denoiser.1} parent=11 // pred_fallthru
          _
        // Predicated region
        $region17: #{denoiser.1} parent=11 // pred_check
          %p171 = pneg %p85
        $region18: #{denoiser.1} parent=11 // pred_check_branch
          %173 = sbr.rel (%p171) target = $region20
        $region19: #{denoiser.1} parent=11 // pred_region
          %s175 = ssub.s32 512, 512
          %176 = vsyncadd [#allocation8], %s175
          %s177 = sshll.u32 [#allocation7], 4
          %s178 = int_to_ptr.vmem [resolvable:$true] %s177
          %183 = dma.hbm_to_vmem [thread:$0]  %s3, 512, %s178, [#allocation8], 128, 128, 8
        $region20: #{denoiser.1} parent=11 // pred_fallthru
          _
        // Predicated region
        $region21: #{denoiser.1} parent=11 // pred_check
          %p184 = pneg %p106
        $region22: #{denoiser.1} parent=11 // pred_check_branch
          %186 = sbr.rel (%p184) target = $region24
        $region23: #{denoiser.1} parent=11 // pred_region
          _
        $region24: #{denoiser.1} parent=11 // pred_fallthru
          _
        // Predicated region
        $region25: #{denoiser.1} parent=11 // pred_check
          %p187 = pneg %p127
        $region26: #{denoiser.1} parent=11 // pred_check_branch
          %189 = sbr.rel (%p187) target = $region28
        $region27: #{denoiser.1} parent=11 // pred_region
          _
        $region28: #{denoiser.1} parent=11 // pred_fallthru
          _
      $region12: #{denoiser.1} parent=5 // pred_fallthru
        _
      %p190 = scmp.lt.s32.totalorder %s17, 2
      // Predicated region
      $region29: #{denoiser.1} parent=5 // pred_check
        %p191 = pneg %p190
      $region30: #{denoiser.1} parent=5 // pred_check_branch
        %193 = sbr.rel (%p191) target = $region32
      $region31: #{denoiser.1} parent=5 // pred_region
        // Predicated region
        $region33: #{denoiser.1} parent=31 // pred_check
          %p194 = pneg %p37
        $region34: #{denoiser.1} parent=31 // pred_check_branch
          %196 = sbr.rel (%p194) target = $region36
        $region35: #{denoiser.1} parent=31 // pred_region
          %p197 = scmp.lt.s32.totalorder %s17, 1
          %s198 = scalar_select %p197, %s17, 1
          %s199 = smul.addr %s198, 2
          %s200 = smul.addr %s199, 4
          %s201 = scalar_lea.vmem %s1, %s200
        $region36: #{denoiser.1} parent=31 // pred_fallthru
          _
      $region32: #{denoiser.1} parent=5 // pred_fallthru
        _
      %p202 = scmp.le.s32.totalorder 1, %s17
      %p203 = scmp.lt.s32.totalorder %s17, 3
      %p204 = pnand %p202, %p203
      %p205 = pneg %p204
      // Predicated region
      $region37: #{denoiser.1} parent=5 // pred_check
        _
      $region38: #{denoiser.1} parent=5 // pred_check_branch
        %207 = sbr.rel (%p204) target = $region40
      $region39: #{denoiser.1} parent=5 // pred_region
        %s208 = ssub.s32 %s17, 1
        // Predicated region
        $region41: #{denoiser.1} parent=39 // pred_check
          %p209 = pneg %p85
        $region42: #{denoiser.1} parent=39 // pred_check_branch
          %211 = sbr.rel (%p209) target = $region44
        $region43: #{denoiser.1} parent=39 // pred_region
          %212 = dma.done [#allocation8], 512
        $region44: #{denoiser.1} parent=39 // pred_fallthru
          _
        %p213 = scmp.lt.s32.totalorder %s22, 1
        %s214 = scalar_select %p213, %s22, 1
        %s215 = smul.addr %s214, 2
        %s216 = smul.addr %s215, 4
        %s217 = scalar_lea.vmem %s1, %s216
        %p218 = pneg %p43
        %p219 = pneg %p40
        %p220 = pneg %p64
        %p221 = pneg %p61
        %p222 = pneg %p85
        %p223 = pneg %p82
        %p224 = pneg %p106
        %p225 = pneg %p103
        %p226 = pneg %p127
        %p227 = pneg %p124
        %p228 = pneg %p153
        %p229 = pneg %p150
        %p230 = scmp.lt.s32.totalorder %s22, 1
        %s231 = scalar_select %p230, %s22, 1
        %s232 = smul.addr %s231, 2
        %s233 = smul.addr %s232, 4
        %s234 = scalar_lea.vmem %s6, %s233
        %p235 = scmp.lt.s32.totalorder %s22, 1
        %s236 = scalar_select %p235, %s22, 1
        %s237 = smul.addr %s236, 2
        %s238 = smul.addr %s237, 4
        %s239 = scalar_lea.vmem %s1, %s238
        %p240 = scmp.lt.s32.totalorder %s22, 1
        %s241 = scalar_select %p240, %s22, 1
        %s242 = smul.addr %s241, 2
        %s243 = smul.addr %s242, 4
        %s244 = scalar_lea.vmem %s6, %s243
        %s246 = sld [smem:[#allocation6 + %s22]]
        %vm247 = vcmask 1042432
        %vm248 = vsmask.f32 2304
        %vm249 = vmand %vm247, %vm248
        %vm250 = vcmask 1046532
        %vm251 = vsmask.f32 6400
        %vm252 = vmand %vm250, %vm251
        %vm253 = vmor %vm252, %vm249
        %v254 = vld [vmem:[#allocation2] sm:$0x77]
        %v255 = vsel %vm253, 0, %v254
        %256 = vst [vmem:[#allocation2] sm:$0x77] %v255
        %v257 = vld [vmem:[#allocation2 + $0x8] sm:$0x77]
        %v258 = vsel %vm253, 0, %v257
        %259 = vst [vmem:[#allocation2 + $0x8] sm:$0x77] %v258
        %260 = vst [vmem:[#allocation3] sm:$0xff] 0
        %261 = vst [vmem:[#allocation3 + $0x20] sm:$0xff] 0
        %vm262 = vcmask 1047808
        %263 = vst.msk [vmem:[#allocation3 + $0x18] sm:$0xff] %vm262, 0
        %264 = vst.msk [vmem:[#allocation3 + $0x38] sm:$0xff] %vm262, 0
        %v265 = vlaneseq
        %v266 = vand.u32 %v265, 127
        %v267 = vadd.s32 %v266, 128
        %v268 = vadd.s32 %v266, 256
        %v269 = vcvt.s32.f32 %v266
        %v270 = vcvt.s32.f32 %v267
        %v271 = vcvt.s32.f32 %v268
        %v272 = vadd.f32 %v269, 0.5
        %v273 = vadd.f32 %v270, 0.5
        %v274 = vadd.f32 %v271, 0.5
        %v275 = vmul.f32 %v272, 0.055555556
        %v276 = vmul.f32 %v273, 0.055555556
        %v277 = vmul.f32 %v274, 0.055555556
        %v278 = vfloor.f32 %v275
        %v279 = vfloor.f32 %v276
        %v280 = vfloor.f32 %v277
        %v281 = vmul.f32 %v278, 18.0
        %v282 = vmul.f32 %v279, 18.0
        %v283 = vmul.f32 %v280, 18.0
        %v284 = vsub.f32 %v269, %v281
        %v285 = vsub.f32 %v270, %v282
        %v286 = vsub.f32 %v271, %v283
        %vm287 = vcmp.lt.f32.partialorder %v284, 16.0
        %vm288 = vcmp.lt.f32.partialorder %v285, 16.0
        %vm289 = vcmp.lt.f32.partialorder %v286, 16.0
        %v290 = vsel %vm287, 1, 0
        %v291 = vsel %vm288, 1, 0
        %v292 = vsel %vm289, 1, 0
        %v293 = vcvt.s32.f32 %v290
        %v294 = vcvt.s32.f32 %v291
        %v295 = vcvt.s32.f32 %v292
        %v296 = vld [vmem:[%s239] sm:$0xf]
        %v297 = vpack.c.bf16 %v296, %v296
        %vm298 = vcmask 123904
        %299 = vst.msk [vmem:[#allocation2 + $0x4] sm:$0x3] %vm298, %v297
        %v300 = vld [vmem:[%s239] sm:$0xf]
        %v301 = vpack.c.bf16 %v300, %v300
        %v303 = vunpack.c.l.b16 %v301
        %v304 = vpack.c.b16 %v303, %v303
        %305 = vrot.lane.b32.xlu0 %v304, 2
        %v306 = vpop.permute.xlu0 %305
        %vm308 = vcmask 271504
        %309 = vst.msk [vmem:[#allocation2 + $0x4] sm:$0x3] %vm308, %v306
        %v310 = vld [vmem:[%s239] sm:$0xf]
        %v311 = vpack.c.bf16 %v310, %v310
        %v313 = vunpack.c.l.b16 %v311
        %v314 = vpack.c.b16 %v313, %v313
        %315 = vrot.lane.b32.xlu0 %v314, 4
        %v316 = vpop.permute.xlu0 %315
        %vm318 = vcmask 419104
        %319 = vst.msk [vmem:[#allocation2 + $0x4] sm:$0x3] %vm318, %v316
        %v320 = vld [vmem:[%s239] sm:$0xf]
        %v321 = vpack.c.bf16 %v320, %v320
        %v323 = vunpack.c.l.b16 %v321
        %v324 = vpack.c.b16 %v323, %v323
        %325 = vrot.lane.b32.xlu0 %v324, 6
        %v326 = vpop.permute.xlu0 %325
        %vm328 = vcmask 566704
        %329 = vst.msk [vmem:[#allocation2 + $0x4] sm:$0x3] %vm328, %v326
        %v330 = vld [vmem:[%s239] sm:$0xf]
        %v331 = vpack.c.bf16 %v330, %v330
        %v333 = vunpack.c.l.b16 %v331
        %v334 = vpack.c.b16 %v333, %v333
        %335 = vrot.lane.b32.xlu0 %v334, 8
        %v336 = vpop.permute.xlu0 %335
        %vm338 = vcmask 714304
        %339 = vst.msk [vmem:[#allocation2 + $0x4] sm:$0x3] %vm338, %v336
        %v340 = vld [vmem:[%s239] sm:$0xf]
        %v341 = vpack.c.bf16 %v340, %v340
        %v343 = vunpack.c.l.b16 %v341
        %v344 = vpack.c.b16 %v343, %v343
        %345 = vrot.lane.b32.xlu0 %v344, 10
        %v346 = vpop.permute.xlu0 %345
        %vm348 = vcmask 861904
        %349 = vst.msk [vmem:[#allocation2 + $0x4] sm:$0x3] %vm348, %v346
        %v350 = vld [vmem:[%s239] sm:$0xf]
        %v351 = vpack.c.bf16 %v350, %v350
        %v353 = vunpack.c.l.b16 %v351
        %v354 = vpack.c.b16 %v353, %v353
        %355 = vrot.lane.b32.xlu0 %v354, 12
        %v356 = vpop.permute.xlu0 %355
        %vm358 = vcmask 1009504
        %359 = vst.msk [vmem:[#allocation2 + $0x4] sm:$0x3] %vm358, %v356
        %v360 = vld [vmem:[%s239] sm:$0xf]
        %v361 = vpack.c.bf16 %v360, %v360
        %v363 = vunpack.c.l.b16 %v361
        %v364 = vpack.c.b16 %v363, %v363
        %365 = vrot.lane.b32.xlu0 %v364, 14
        %v366 = vpop.permute.xlu0 %365
        %v367 = vrot.slane %v366, 4
        %vm368 = vcmask 113664
        %v369 = vsel %vm368, %v367, %v366
        %vm371 = vcmask 1042416
        %vm372 = vcmask 111620
        %vm373 = vmor %vm372, %vm371
        %374 = vst.msk [vmem:[#allocation2 + $0x4] sm:$0x33] %vm373, %v369
        %v375 = vld [vmem:[%s239 + $0x4] sm:$0xf]
        %v376 = vpack.c.bf16 %v375, %v375
        %v378 = vunpack.c.l.b16 %v376
        %v379 = vpack.c.b16 %v378, %v378
        %380 = vrot.lane.b32.xlu0 %v379, 16
        %v381 = vpop.permute.xlu0 %380
        %vm383 = vcmask 255104
        %384 = vst.msk [vmem:[#allocation2 + $0x8] sm:$0x3] %vm383, %v381
        %v385 = vld [vmem:[%s239 + $0x4] sm:$0xf]
        %v386 = vpack.c.bf16 %v385, %v385
        %v388 = vunpack.c.l.b16 %v386
        %v389 = vpack.c.b16 %v388, %v388
        %390 = vrot.lane.b32.xlu0 %v389, 18
        %v391 = vpop.permute.xlu0 %390
        %vm393 = vcmask 402704
        %394 = vst.msk [vmem:[#allocation2 + $0x8] sm:$0x3] %vm393, %v391
        %v395 = vld [vmem:[%s239 + $0x4] sm:$0xf]
        %v396 = vpack.c.bf16 %v395, %v395
        %v398 = vunpack.c.l.b16 %v396
        %v399 = vpack.c.b16 %v398, %v398
        %400 = vrot.lane.b32.xlu0 %v399, 20
        %v401 = vpop.permute.xlu0 %400
        %vm403 = vcmask 550304
        %404 = vst.msk [vmem:[#allocation2 + $0x8] sm:$0x3] %vm403, %v401
        %v405 = vld [vmem:[%s239 + $0x4] sm:$0xf]
        %v406 = vpack.c.bf16 %v405, %v405
        %v408 = vunpack.c.l.b16 %v406
        %v409 = vpack.c.b16 %v408, %v408
        %410 = vrot.lane.b32.xlu0 %v409, 22
        %v411 = vpop.permute.xlu0 %410
        %vm413 = vcmask 697904
        %414 = vst.msk [vmem:[#allocation2 + $0x8] sm:$0x3] %vm413, %v411
        %v415 = vld [vmem:[%s239 + $0x4] sm:$0xf]
        %v416 = vpack.c.bf16 %v415, %v415
        %v418 = vunpack.c.l.b16 %v416
        %v419 = vpack.c.b16 %v418, %v418
        %420 = vrot.lane.b32.xlu0 %v419, 24
        %v421 = vpop.permute.xlu0 %420
        %vm423 = vcmask 845504
        %424 = vst.msk [vmem:[#allocation2 + $0x8] sm:$0x3] %vm423, %v421
        %v425 = vld [vmem:[%s239 + $0x4] sm:$0xf]
        %v426 = vpack.c.bf16 %v425, %v425
        %v428 = vunpack.c.l.b16 %v426
        %v429 = vpack.c.b16 %v428, %v428
        %430 = vrot.lane.b32.xlu0 %v429, 26
        %v431 = vpop.permute.xlu0 %430
        %vm433 = vcmask 993104
        %434 = vst.msk [vmem:[#allocation2 + $0x8] sm:$0x3] %vm433, %v431
        %v435 = vld [vmem:[%s239 + $0x4] sm:$0xf]
        %v436 = vpack.c.bf16 %v435, %v435
        %v438 = vunpack.c.l.b16 %v436
        %v439 = vpack.c.b16 %v438, %v438
        %440 = vrot.lane.b32.xlu0 %v439, 28
        %v441 = vpop.permute.xlu0 %440
        %v442 = vrot.slane %v441, 4
        %vm443 = vcmask 228352
        %v444 = vsel %vm443, %v442, %v441
        %vm446 = vcmask 1042400
        %vm447 = vcmask 95236
        %vm448 = vmor %vm447, %vm446
        %449 = vst.msk [vmem:[#allocation2 + $0x8] sm:$0x33] %vm448, %v444
        %v450 = vld [vmem:[%s239 + $0x4] sm:$0xf]
        %v451 = vpack.c.bf16 %v450, %v450
        %v453 = vunpack.c.l.b16 %v451
        %v454 = vpack.c.b16 %v453, %v453
        %455 = vrot.lane.b32.xlu0 %v454, 30
        %v456 = vpop.permute.xlu0 %455
        %vm458 = vcmask 238704
        %459 = vst.msk [vmem:[#allocation2 + $0xc] sm:$0x3] %vm458, %v456
        %v460 = vstv %s246
        %v461 = vmul.f32 %v460, %v293
        %v462 = vmul.f32 %v460, %v294
        %v463 = vmul.f32 %v460, %v295
        %v464 = vpack.c.bf16 %v461, %v461
        %v465 = vpack.c.bf16 %v462, %v462
        %v466 = vpack.c.bf16 %v463, %v463
        %v470 = vunpack.c.l.b16 %v464
        %v471 = vunpack.c.l.b16 %v465
        %v472 = vunpack.c.l.b16 %v466
        %v473 = vpack.c.b16 %v471, %v470
        %v474 = vpack.c.b16 %v472, %v472
        %vm477 = vcmask 1042434
        %vm478 = vmand %vm477, %vm248
        %vm479 = vcmask 1046534
        %vm480 = vmand %vm479, %vm251
        %vm481 = vmor %vm480, %vm478
        %v482 = vld [vmem:[#allocation2 + $0x4] sm:$0x44]
        %v483 = vsel %vm481, %v473, %v482
        %484 = vst [vmem:[#allocation2 + $0x4] sm:$0x44] %v483
        %vm485 = vcmask 256002
        %vm486 = vmand %vm485, %vm248
        %v487 = vld [vmem:[#allocation2 + $0xc] sm:$0x4]
        %v488 = vsel %vm486, %v474, %v487
        %489 = vst [vmem:[#allocation2 + $0xc] sm:$0x4] %v488
        %v490 = vld [vmem:[%s2] sm:$0xf]
        %v491 = vld [vmem:[%s2 + $0x4] sm:$0xf]
        %v492 = vld [vmem:[%s2 + $0x8] sm:$0xf]
        %v493 = vld [vmem:[%s2 + $0xc] sm:$0xf]
        %v494 = vld [vmem:[#allocation2] sm:$0x77]
        %v495 = vld [vmem:[#allocation2 + $0x8] sm:$0x77]
        %s496 = scalar_lea.vmem %s2, 16
        %v497 = vld [vmem:[%s496] sm:$0xf]
        %v498 = vld [vmem:[%s496 + $0x4] sm:$0xf]
        %v499 = vld [vmem:[%s496 + $0x8] sm:$0xf]
        %v500 = vld [vmem:[%s496 + $0xc] sm:$0xf]
        %v505 = vunpack.c.l.b16 %v497
        %v506 = vunpack.c.l.b16 %v498
        %v507 = vunpack.c.l.b16 %v499
        %v508 = vunpack.c.l.b16 %v500
        %v509 = vpack.c.b16 %v506, %v505
        %v510 = vpack.c.b16 %v508, %v507
        %v513 = vunpack.c.l.b16 %v494
        %v514 = vunpack.c.h.b16 %v494
        %v515 = vunpack.c.l.b16 %v495
        %v516 = vunpack.c.h.b16 %v495
        %v517 = vpack.c.b16 %v513, %v513
        %v518 = vpack.c.b16 %v514, %v514
        %v519 = vpack.c.b16 %v515, %v515
        %v520 = vpack.c.b16 %v516, %v516
        %521 = vrot.lane.b32.xlu0 %v517, 18
        %v522 = vpop.permute.xlu0 %521
        %523 = vrot.lane.b32.xlu0 %v518, 18
        %v524 = vpop.permute.xlu0 %523
        %525 = vrot.lane.b32.xlu0 %v519, 18
        %v526 = vpop.permute.xlu0 %525
        %527 = vrot.lane.b32.xlu0 %v520, 18
        %v528 = vpop.permute.xlu0 %527
        %vm529 = vcmask 146432
        %v530 = vsel %vm529, %v522, %v524
        %v531 = vsel %vm529, %v524, %v526
        %v532 = vsel %vm529, %v526, %v528
        %vm533 = vcmask 39936
        %v535 = vsel %vm533, %v509, 0
        %v538 = vsel %vm533, %v510, 0
        %vm540 = vcmask 1041408
        %vm541 = vcmask 1042432
        %v542 = vsel %vm540, 4294967295, 65535
        %v543 = vsel %vm541, %v542, 0
        %v545 = vand.u32 %v530, %v543
        %v548 = vand.u32 %v531, %v543
        %v551 = vand.u32 %v532, %v543
        %553 = vmatprep.subr.bf16.mxu0 %v548
        %554 = vmatpush1.bf16.msra.mxu0 %v545
        %555 = vmatprep.subr.bf16.mxu0 0
        %556 = vmatpush1.bf16.msra.mxu0 0
        %557 = vmatprep.subr.bf16.mxu0 0
        %558 = vmatpush1.bf16.msra.mxu0 0
        %559 = vmatprep.subr.bf16.mxu0 0
        %560 = vmatpush1.bf16.msra.mxu0 0
        %561 = vmatprep.subr.bf16.mxu0 0
        %562 = vmatpush1.bf16.msra.mxu0 0
        %563 = vmatprep.subr.bf16.mxu0 0
        %564 = vmatpush1.bf16.msra.mxu0 0
        %565 = vmatprep.subr.bf16.mxu0 0
        %566 = vmatpush1.bf16.msra.mxu0 0
        %567 = vmatprep.subr.bf16.mxu0 0
        %568 = vmatpush1.bf16.msra.mxu0 0
        %569 = vmatprep.subr.bf16.mxu0 0
        %570 = vmatpush1.bf16.msra.mxu0 0
        %571 = vmatprep.subr.bf16.mxu0 0
        %572 = vmatpush1.bf16.msra.mxu0 0
        %573 = vmatprep.subr.bf16.mxu0 0
        %574 = vmatpush1.bf16.msra.mxu0 0
        %575 = vmatprep.subr.bf16.mxu0 0
        %576 = vmatpush1.bf16.msra.mxu0 0
        %577 = vmatprep.subr.bf16.mxu0 0
        %578 = vmatpush1.bf16.msra.mxu0 0
        %579 = vmatprep.subr.bf16.mxu0 0
        %580 = vmatpush1.bf16.msra.mxu0 0
        %581 = vmatprep.subr.bf16.mxu0 0
        %582 = vmatpush1.bf16.msra.mxu0 0
        %583 = vmatprep.subr.bf16.mxu0 0
        %584 = vmatpush1.bf16.msra.mxu0 0
        %585 = vmatprep.mubr.bf16.mxu0 0
        %586 = vmatmul.mubr.bf16.gmra.mrb[0].mxu0 %v535
        %v587 = vpop.f32.mrb[0].mxu0
        %v588 = vadd.f32 0.0, %v587
        %v589 = vpop.f32.mrb[0].mxu0
        %v590 = vadd.f32 0.0, %v589
        %v591 = vpop.f32.mrb[0].mxu0
        %v592 = vadd.f32 0.0, %v591
        %v593 = vpop.f32.mrb[0].mxu0
        %v594 = vadd.f32 0.0, %v593
        %595 = vmatprep.mubr.bf16.mxu0 0
        %596 = vmatmul.mubr.bf16.gmra.mrb[0].mxu0 %v538
        %v597 = vpop.f32.mrb[0].mxu0
        %v598 = vadd.f32 0.0, %v597
        %v599 = vpop.f32.mrb[0].mxu0
        %v600 = vadd.f32 0.0, %v599
        %v601 = vpop.f32.mrb[0].mxu0
        %v602 = vadd.f32 0.0, %v601
        %v603 = vpop.f32.mrb[0].mxu0
        %v604 = vadd.f32 0.0, %v603
        %605 = vdwg.mxu0
        %606 = vmatprep.subr.bf16.mxu0 0
        %607 = vmatpush1.bf16.msra.mxu0 %v551
        %608 = vmatprep.subr.bf16.mxu0 0
        %609 = vmatpush1.bf16.msra.mxu0 0
        %610 = vmatprep.subr.bf16.mxu0 0
        %611 = vmatpush1.bf16.msra.mxu0 0
        %612 = vmatprep.subr.bf16.mxu0 0
        %613 = vmatpush1.bf16.msra.mxu0 0
        %614 = vmatprep.subr.bf16.mxu0 0
        %615 = vmatpush1.bf16.msra.mxu0 0
        %616 = vmatprep.subr.bf16.mxu0 0
        %617 = vmatpush1.bf16.msra.mxu0 0
        %618 = vmatprep.subr.bf16.mxu0 0
        %619 = vmatpush1.bf16.msra.mxu0 0
        %620 = vmatprep.subr.bf16.mxu0 0
        %621 = vmatpush1.bf16.msra.mxu0 0
        %622 = vmatprep.subr.bf16.mxu0 0
        %623 = vmatpush1.bf16.msra.mxu0 0
        %624 = vmatprep.subr.bf16.mxu0 0
        %625 = vmatpush1.bf16.msra.mxu0 0
        %626 = vmatprep.subr.bf16.mxu0 0
        %627 = vmatpush1.bf16.msra.mxu0 0
        %628 = vmatprep.subr.bf16.mxu0 0
        %629 = vmatpush1.bf16.msra.mxu0 0
        %630 = vmatprep.subr.bf16.mxu0 0
        %631 = vmatpush1.bf16.msra.mxu0 0
        %632 = vmatprep.subr.bf16.mxu0 0
        %633 = vmatpush1.bf16.msra.mxu0 0
        %634 = vmatprep.subr.bf16.mxu0 0
        %635 = vmatpush1.bf16.msra.mxu0 0
        %636 = vmatprep.subr.bf16.mxu0 0
        %637 = vmatpush1.bf16.msra.mxu0 0
        %638 = vmatprep.mubr.bf16.mxu0 0
        %639 = vmatmul.mubr.bf16.gmra.mrb[0].mxu0 %v535
        %v640 = vpop.f32.mrb[0].mxu0
        %v641 = vadd.f32 0.0, %v640
        %v642 = vpop.f32.mrb[0].mxu0
        %v643 = vpop.f32.mrb[0].mxu0
        %v644 = vadd.f32 0.0, %v643
        %v645 = vpop.f32.mrb[0].mxu0
        %646 = vmatprep.mubr.bf16.mxu0 0
        %647 = vmatmul.mubr.bf16.gmra.mrb[0].mxu0 %v538
        %v648 = vpop.f32.mrb[0].mxu0
        %v649 = vadd.f32 0.0, %v648
        %v650 = vpop.f32.mrb[0].mxu0
        %v651 = vpop.f32.mrb[0].mxu0
        %v652 = vadd.f32 0.0, %v651
        %v653 = vpop.f32.mrb[0].mxu0
        %654 = vdwg.mxu0
        %v659 = vunpack.c.l.b16 %v490
        %v660 = vunpack.c.l.b16 %v491
        %v661 = vunpack.c.l.b16 %v492
        %v662 = vunpack.c.l.b16 %v493
        %v663 = vpack.c.b16 %v660, %v659
        %v664 = vpack.c.b16 %v662, %v661
        %665 = vrot.lane.b32.xlu0 %v517, 19
        %v666 = vpop.permute.xlu0 %665
        %667 = vrot.lane.b32.xlu0 %v518, 19
        %v668 = vpop.permute.xlu0 %667
        %669 = vrot.lane.b32.xlu0 %v519, 19
        %v670 = vpop.permute.xlu0 %669
        %671 = vrot.lane.b32.xlu0 %v520, 19
        %v672 = vpop.permute.xlu0 %671
        %vm673 = vcmask 154624
        %v674 = vsel %vm673, %v666, %v668
        %v675 = vsel %vm673, %v668, %v670
        %v676 = vsel %vm673, %v670, %v672
        %v678 = vsel %vm533, %v663, 0
        %v681 = vsel %vm533, %v664, 0
        %v684 = vand.u32 %v674, %v543
        %v687 = vand.u32 %v675, %v543
        %v690 = vand.u32 %v676, %v543
        %692 = vmatprep.subr.bf16.mxu0 %v687
        %693 = vmatpush1.bf16.msra.mxu0 %v684
        %694 = vmatprep.subr.bf16.mxu0 0
        %695 = vmatpush1.bf16.msra.mxu0 0
        %696 = vmatprep.subr.bf16.mxu0 0
        %697 = vmatpush1.bf16.msra.mxu0 0
        %698 = vmatprep.subr.bf16.mxu0 0
        %699 = vmatpush1.bf16.msra.mxu0 0
        %700 = vmatprep.subr.bf16.mxu0 0
        %701 = vmatpush1.bf16.msra.mxu0 0
        %702 = vmatprep.subr.bf16.mxu0 0
        %703 = vmatpush1.bf16.msra.mxu0 0
        %704 = vmatprep.subr.bf16.mxu0 0
        %705 = vmatpush1.bf16.msra.mxu0 0
        %706 = vmatprep.subr.bf16.mxu0 0
        %707 = vmatpush1.bf16.msra.mxu0 0
        %708 = vmatprep.subr.bf16.mxu0 0
        %709 = vmatpush1.bf16.msra.mxu0 0
        %710 = vmatprep.subr.bf16.mxu0 0
        %711 = vmatpush1.bf16.msra.mxu0 0
        %712 = vmatprep.subr.bf16.mxu0 0
        %713 = vmatpush1.bf16.msra.mxu0 0
        %714 = vmatprep.subr.bf16.mxu0 0
        %715 = vmatpush1.bf16.msra.mxu0 0
        %716 = vmatprep.subr.bf16.mxu0 0
        %717 = vmatpush1.bf16.msra.mxu0 0
        %718 = vmatprep.subr.bf16.mxu0 0
        %719 = vmatpush1.bf16.msra.mxu0 0
        %720 = vmatprep.subr.bf16.mxu0 0
        %721 = vmatpush1.bf16.msra.mxu0 0
        %722 = vmatprep.subr.bf16.mxu0 0
        %723 = vmatpush1.bf16.msra.mxu0 0
        %724 = vmatprep.mubr.bf16.mxu0 0
        %725 = vmatmul.mubr.bf16.gmra.mrb[0].mxu0 %v678
        %v726 = vpop.f32.mrb[0].mxu0
        %v727 = vadd.f32 %v588, %v726
        %v728 = vpop.f32.mrb[0].mxu0
        %v729 = vadd.f32 %v590, %v728
        %v730 = vpop.f32.mrb[0].mxu0
        %v731 = vadd.f32 %v592, %v730
        %v732 = vpop.f32.mrb[0].mxu0
        %v733 = vadd.f32 %v594, %v732
        %734 = vmatprep.mubr.bf16.mxu0 0
        %735 = vmatmul.mubr.bf16.gmra.mrb[0].mxu0 %v681
        %v736 = vpop.f32.mrb[0].mxu0
        %v737 = vadd.f32 %v598, %v736
        %v738 = vpop.f32.mrb[0].mxu0
        %v739 = vadd.f32 %v600, %v738
        %v740 = vpop.f32.mrb[0].mxu0
        %v741 = vadd.f32 %v602, %v740
        %v742 = vpop.f32.mrb[0].mxu0
        %v743 = vadd.f32 %v604, %v742
        %744 = vdwg.mxu0
        %745 = vmatprep.subr.bf16.mxu0 0
        %746 = vmatpush1.bf16.msra.mxu0 %v690
        %747 = vmatprep.subr.bf16.mxu0 0
        %748 = vmatpush1.bf16.msra.mxu0 0
        %749 = vmatprep.subr.bf16.mxu0 0
        %750 = vmatpush1.bf16.msra.mxu0 0
        %751 = vmatprep.subr.bf16.mxu0 0
        %752 = vmatpush1.bf16.msra.mxu0 0
        %753 = vmatprep.subr.bf16.mxu0 0
        %754 = vmatpush1.bf16.msra.mxu0 0
        %755 = vmatprep.subr.bf16.mxu0 0
        %756 = vmatpush1.bf16.msra.mxu0 0
        %757 = vmatprep.subr.bf16.mxu0 0
        %758 = vmatpush1.bf16.msra.mxu0 0
        %759 = vmatprep.subr.bf16.mxu0 0
        %760 = vmatpush1.bf16.msra.mxu0 0
        %761 = vmatprep.subr.bf16.mxu0 0
        %762 = vmatpush1.bf16.msra.mxu0 0
        %763 = vmatprep.subr.bf16.mxu0 0
        %764 = vmatpush1.bf16.msra.mxu0 0
        %765 = vmatprep.subr.bf16.mxu0 0
        %766 = vmatpush1.bf16.msra.mxu0 0
        %767 = vmatprep.subr.bf16.mxu0 0
        %768 = vmatpush1.bf16.msra.mxu0 0
        %769 = vmatprep.subr.bf16.mxu0 0
        %770 = vmatpush1.bf16.msra.mxu0 0
        %771 = vmatprep.subr.bf16.mxu0 0
        %772 = vmatpush1.bf16.msra.mxu0 0
        %773 = vmatprep.subr.bf16.mxu0 0
        %774 = vmatpush1.bf16.msra.mxu0 0
        %775 = vmatprep.subr.bf16.mxu0 0
        %776 = vmatpush1.bf16.msra.mxu0 0
        %777 = vmatprep.mubr.bf16.mxu0 0
        %778 = vmatmul.mubr.bf16.gmra.mrb[0].mxu0 %v678
        %v779 = vpop.f32.mrb[0].mxu0
        %v780 = vadd.f32 %v641, %v779
        %v781 = vpop.f32.mrb[0].mxu0
        %v782 = vpop.f32.mrb[0].mxu0
        %v783 = vadd.f32 %v644, %v782
        %v784 = vpop.f32.mrb[0].mxu0
        %785 = vmatprep.mubr.bf16.mxu0 0
        %786 = vmatmul.mubr.bf16.gmra.mrb[0].mxu0 %v681
        %v787 = vpop.f32.mrb[0].mxu0
        %v788 = vadd.f32 %v649, %v787
        %v789 = vpop.f32.mrb[0].mxu0
        %v790 = vpop.f32.mrb[0].mxu0
        %v791 = vadd.f32 %v652, %v790
        %v792 = vpop.f32.mrb[0].mxu0
        %793 = vdwg.mxu0
        %s794 = scalar_lea.vmem %s2, 32
        %v795 = vld [vmem:[%s794] sm:$0xf]
        %v796 = vld [vmem:[%s794 + $0x4] sm:$0xf]
        %v797 = vld [vmem:[%s794 + $0x8] sm:$0xf]
        %v798 = vld [vmem:[%s794 + $0xc] sm:$0xf]
        %v803 = vunpack.c.l.b16 %v795
        %v804 = vunpack.c.l.b16 %v796
        %v805 = vunpack.c.l.b16 %v797
        %v806 = vunpack.c.l.b16 %v798
        %v807 = vpack.c.b16 %v804, %v803
        %v808 = vpack.c.b16 %v806, %v805
        %809 = vrot.lane.b32.xlu0 %v517, 17
        %v810 = vpop.permute.xlu0 %809
        %811 = vrot.lane.b32.xlu0 %v518, 17
        %v812 = vpop.permute.xlu0 %811
        %813 = vrot.lane.b32.xlu0 %v519, 17
        %v814 = vpop.permute.xlu0 %813
        %815 = vrot.lane.b32.xlu0 %v520, 17
        %v816 = vpop.permute.xlu0 %815
        %vm817 = vcmask 138240
        %v818 = vsel %vm817, %v810, %v812
        %v819 = vsel %vm817, %v812, %v814
        %v820 = vsel %vm817, %v814, %v816
        %v822 = vsel %vm533, %v807, 0
        %v825 = vsel %vm533, %v808, 0
        %v828 = vand.u32 %v818, %v543
        %v831 = vand.u32 %v819, %v543
        %v834 = vand.u32 %v820, %v543
        %836 = vmatprep.subr.bf16.mxu0 %v831
        %837 = vmatpush1.bf16.msra.mxu0 %v828
        %838 = vmatprep.subr.bf16.mxu0 0
        %839 = vmatpush1.bf16.msra.mxu0 0
        %840 = vmatprep.subr.bf16.mxu0 0
        %841 = vmatpush1.bf16.msra.mxu0 0
        %842 = vmatprep.subr.bf16.mxu0 0
        %843 = vmatpush1.bf16.msra.mxu0 0
        %844 = vmatprep.subr.bf16.mxu0 0
        %845 = vmatpush1.bf16.msra.mxu0 0
        %846 = vmatprep.subr.bf16.mxu0 0
        %847 = vmatpush1.bf16.msra.mxu0 0
        %848 = vmatprep.subr.bf16.mxu0 0
        %849 = vmatpush1.bf16.msra.mxu0 0
        %850 = vmatprep.subr.bf16.mxu0 0
        %851 = vmatpush1.bf16.msra.mxu0 0
        %852 = vmatprep.subr.bf16.mxu0 0
        %853 = vmatpush1.bf16.msra.mxu0 0
        %854 = vmatprep.subr.bf16.mxu0 0
        %855 = vmatpush1.bf16.msra.mxu0 0
        %856 = vmatprep.subr.bf16.mxu0 0
        %857 = vmatpush1.bf16.msra.mxu0 0
        %858 = vmatprep.subr.bf16.mxu0 0
        %859 = vmatpush1.bf16.msra.mxu0 0
        %860 = vmatprep.subr.bf16.mxu0 0
        %861 = vmatpush1.bf16.msra.mxu0 0
        %862 = vmatprep.subr.bf16.mxu0 0
        %863 = vmatpush1.bf16.msra.mxu0 0
        %864 = vmatprep.subr.bf16.mxu0 0
        %865 = vmatpush1.bf16.msra.mxu0 0
        %866 = vmatprep.subr.bf16.mxu0 0
        %867 = vmatpush1.bf16.msra.mxu0 0
        %868 = vmatprep.mubr.bf16.mxu0 0
        %869 = vmatmul.mubr.bf16.gmra.mrb[0].mxu0 %v822
        %v870 = vpop.f32.mrb[0].mxu0
        %v871 = vadd.f32 0.0, %v870
        %v872 = vpop.f32.mrb[0].mxu0
        %v873 = vadd.f32 0.0, %v872
        %v874 = vpop.f32.mrb[0].mxu0
        %v875 = vadd.f32 0.0, %v874
        %v876 = vpop.f32.mrb[0].mxu0
        %v877 = vadd.f32 0.0, %v876
        %878 = vmatprep.mubr.bf16.mxu0 0
        %879 = vmatmul.mubr.bf16.gmra.mrb[0].mxu0 %v825
        %v880 = vpop.f32.mrb[0].mxu0
        %v881 = vadd.f32 0.0, %v880
        %v882 = vpop.f32.mrb[0].mxu0
        %v883 = vadd.f32 0.0, %v882
        %v884 = vpop.f32.mrb[0].mxu0
        %v885 = vadd.f32 0.0, %v884
        %v886 = vpop.f32.mrb[0].mxu0
        %v887 = vadd.f32 0.0, %v886
        %888 = vdwg.mxu0
        %889 = vmatprep.subr.bf16.mxu0 0
        %890 = vmatpush1.bf16.msra.mxu0 %v834
        %891 = vmatprep.subr.bf16.mxu0 0
        %892 = vmatpush1.bf16.msra.mxu0 0
        %893 = vmatprep.subr.bf16.mxu0 0
        %894 = vmatpush1.bf16.msra.mxu0 0
        %895 = vmatprep.subr.bf16.mxu0 0
        %896 = vmatpush1.bf16.msra.mxu0 0
        %897 = vmatprep.subr.bf16.mxu0 0
        %898 = vmatpush1.bf16.msra.mxu0 0
        %899 = vmatprep.subr.bf16.mxu0 0
        %900 = vmatpush1.bf16.msra.mxu0 0
        %901 = vmatprep.subr.bf16.mxu0 0
        %902 = vmatpush1.bf16.msra.mxu0 0
        %903 = vmatprep.subr.bf16.mxu0 0
        %904 = vmatpush1.bf16.msra.mxu0 0
        %905 = vmatprep.subr.bf16.mxu0 0
        %906 = vmatpush1.bf16.msra.mxu0 0
        %907 = vmatprep.subr.bf16.mxu0 0
        %908 = vmatpush1.bf16.msra.mxu0 0
        %909 = vmatprep.subr.bf16.mxu0 0
        %910 = vmatpush1.bf16.msra.mxu0 0
        %911 = vmatprep.subr.bf16.mxu0 0
        %912 = vmatpush1.bf16.msra.mxu0 0
        %913 = vmatprep.subr.bf16.mxu0 0
        %914 = vmatpush1.bf16.msra.mxu0 0
        %915 = vmatprep.subr.bf16.mxu0 0
        %916 = vmatpush1.bf16.msra.mxu0 0
        %917 = vmatprep.subr.bf16.mxu0 0
        %918 = vmatpush1.bf16.msra.mxu0 0
        %919 = vmatprep.subr.bf16.mxu0 0
        %920 = vmatpush1.bf16.msra.mxu0 0
        %921 = vmatprep.mubr.bf16.mxu0 0
        %922 = vmatmul.mubr.bf16.gmra.mrb[0].mxu0 %v822
        %v923 = vpop.f32.mrb[0].mxu0
        %v924 = vadd.f32 0.0, %v923
        %v925 = vpop.f32.mrb[0].mxu0
        %v926 = vpop.f32.mrb[0].mxu0
        %v927 = vadd.f32 0.0, %v926
        %v928 = vpop.f32.mrb[0].mxu0
        %929 = vmatprep.mubr.bf16.mxu0 0
        %930 = vmatmul.mubr.bf16.gmra.mrb[0].mxu0 %v825
        %v931 = vpop.f32.mrb[0].mxu0
        %v932 = vadd.f32 0.0, %v931
        %v933 = vpop.f32.mrb[0].mxu0
        %v934 = vpop.f32.mrb[0].mxu0
        %v935 = vadd.f32 0.0, %v934
        %v936 = vpop.f32.mrb[0].mxu0
        %937 = vdwg.mxu0
        %v938 = vadd.f32 %v727, %v871
        %v939 = vadd.f32 %v729, %v873
        %v940 = vadd.f32 %v780, %v924
        %v941 = vadd.f32 %v731, %v875
        %v942 = vadd.f32 %v733, %v877
        %v943 = vadd.f32 %v783, %v927
        %v944 = vadd.f32 %v737, %v881
        %v945 = vadd.f32 %v739, %v883
        %v946 = vadd.f32 %v788, %v932
        %v947 = vadd.f32 %v741, %v885
        %v948 = vadd.f32 %v743, %v887
        %v949 = vadd.f32 %v791, %v935
        %s950 = scalar_lea.vmem %s2, 48
        %v951 = vld [vmem:[%s950] sm:$0xf]
        %v952 = vld [vmem:[%s950 + $0x4] sm:$0xf]
        %v953 = vld [vmem:[%s950 + $0x8] sm:$0xf]
        %v954 = vld [vmem:[%s950 + $0xc] sm:$0xf]
        %v959 = vunpack.c.l.b16 %v951
        %v960 = vunpack.c.l.b16 %v952
        %v961 = vunpack.c.l.b16 %v953
        %v962 = vunpack.c.l.b16 %v954
        %v963 = vpack.c.b16 %v960, %v959
        %v964 = vpack.c.b16 %v962, %v961
        %965 = vrot.lane.b32.xlu0 %v517, 1
        %v966 = vpop.permute.xlu0 %965
        %967 = vrot.lane.b32.xlu0 %v518, 1
        %v968 = vpop.permute.xlu0 %967
        %969 = vrot.lane.b32.xlu0 %v519, 1
        %v970 = vpop.permute.xlu0 %969
        %971 = vrot.lane.b32.xlu0 %v520, 1
        %v972 = vpop.permute.xlu0 %971
        %vm973 = vcmask 7168
        %v974 = vsel %vm973, %v966, %v968
        %v975 = vsel %vm973, %v968, %v970
        %v976 = vsel %vm973, %v970, %v972
        %v978 = vsel %vm533, %v963, 0
        %v981 = vsel %vm533, %v964, 0
        %v984 = vand.u32 %v974, %v543
        %v987 = vand.u32 %v975, %v543
        %v990 = vand.u32 %v976, %v543
        %992 = vmatprep.subr.bf16.mxu0 %v987
        %993 = vmatpush1.bf16.msra.mxu0 %v984
        %994 = vmatprep.subr.bf16.mxu0 0
        %995 = vmatpush1.bf16.msra.mxu0 0
        %996 = vmatprep.subr.bf16.mxu0 0
        %997 = vmatpush1.bf16.msra.mxu0 0
        %998 = vmatprep.subr.bf16.mxu0 0
        %999 = vmatpush1.bf16.msra.mxu0 0
        %1000 = vmatprep.subr.bf16.mxu0 0
        %1001 = vmatpush1.bf16.msra.mxu0 0
        %1002 = vmatprep.subr.bf16.mxu0 0
        %1003 = vmatpush1.bf16.msra.mxu0 0
        %1004 = vmatprep.subr.bf16.mxu0 0
        %1005 = vmatpush1.bf16.msra.mxu0 0
        %1006 = vmatprep.subr.bf16.mxu0 0
        %1007 = vmatpush1.bf16.msra.mxu0 0
        %1008 = vmatprep.subr.bf16.mxu0 0
        %1009 = vmatpush1.bf16.msra.mxu0 0
        %1010 = vmatprep.subr.bf16.mxu0 0
        %1011 = vmatpush1.bf16.msra.mxu0 0
        %1012 = vmatprep.subr.bf16.mxu0 0
        %1013 = vmatpush1.bf16.msra.mxu0 0
        %1014 = vmatprep.subr.bf16.mxu0 0
        %1015 = vmatpush1.bf16.msra.mxu0 0
        %1016 = vmatprep.subr.bf16.mxu0 0
        %1017 = vmatpush1.bf16.msra.mxu0 0
        %1018 = vmatprep.subr.bf16.mxu0 0
        %1019 = vmatpush1.bf16.msra.mxu0 0
        %1020 = vmatprep.subr.bf16.mxu0 0
        %1021 = vmatpush1.bf16.msra.mxu0 0
        %1022 = vmatprep.subr.bf16.mxu0 0
        %1023 = vmatpush1.bf16.msra.mxu0 0
        %1024 = vmatprep.mubr.bf16.mxu0 0
        %1025 = vmatmul.mubr.bf16.gmra.mrb[0].mxu0 %v978
        %v1026 = vpop.f32.mrb[0].mxu0
        %v1027 = vadd.f32 0.0, %v1026
        %v1028 = vpop.f32.mrb[0].mxu0
        %v1029 = vadd.f32 0.0, %v1028
        %v1030 = vpop.f32.mrb[0].mxu0
        %v1031 = vadd.f32 0.0, %v1030
        %v1032 = vpop.f32.mrb[0].mxu0
        %v1033 = vadd.f32 0.0, %v1032
        %1034 = vmatprep.mubr.bf16.mxu0 0
        %1035 = vmatmul.mubr.bf16.gmra.mrb[0].mxu0 %v981
        %v1036 = vpop.f32.mrb[0].mxu0
        %v1037 = vadd.f32 0.0, %v1036
        %v1038 = vpop.f32.mrb[0].mxu0
        %v1039 = vadd.f32 0.0, %v1038
        %v1040 = vpop.f32.mrb[0].mxu0
        %v1041 = vadd.f32 0.0, %v1040
        %v1042 = vpop.f32.mrb[0].mxu0
        %v1043 = vadd.f32 0.0, %v1042
        %1044 = vdwg.mxu0
        %1045 = vmatprep.subr.bf16.mxu0 0
        %1046 = vmatpush1.bf16.msra.mxu0 %v990
        %1047 = vmatprep.subr.bf16.mxu0 0
        %1048 = vmatpush1.bf16.msra.mxu0 0
        %1049 = vmatprep.subr.bf16.mxu0 0
        %1050 = vmatpush1.bf16.msra.mxu0 0
        %1051 = vmatprep.subr.bf16.mxu0 0
        %1052 = vmatpush1.bf16.msra.mxu0 0
        %1053 = vmatprep.subr.bf16.mxu0 0
        %1054 = vmatpush1.bf16.msra.mxu0 0
        %1055 = vmatprep.subr.bf16.mxu0 0
        %1056 = vmatpush1.bf16.msra.mxu0 0
        %1057 = vmatprep.subr.bf16.mxu0 0
        %1058 = vmatpush1.bf16.msra.mxu0 0
        %1059 = vmatprep.subr.bf16.mxu0 0
        %1060 = vmatpush1.bf16.msra.mxu0 0
        %1061 = vmatprep.subr.bf16.mxu0 0
        %1062 = vmatpush1.bf16.msra.mxu0 0
        %1063 = vmatprep.subr.bf16.mxu0 0
        %1064 = vmatpush1.bf16.msra.mxu0 0
        %1065 = vmatprep.subr.bf16.mxu0 0
        %1066 = vmatpush1.bf16.msra.mxu0 0
        %1067 = vmatprep.subr.bf16.mxu0 0
        %1068 = vmatpush1.bf16.msra.mxu0 0
        %1069 = vmatprep.subr.bf16.mxu0 0
        %1070 = vmatpush1.bf16.msra.mxu0 0
        %1071 = vmatprep.subr.bf16.mxu0 0
        %1072 = vmatpush1.bf16.msra.mxu0 0
        %1073 = vmatprep.subr.bf16.mxu0 0
        %1074 = vmatpush1.bf16.msra.mxu0 0
        %1075 = vmatprep.subr.bf16.mxu0 0
        %1076 = vmatpush1.bf16.msra.mxu0 0
        %1077 = vmatprep.mubr.bf16.mxu0 0
        %1078 = vmatmul.mubr.bf16.gmra.mrb[0].mxu0 %v978
        %v1079 = vpop.f32.mrb[0].mxu0
        %v1080 = vadd.f32 0.0, %v1079
        %v1081 = vpop.f32.mrb[0].mxu0
        %v1082 = vpop.f32.mrb[0].mxu0
        %v1083 = vadd.f32 0.0, %v1082
        %v1084 = vpop.f32.mrb[0].mxu0
        %1085 = vmatprep.mubr.bf16.mxu0 0
        %1086 = vmatmul.mubr.bf16.gmra.mrb[0].mxu0 %v981
        %v1087 = vpop.f32.mrb[0].mxu0
        %v1088 = vadd.f32 0.0, %v1087
        %v1089 = vpop.f32.mrb[0].mxu0
        %v1090 = vpop.f32.mrb[0].mxu0
        %v1091 = vadd.f32 0.0, %v1090
        %v1092 = vpop.f32.mrb[0].mxu0
        %1093 = vdwg.mxu0
        %v1094 = vadd.f32 %v938, %v1027
        %v1095 = vadd.f32 %v939, %v1029
        %v1096 = vadd.f32 %v940, %v1080
        %v1097 = vadd.f32 %v941, %v1031
        %v1098 = vadd.f32 %v942, %v1033
        %v1099 = vadd.f32 %v943, %v1083
        %v1100 = vadd.f32 %v944, %v1037
        %v1101 = vadd.f32 %v945, %v1039
        %v1102 = vadd.f32 %v946, %v1088
        %v1103 = vadd.f32 %v947, %v1041
        %v1104 = vadd.f32 %v948, %v1043
        %v1105 = vadd.f32 %v949, %v1091
        %s1106 = scalar_lea.vmem %s2, 64
        %v1107 = vld [vmem:[%s1106] sm:$0xf]
        %v1108 = vld [vmem:[%s1106 + $0x4] sm:$0xf]
        %v1109 = vld [vmem:[%s1106 + $0x8] sm:$0xf]
        %v1110 = vld [vmem:[%s1106 + $0xc] sm:$0xf]
        %v1111 = vld [vmem:[#allocation2 + $0x4] sm:$0x77]
        %v1112 = vld [vmem:[#allocation2 + $0xc] sm:$0x7]
        %v1117 = vunpack.c.l.b16 %v1107
        %v1118 = vunpack.c.l.b16 %v1108
        %v1119 = vunpack.c.l.b16 %v1109
        %v1120 = vunpack.c.l.b16 %v1110
        %v1121 = vpack.c.b16 %v1118, %v1117
        %v1122 = vpack.c.b16 %v1120, %v1119
        %v1125 = vunpack.c.l.b16 %v1111
        %v1126 = vunpack.c.h.b16 %v1111
        %v1127 = vunpack.c.l.b16 %v1112
        %v1128 = vpack.c.b16 %v1125, %v1125
        %v1129 = vpack.c.b16 %v1126, %v1126
        %v1130 = vpack.c.b16 %v1127, %v1127
        %v1132 = vsel %vm533, %v1121, 0
        %v1135 = vsel %vm533, %v1122, 0
        %v1138 = vand.u32 %v1128, %v543
        %v1141 = vand.u32 %v1129, %v543
        %v1144 = vand.u32 %v1130, %v543
        %1146 = vmatprep.subr.bf16.mxu0 %v1141
        %1147 = vmatpush1.bf16.msra.mxu0 %v1138
        %1148 = vmatprep.subr.bf16.mxu0 0
        %1149 = vmatpush1.bf16.msra.mxu0 0
        %1150 = vmatprep.subr.bf16.mxu0 0
        %1151 = vmatpush1.bf16.msra.mxu0 0
        %1152 = vmatprep.subr.bf16.mxu0 0
        %1153 = vmatpush1.bf16.msra.mxu0 0
        %1154 = vmatprep.subr.bf16.mxu0 0
        %1155 = vmatpush1.bf16.msra.mxu0 0
        %1156 = vmatprep.subr.bf16.mxu0 0
        %1157 = vmatpush1.bf16.msra.mxu0 0
        %1158 = vmatprep.subr.bf16.mxu0 0
        %1159 = vmatpush1.bf16.msra.mxu0 0
        %1160 = vmatprep.subr.bf16.mxu0 0
        %1161 = vmatpush1.bf16.msra.mxu0 0
        %1162 = vmatprep.subr.bf16.mxu0 0
        %1163 = vmatpush1.bf16.msra.mxu0 0
        %1164 = vmatprep.subr.bf16.mxu0 0
        %1165 = vmatpush1.bf16.msra.mxu0 0
        %1166 = vmatprep.subr.bf16.mxu0 0
        %1167 = vmatpush1.bf16.msra.mxu0 0
        %1168 = vmatprep.subr.bf16.mxu0 0
        %1169 = vmatpush1.bf16.msra.mxu0 0
        %1170 = vmatprep.subr.bf16.mxu0 0
        %1171 = vmatpush1.bf16.msra.mxu0 0
        %1172 = vmatprep.subr.bf16.mxu0 0
        %1173 = vmatpush1.bf16.msra.mxu0 0
        %1174 = vmatprep.subr.bf16.mxu0 0
        %1175 = vmatpush1.bf16.msra.mxu0 0
        %1176 = vmatprep.subr.bf16.mxu0 0
        %1177 = vmatpush1.bf16.msra.mxu0 0
        %1178 = vmatprep.mubr.bf16.mxu0 0
        %1179 = vmatmul.mubr.bf16.gmra.mrb[0].mxu0 %v1132
        %v1180 = vpop.f32.mrb[0].mxu0
        %v1181 = vadd.f32 0.0, %v1180
        %v1182 = vpop.f32.mrb[0].mxu0
        %v1183 = vadd.f32 0.0, %v1182
        %v1184 = vpop.f32.mrb[0].mxu0
        %v1185 = vadd.f32 0.0, %v1184
        %v1186 = vpop.f32.mrb[0].mxu0
        %v1187 = vadd.f32 0.0, %v1186
        %1188 = vmatprep.mubr.bf16.mxu0 0
        %1189 = vmatmul.mubr.bf16.gmra.mrb[0].mxu0 %v1135
        %v1190 = vpop.f32.mrb[0].mxu0
        %v1191 = vadd.f32 0.0, %v1190
        %v1192 = vpop.f32.mrb[0].mxu0
        %v1193 = vadd.f32 0.0, %v1192
        %v1194 = vpop.f32.mrb[0].mxu0
        %v1195 = vadd.f32 0.0, %v1194
        %v1196 = vpop.f32.mrb[0].mxu0
        %v1197 = vadd.f32 0.0, %v1196
        %1198 = vdwg.mxu0
        %1199 = vmatprep.subr.bf16.mxu0 0
        %1200 = vmatpush1.bf16.msra.mxu0 %v1144
        %1201 = vmatprep.subr.bf16.mxu0 0
        %1202 = vmatpush1.bf16.msra.mxu0 0
        %1203 = vmatprep.subr.bf16.mxu0 0
        %1204 = vmatpush1.bf16.msra.mxu0 0
        %1205 = vmatprep.subr.bf16.mxu0 0
        %1206 = vmatpush1.bf16.msra.mxu0 0
        %1207 = vmatprep.subr.bf16.mxu0 0
        %1208 = vmatpush1.bf16.msra.mxu0 0
        %1209 = vmatprep.subr.bf16.mxu0 0
        %1210 = vmatpush1.bf16.msra.mxu0 0
        %1211 = vmatprep.subr.bf16.mxu0 0
        %1212 = vmatpush1.bf16.msra.mxu0 0
        %1213 = vmatprep.subr.bf16.mxu0 0
        %1214 = vmatpush1.bf16.msra.mxu0 0
        %1215 = vmatprep.subr.bf16.mxu0 0
        %1216 = vmatpush1.bf16.msra.mxu0 0
        %1217 = vmatprep.subr.bf16.mxu0 0
        %1218 = vmatpush1.bf16.msra.mxu0 0
        %1219 = vmatprep.subr.bf16.mxu0 0
        %1220 = vmatpush1.bf16.msra.mxu0 0
        %1221 = vmatprep.subr.bf16.mxu0 0
        %1222 = vmatpush1.bf16.msra.mxu0 0
        %1223 = vmatprep.subr.bf16.mxu0 0
        %1224 = vmatpush1.bf16.msra.mxu0 0
        %1225 = vmatprep.subr.bf16.mxu0 0
        %1226 = vmatpush1.bf16.msra.mxu0 0
        %1227 = vmatprep.subr.bf16.mxu0 0
        %1228 = vmatpush1.bf16.msra.mxu0 0
        %1229 = vmatprep.subr.bf16.mxu0 0
        %1230 = vmatpush1.bf16.msra.mxu0 0
        %1231 = vmatprep.mubr.bf16.mxu0 0
        %1232 = vmatmul.mubr.bf16.gmra.mrb[0].mxu0 %v1132
        %v1233 = vpop.f32.mrb[0].mxu0
        %v1234 = vadd.f32 0.0, %v1233
        %v1235 = vpop.f32.mrb[0].mxu0
        %v1236 = vpop.f32.mrb[0].mxu0
        %v1237 = vadd.f32 0.0, %v1236
        %v1238 = vpop.f32.mrb[0].mxu0
        %1239 = vmatprep.mubr.bf16.mxu0 0
        %1240 = vmatmul.mubr.bf16.gmra.mrb[0].mxu0 %v1135
        %v1241 = vpop.f32.mrb[0].mxu0
        %v1242 = vadd.f32 0.0, %v1241
        %v1243 = vpop.f32.mrb[0].mxu0
        %v1244 = vpop.f32.mrb[0].mxu0
        %v1245 = vadd.f32 0.0, %v1244
        %v1246 = vpop.f32.mrb[0].mxu0
        %1247 = vdwg.mxu0
        %v1248 = vadd.f32 %v1094, %v1181
        %v1249 = vadd.f32 %v1095, %v1183
        %v1250 = vadd.f32 %v1096, %v1234
        %v1251 = vadd.f32 %v1097, %v1185
        %v1252 = vadd.f32 %v1098, %v1187
        %v1253 = vadd.f32 %v1099, %v1237
        %v1254 = vadd.f32 %v1100, %v1191
        %v1255 = vadd.f32 %v1101, %v1193
        %v1256 = vadd.f32 %v1102, %v1242
        %v1257 = vadd.f32 %v1103, %v1195
        %v1258 = vadd.f32 %v1104, %v1197
        %v1259 = vadd.f32 %v1105, %v1245
        %s1260 = scalar_lea.vmem %s2, 80
        %v1261 = vld [vmem:[%s1260] sm:$0xf]
        %v1262 = vld [vmem:[%s1260 + $0x4] sm:$0xf]
        %v1263 = vld [vmem:[%s1260 + $0x8] sm:$0xf]
        %v1264 = vld [vmem:[%s1260 + $0xc] sm:$0xf]
        %v1269 = vunpack.c.l.b16 %v1261
        %v1270 = vunpack.c.l.b16 %v1262
        %v1271 = vunpack.c.l.b16 %v1263
        %v1272 = vunpack.c.l.b16 %v1264
        %v1273 = vpack.c.b16 %v1270, %v1269
        %v1274 = vpack.c.b16 %v1272, %v1271
        %1275 = vrot.lane.b32.xlu0 %v1128, 127
        %v1276 = vpop.permute.xlu0 %1275
        %1277 = vrot.lane.b32.xlu0 %v1129, 127
        %v1278 = vpop.permute.xlu0 %1277
        %1279 = vrot.lane.b32.xlu0 %v1130, 127
        %v1280 = vpop.permute.xlu0 %1279
        %vm1281 = vcmask 1039360
        %v1282 = vsel %vm1281, %v1276, %v1278
        %v1283 = vsel %vm1281, %v1278, %v1280
        %v1285 = vsel %vm533, %v1273, 0
        %v1288 = vsel %vm533, %v1274, 0
        %v1291 = vand.u32 %v1282, %v543
        %v1294 = vand.u32 %v1283, %v543
        %v1297 = vand.u32 %v1280, %v543
        %1299 = vmatprep.subr.bf16.mxu0 %v1294
        %1300 = vmatpush1.bf16.msra.mxu0 %v1291
        %1301 = vmatprep.subr.bf16.mxu0 0
        %1302 = vmatpush1.bf16.msra.mxu0 0
        %1303 = vmatprep.subr.bf16.mxu0 0
        %1304 = vmatpush1.bf16.msra.mxu0 0
        %1305 = vmatprep.subr.bf16.mxu0 0
        %1306 = vmatpush1.bf16.msra.mxu0 0
        %1307 = vmatprep.subr.bf16.mxu0 0
        %1308 = vmatpush1.bf16.msra.mxu0 0
        %1309 = vmatprep.subr.bf16.mxu0 0
        %1310 = vmatpush1.bf16.msra.mxu0 0
        %1311 = vmatprep.subr.bf16.mxu0 0
        %1312 = vmatpush1.bf16.msra.mxu0 0
        %1313 = vmatprep.subr.bf16.mxu0 0
        %1314 = vmatpush1.bf16.msra.mxu0 0
        %1315 = vmatprep.subr.bf16.mxu0 0
        %1316 = vmatpush1.bf16.msra.mxu0 0
        %1317 = vmatprep.subr.bf16.mxu0 0
        %1318 = vmatpush1.bf16.msra.mxu0 0
        %1319 = vmatprep.subr.bf16.mxu0 0
        %1320 = vmatpush1.bf16.msra.mxu0 0
        %1321 = vmatprep.subr.bf16.mxu0 0
        %1322 = vmatpush1.bf16.msra.mxu0 0
        %1323 = vmatprep.subr.bf16.mxu0 0
        %1324 = vmatpush1.bf16.msra.mxu0 0
        %1325 = vmatprep.subr.bf16.mxu0 0
        %1326 = vmatpush1.bf16.msra.mxu0 0
        %1327 = vmatprep.subr.bf16.mxu0 0
        %1328 = vmatpush1.bf16.msra.mxu0 0
        %1329 = vmatprep.subr.bf16.mxu0 0
        %1330 = vmatpush1.bf16.msra.mxu0 0
        %1331 = vmatprep.mubr.bf16.mxu0 0
        %1332 = vmatmul.mubr.bf16.gmra.mrb[0].mxu0 %v1285
        %v1333 = vpop.f32.mrb[0].mxu0
        %v1334 = vadd.f32 0.0, %v1333
        %v1335 = vpop.f32.mrb[0].mxu0
        %v1336 = vadd.f32 0.0, %v1335
        %v1337 = vpop.f32.mrb[0].mxu0
        %v1338 = vadd.f32 0.0, %v1337
        %v1339 = vpop.f32.mrb[0].mxu0
        %v1340 = vadd.f32 0.0, %v1339
        %1341 = vmatprep.mubr.bf16.mxu0 0
        %1342 = vmatmul.mubr.bf16.gmra.mrb[0].mxu0 %v1288
        %v1343 = vpop.f32.mrb[0].mxu0
        %v1344 = vadd.f32 0.0, %v1343
        %v1345 = vpop.f32.mrb[0].mxu0
        %v1346 = vadd.f32 0.0, %v1345
        %v1347 = vpop.f32.mrb[0].mxu0
        %v1348 = vadd.f32 0.0, %v1347
        %v1349 = vpop.f32.mrb[0].mxu0
        %v1350 = vadd.f32 0.0, %v1349
        %1351 = vdwg.mxu0
        %1352 = vmatprep.subr.bf16.mxu0 0
        %1353 = vmatpush1.bf16.msra.mxu0 %v1297
        %1354 = vmatprep.subr.bf16.mxu0 0
        %1355 = vmatpush1.bf16.msra.mxu0 0
        %1356 = vmatprep.subr.bf16.mxu0 0
        %1357 = vmatpush1.bf16.msra.mxu0 0
        %1358 = vmatprep.subr.bf16.mxu0 0
        %1359 = vmatpush1.bf16.msra.mxu0 0
        %1360 = vmatprep.subr.bf16.mxu0 0
        %1361 = vmatpush1.bf16.msra.mxu0 0
        %1362 = vmatprep.subr.bf16.mxu0 0
        %1363 = vmatpush1.bf16.msra.mxu0 0
        %1364 = vmatprep.subr.bf16.mxu0 0
        %1365 = vmatpush1.bf16.msra.mxu0 0
        %1366 = vmatprep.subr.bf16.mxu0 0
        %1367 = vmatpush1.bf16.msra.mxu0 0
        %1368 = vmatprep.subr.bf16.mxu0 0
        %1369 = vmatpush1.bf16.msra.mxu0 0
        %1370 = vmatprep.subr.bf16.mxu0 0
        %1371 = vmatpush1.bf16.msra.mxu0 0
        %1372 = vmatprep.subr.bf16.mxu0 0
        %1373 = vmatpush1.bf16.msra.mxu0 0
        %1374 = vmatprep.subr.bf16.mxu0 0
        %1375 = vmatpush1.bf16.msra.mxu0 0
        %1376 = vmatprep.subr.bf16.mxu0 0
        %1377 = vmatpush1.bf16.msra.mxu0 0
        %1378 = vmatprep.subr.bf16.mxu0 0
        %1379 = vmatpush1.bf16.msra.mxu0 0
        %1380 = vmatprep.subr.bf16.mxu0 0
        %1381 = vmatpush1.bf16.msra.mxu0 0
        %1382 = vmatprep.subr.bf16.mxu0 0
        %1383 = vmatpush1.bf16.msra.mxu0 0
        %1384 = vmatprep.mubr.bf16.mxu0 0
        %1385 = vmatmul.mubr.bf16.gmra.mrb[0].mxu0 %v1285
        %v1386 = vpop.f32.mrb[0].mxu0
        %v1387 = vadd.f32 0.0, %v1386
        %v1388 = vpop.f32.mrb[0].mxu0
        %v1389 = vpop.f32.mrb[0].mxu0
        %v1390 = vadd.f32 0.0, %v1389
        %v1391 = vpop.f32.mrb[0].mxu0
        %1392 = vmatprep.mubr.bf16.mxu0 0
        %1393 = vmatmul.mubr.bf16.gmra.mrb[0].mxu0 %v1288
        %v1394 = vpop.f32.mrb[0].mxu0
        %v1395 = vadd.f32 0.0, %v1394
        %v1396 = vpop.f32.mrb[0].mxu0
        %v1397 = vpop.f32.mrb[0].mxu0
        %v1398 = vadd.f32 0.0, %v1397
        %v1399 = vpop.f32.mrb[0].mxu0
        %1400 = vdwg.mxu0
        %v1401 = vadd.f32 %v1248, %v1334
        %v1402 = vadd.f32 %v1249, %v1336
        %v1403 = vadd.f32 %v1250, %v1387
        %v1404 = vadd.f32 %v1251, %v1338
        %v1405 = vadd.f32 %v1252, %v1340
        %v1406 = vadd.f32 %v1253, %v1390
        %v1407 = vadd.f32 %v1254, %v1344
        %v1408 = vadd.f32 %v1255, %v1346
        %v1409 = vadd.f32 %v1256, %v1395
        %v1410 = vadd.f32 %v1257, %v1348
        %v1411 = vadd.f32 %v1258, %v1350
        %v1412 = vadd.f32 %v1259, %v1398
        %s1413 = scalar_lea.vmem %s2, 96
        %v1414 = vld [vmem:[%s1413] sm:$0xf]
        %v1415 = vld [vmem:[%s1413 + $0x4] sm:$0xf]
        %v1416 = vld [vmem:[%s1413 + $0x8] sm:$0xf]
        %v1417 = vld [vmem:[%s1413 + $0xc] sm:$0xf]
        %v1422 = vunpack.c.l.b16 %v1414
        %v1423 = vunpack.c.l.b16 %v1415
        %v1424 = vunpack.c.l.b16 %v1416
        %v1425 = vunpack.c.l.b16 %v1417
        %v1426 = vpack.c.b16 %v1423, %v1422
        %v1427 = vpack.c.b16 %v1425, %v1424
        %1428 = vrot.lane.b32.xlu0 %v1128, 111
        %v1429 = vpop.permute.xlu0 %1428
        %1430 = vrot.lane.b32.xlu0 %v1129, 111
        %v1431 = vpop.permute.xlu0 %1430
        %1432 = vrot.lane.b32.xlu0 %v1130, 111
        %v1433 = vpop.permute.xlu0 %1432
        %vm1434 = vcmask 908288
        %v1435 = vsel %vm1434, %v1429, %v1431
        %v1436 = vsel %vm1434, %v1431, %v1433
        %v1438 = vsel %vm533, %v1426, 0
        %v1441 = vsel %vm533, %v1427, 0
        %v1444 = vand.u32 %v1435, %v543
        %v1447 = vand.u32 %v1436, %v543
        %v1450 = vand.u32 %v1433, %v543
        %1452 = vmatprep.subr.bf16.mxu0 %v1447
        %1453 = vmatpush1.bf16.msra.mxu0 %v1444
        %1454 = vmatprep.subr.bf16.mxu0 0
        %1455 = vmatpush1.bf16.msra.mxu0 0
        %1456 = vmatprep.subr.bf16.mxu0 0
        %1457 = vmatpush1.bf16.msra.mxu0 0
        %1458 = vmatprep.subr.bf16.mxu0 0
        %1459 = vmatpush1.bf16.msra.mxu0 0
        %1460 = vmatprep.subr.bf16.mxu0 0
        %1461 = vmatpush1.bf16.msra.mxu0 0
        %1462 = vmatprep.subr.bf16.mxu0 0
        %1463 = vmatpush1.bf16.msra.mxu0 0
        %1464 = vmatprep.subr.bf16.mxu0 0
        %1465 = vmatpush1.bf16.msra.mxu0 0
        %1466 = vmatprep.subr.bf16.mxu0 0
        %1467 = vmatpush1.bf16.msra.mxu0 0
        %1468 = vmatprep.subr.bf16.mxu0 0
        %1469 = vmatpush1.bf16.msra.mxu0 0
        %1470 = vmatprep.subr.bf16.mxu0 0
        %1471 = vmatpush1.bf16.msra.mxu0 0
        %1472 = vmatprep.subr.bf16.mxu0 0
        %1473 = vmatpush1.bf16.msra.mxu0 0
        %1474 = vmatprep.subr.bf16.mxu0 0
        %1475 = vmatpush1.bf16.msra.mxu0 0
        %1476 = vmatprep.subr.bf16.mxu0 0
        %1477 = vmatpush1.bf16.msra.mxu0 0
        %1478 = vmatprep.subr.bf16.mxu0 0
        %1479 = vmatpush1.bf16.msra.mxu0 0
        %1480 = vmatprep.subr.bf16.mxu0 0
        %1481 = vmatpush1.bf16.msra.mxu0 0
        %1482 = vmatprep.subr.bf16.mxu0 0
        %1483 = vmatpush1.bf16.msra.mxu0 0
        %1484 = vmatprep.mubr.bf16.mxu0 0
        %1485 = vmatmul.mubr.bf16.gmra.mrb[0].mxu0 %v1438
        %v1486 = vpop.f32.mrb[0].mxu0
        %v1487 = vadd.f32 0.0, %v1486
        %v1488 = vpop.f32.mrb[0].mxu0
        %v1489 = vadd.f32 0.0, %v1488
        %v1490 = vpop.f32.mrb[0].mxu0
        %v1491 = vadd.f32 0.0, %v1490
        %v1492 = vpop.f32.mrb[0].mxu0
        %v1493 = vadd.f32 0.0, %v1492
        %1494 = vmatprep.mubr.bf16.mxu0 0
        %1495 = vmatmul.mubr.bf16.gmra.mrb[0].mxu0 %v1441
        %v1496 = vpop.f32.mrb[0].mxu0
        %v1497 = vadd.f32 0.0, %v1496
        %v1498 = vpop.f32.mrb[0].mxu0
        %v1499 = vadd.f32 0.0, %v1498
        %v1500 = vpop.f32.mrb[0].mxu0
        %v1501 = vadd.f32 0.0, %v1500
        %v1502 = vpop.f32.mrb[0].mxu0
        %v1503 = vadd.f32 0.0, %v1502
        %1504 = vdwg.mxu0
        %1505 = vmatprep.subr.bf16.mxu0 0
        %1506 = vmatpush1.bf16.msra.mxu0 %v1450
        %1507 = vmatprep.subr.bf16.mxu0 0
        %1508 = vmatpush1.bf16.msra.mxu0 0
        %1509 = vmatprep.subr.bf16.mxu0 0
        %1510 = vmatpush1.bf16.msra.mxu0 0
        %1511 = vmatprep.subr.bf16.mxu0 0
        %1512 = vmatpush1.bf16.msra.mxu0 0
        %1513 = vmatprep.subr.bf16.mxu0 0
        %1514 = vmatpush1.bf16.msra.mxu0 0
        %1515 = vmatprep.subr.bf16.mxu0 0
        %1516 = vmatpush1.bf16.msra.mxu0 0
        %1517 = vmatprep.subr.bf16.mxu0 0
        %1518 = vmatpush1.bf16.msra.mxu0 0
        %1519 = vmatprep.subr.bf16.mxu0 0
        %1520 = vmatpush1.bf16.msra.mxu0 0
        %1521 = vmatprep.subr.bf16.mxu0 0
        %1522 = vmatpush1.bf16.msra.mxu0 0
        %1523 = vmatprep.subr.bf16.mxu0 0
        %1524 = vmatpush1.bf16.msra.mxu0 0
        %1525 = vmatprep.subr.bf16.mxu0 0
        %1526 = vmatpush1.bf16.msra.mxu0 0
        %1527 = vmatprep.subr.bf16.mxu0 0
        %1528 = vmatpush1.bf16.msra.mxu0 0
        %1529 = vmatprep.subr.bf16.mxu0 0
        %1530 = vmatpush1.bf16.msra.mxu0 0
        %1531 = vmatprep.subr.bf16.mxu0 0
        %1532 = vmatpush1.bf16.msra.mxu0 0
        %1533 = vmatprep.subr.bf16.mxu0 0
        %1534 = vmatpush1.bf16.msra.mxu0 0
        %1535 = vmatprep.subr.bf16.mxu0 0
        %1536 = vmatpush1.bf16.msra.mxu0 0
        %1537 = vmatprep.mubr.bf16.mxu0 0
        %1538 = vmatmul.mubr.bf16.gmra.mrb[0].mxu0 %v1438
        %v1539 = vpop.f32.mrb[0].mxu0
        %v1540 = vadd.f32 0.0, %v1539
        %v1541 = vpop.f32.mrb[0].mxu0
        %v1542 = vpop.f32.mrb[0].mxu0
        %v1543 = vadd.f32 0.0, %v1542
        %v1544 = vpop.f32.mrb[0].mxu0
        %1545 = vmatprep.mubr.bf16.mxu0 0
        %1546 = vmatmul.mubr.bf16.gmra.mrb[0].mxu0 %v1441
        %v1547 = vpop.f32.mrb[0].mxu0
        %v1548 = vadd.f32 0.0, %v1547
        %v1549 = vpop.f32.mrb[0].mxu0
        %v1550 = vpop.f32.mrb[0].mxu0
        %v1551 = vadd.f32 0.0, %v1550
        %v1552 = vpop.f32.mrb[0].mxu0
        %1553 = vdwg.mxu0
        %v1554 = vadd.f32 %v1401, %v1487
        %v1555 = vadd.f32 %v1402, %v1489
        %v1556 = vadd.f32 %v1403, %v1540
        %v1557 = vadd.f32 %v1404, %v1491
        %v1558 = vadd.f32 %v1405, %v1493
        %v1559 = vadd.f32 %v1406, %v1543
        %v1560 = vadd.f32 %v1407, %v1497
        %v1561 = vadd.f32 %v1408, %v1499
        %v1562 = vadd.f32 %v1409, %v1548
        %v1563 = vadd.f32 %v1410, %v1501
        %v1564 = vadd.f32 %v1411, %v1503
        %v1565 = vadd.f32 %v1412, %v1551
        %s1566 = scalar_lea.vmem %s2, 112
        %v1567 = vld [vmem:[%s1566] sm:$0xf]
        %v1568 = vld [vmem:[%s1566 + $0x4] sm:$0xf]
        %v1569 = vld [vmem:[%s1566 + $0x8] sm:$0xf]
        %v1570 = vld [vmem:[%s1566 + $0xc] sm:$0xf]
        %v1575 = vunpack.c.l.b16 %v1567
        %v1576 = vunpack.c.l.b16 %v1568
        %v1577 = vunpack.c.l.b16 %v1569
        %v1578 = vunpack.c.l.b16 %v1570
        %v1579 = vpack.c.b16 %v1576, %v1575
        %v1580 = vpack.c.b16 %v1578, %v1577
        %1581 = vrot.lane.b32.xlu0 %v1128, 110
        %v1582 = vpop.permute.xlu0 %1581
        %1583 = vrot.lane.b32.xlu0 %v1129, 110
        %v1584 = vpop.permute.xlu0 %1583
        %1585 = vrot.lane.b32.xlu0 %v1130, 110
        %v1586 = vpop.permute.xlu0 %1585
        %vm1587 = vcmask 900096
        %v1588 = vsel %vm1587, %v1582, %v1584
        %v1589 = vsel %vm1587, %v1584, %v1586
        %v1591 = vsel %vm533, %v1579, 0
        %v1594 = vsel %vm533, %v1580, 0
        %v1597 = vand.u32 %v1588, %v543
        %v1600 = vand.u32 %v1589, %v543
        %v1603 = vand.u32 %v1586, %v543
        %1605 = vmatprep.subr.bf16.mxu0 %v1600
        %1606 = vmatpush1.bf16.msra.mxu0 %v1597
        %1607 = vmatprep.subr.bf16.mxu0 0
        %1608 = vmatpush1.bf16.msra.mxu0 0
        %1609 = vmatprep.subr.bf16.mxu0 0
        %1610 = vmatpush1.bf16.msra.mxu0 0
        %1611 = vmatprep.subr.bf16.mxu0 0
        %1612 = vmatpush1.bf16.msra.mxu0 0
        %1613 = vmatprep.subr.bf16.mxu0 0
        %1614 = vmatpush1.bf16.msra.mxu0 0
        %1615 = vmatprep.subr.bf16.mxu0 0
        %1616 = vmatpush1.bf16.msra.mxu0 0
        %1617 = vmatprep.subr.bf16.mxu0 0
        %1618 = vmatpush1.bf16.msra.mxu0 0
        %1619 = vmatprep.subr.bf16.mxu0 0
        %1620 = vmatpush1.bf16.msra.mxu0 0
        %1621 = vmatprep.subr.bf16.mxu0 0
        %1622 = vmatpush1.bf16.msra.mxu0 0
        %1623 = vmatprep.subr.bf16.mxu0 0
        %1624 = vmatpush1.bf16.msra.mxu0 0
        %1625 = vmatprep.subr.bf16.mxu0 0
        %1626 = vmatpush1.bf16.msra.mxu0 0
        %1627 = vmatprep.subr.bf16.mxu0 0
        %1628 = vmatpush1.bf16.msra.mxu0 0
        %1629 = vmatprep.subr.bf16.mxu0 0
        %1630 = vmatpush1.bf16.msra.mxu0 0
        %1631 = vmatprep.subr.bf16.mxu0 0
        %1632 = vmatpush1.bf16.msra.mxu0 0
        %1633 = vmatprep.subr.bf16.mxu0 0
        %1634 = vmatpush1.bf16.msra.mxu0 0
        %1635 = vmatprep.subr.bf16.mxu0 0
        %1636 = vmatpush1.bf16.msra.mxu0 0
        %1637 = vmatprep.mubr.bf16.mxu0 0
        %1638 = vmatmul.mubr.bf16.gmra.mrb[0].mxu0 %v1591
        %v1639 = vpop.f32.mrb[0].mxu0
        %v1640 = vadd.f32 0.0, %v1639
        %v1641 = vpop.f32.mrb[0].mxu0
        %v1642 = vadd.f32 0.0, %v1641
        %v1643 = vpop.f32.mrb[0].mxu0
        %v1644 = vadd.f32 0.0, %v1643
        %v1645 = vpop.f32.mrb[0].mxu0
        %v1646 = vadd.f32 0.0, %v1645
        %1647 = vmatprep.mubr.bf16.mxu0 0
        %1648 = vmatmul.mubr.bf16.gmra.mrb[0].mxu0 %v1594
        %v1649 = vpop.f32.mrb[0].mxu0
        %v1650 = vadd.f32 0.0, %v1649
        %v1651 = vpop.f32.mrb[0].mxu0
        %v1652 = vadd.f32 0.0, %v1651
        %v1653 = vpop.f32.mrb[0].mxu0
        %v1654 = vadd.f32 0.0, %v1653
        %v1655 = vpop.f32.mrb[0].mxu0
        %v1656 = vadd.f32 0.0, %v1655
        %1657 = vdwg.mxu0
        %1658 = vmatprep.subr.bf16.mxu0 0
        %1659 = vmatpush1.bf16.msra.mxu0 %v1603
        %1660 = vmatprep.subr.bf16.mxu0 0
        %1661 = vmatpush1.bf16.msra.mxu0 0
        %1662 = vmatprep.subr.bf16.mxu0 0
        %1663 = vmatpush1.bf16.msra.mxu0 0
        %1664 = vmatprep.subr.bf16.mxu0 0
        %1665 = vmatpush1.bf16.msra.mxu0 0
        %1666 = vmatprep.subr.bf16.mxu0 0
        %1667 = vmatpush1.bf16.msra.mxu0 0
        %1668 = vmatprep.subr.bf16.mxu0 0
        %1669 = vmatpush1.bf16.msra.mxu0 0
        %1670 = vmatprep.subr.bf16.mxu0 0
        %1671 = vmatpush1.bf16.msra.mxu0 0
        %1672 = vmatprep.subr.bf16.mxu0 0
        %1673 = vmatpush1.bf16.msra.mxu0 0
        %1674 = vmatprep.subr.bf16.mxu0 0
        %1675 = vmatpush1.bf16.msra.mxu0 0
        %1676 = vmatprep.subr.bf16.mxu0 0
        %1677 = vmatpush1.bf16.msra.mxu0 0
        %1678 = vmatprep.subr.bf16.mxu0 0
        %1679 = vmatpush1.bf16.msra.mxu0 0
        %1680 = vmatprep.subr.bf16.mxu0 0
        %1681 = vmatpush1.bf16.msra.mxu0 0
        %1682 = vmatprep.subr.bf16.mxu0 0
        %1683 = vmatpush1.bf16.msra.mxu0 0
        %1684 = vmatprep.subr.bf16.mxu0 0
        %1685 = vmatpush1.bf16.msra.mxu0 0
        %1686 = vmatprep.subr.bf16.mxu0 0
        %1687 = vmatpush1.bf16.msra.mxu0 0
        %1688 = vmatprep.subr.bf16.mxu0 0
        %1689 = vmatpush1.bf16.msra.mxu0 0
        %1690 = vmatprep.mubr.bf16.mxu0 0
        %1691 = vmatmul.mubr.bf16.gmra.mrb[0].mxu0 %v1591
        %v1692 = vpop.f32.mrb[0].mxu0
        %v1693 = vadd.f32 0.0, %v1692
        %v1694 = vpop.f32.mrb[0].mxu0
        %v1695 = vpop.f32.mrb[0].mxu0
        %v1696 = vadd.f32 0.0, %v1695
        %v1697 = vpop.f32.mrb[0].mxu0
        %1698 = vmatprep.mubr.bf16.mxu0 0
        %1699 = vmatmul.mubr.bf16.gmra.mrb[0].mxu0 %v1594
        %v1700 = vpop.f32.mrb[0].mxu0
        %v1701 = vadd.f32 0.0, %v1700
        %v1702 = vpop.f32.mrb[0].mxu0
        %v1703 = vpop.f32.mrb[0].mxu0
        %v1704 = vadd.f32 0.0, %v1703
        %v1705 = vpop.f32.mrb[0].mxu0
        %1706 = vdwg.mxu0
        %v1707 = vadd.f32 %v1554, %v1640
        %v1708 = vadd.f32 %v1555, %v1642
        %v1709 = vadd.f32 %v1556, %v1693
        %v1710 = vadd.f32 %v1557, %v1644
        %v1711 = vadd.f32 %v1558, %v1646
        %v1712 = vadd.f32 %v1559, %v1696
        %v1713 = vadd.f32 %v1560, %v1650
        %v1714 = vadd.f32 %v1561, %v1652
        %v1715 = vadd.f32 %v1562, %v1701
        %v1716 = vadd.f32 %v1563, %v1654
        %v1717 = vadd.f32 %v1564, %v1656
        %v1718 = vadd.f32 %v1565, %v1704
        %s1719 = scalar_lea.vmem %s2, 128
        %v1720 = vld [vmem:[%s1719] sm:$0xf]
        %v1721 = vld [vmem:[%s1719 + $0x4] sm:$0xf]
        %v1722 = vld [vmem:[%s1719 + $0x8] sm:$0xf]
        %v1723 = vld [vmem:[%s1719 + $0xc] sm:$0xf]
        %v1728 = vunpack.c.l.b16 %v1720
        %v1729 = vunpack.c.l.b16 %v1721
        %v1730 = vunpack.c.l.b16 %v1722
        %v1731 = vunpack.c.l.b16 %v1723
        %v1732 = vpack.c.b16 %v1729, %v1728
        %v1733 = vpack.c.b16 %v1731, %v1730
        %1734 = vrot.lane.b32.xlu0 %v1128, 109
        %v1735 = vpop.permute.xlu0 %1734
        %1736 = vrot.lane.b32.xlu0 %v1129, 109
        %v1737 = vpop.permute.xlu0 %1736
        %1738 = vrot.lane.b32.xlu0 %v1130, 109
        %v1739 = vpop.permute.xlu0 %1738
        %vm1740 = vcmask 891904
        %v1741 = vsel %vm1740, %v1735, %v1737
        %v1742 = vsel %vm1740, %v1737, %v1739
        %v1744 = vsel %vm533, %v1732, 0
        %v1747 = vsel %vm533, %v1733, 0
        %v1750 = vand.u32 %v1741, %v543
        %v1753 = vand.u32 %v1742, %v543
        %v1756 = vand.u32 %v1739, %v543
        %1758 = vmatprep.subr.bf16.mxu0 %v1753
        %1759 = vmatpush1.bf16.msra.mxu0 %v1750
        %1760 = vmatprep.subr.bf16.mxu0 0
        %1761 = vmatpush1.bf16.msra.mxu0 0
        %1762 = vmatprep.subr.bf16.mxu0 0
        %1763 = vmatpush1.bf16.msra.mxu0 0
        %1764 = vmatprep.subr.bf16.mxu0 0
        %1765 = vmatpush1.bf16.msra.mxu0 0
        %1766 = vmatprep.subr.bf16.mxu0 0
        %1767 = vmatpush1.bf16.msra.mxu0 0
        %1768 = vmatprep.subr.bf16.mxu0 0
        %1769 = vmatpush1.bf16.msra.mxu0 0
        %1770 = vmatprep.subr.bf16.mxu0 0
        %1771 = vmatpush1.bf16.msra.mxu0 0
        %1772 = vmatprep.subr.bf16.mxu0 0
        %1773 = vmatpush1.bf16.msra.mxu0 0
        %1774 = vmatprep.subr.bf16.mxu0 0
        %1775 = vmatpush1.bf16.msra.mxu0 0
        %1776 = vmatprep.subr.bf16.mxu0 0
        %1777 = vmatpush1.bf16.msra.mxu0 0
        %1778 = vmatprep.subr.bf16.mxu0 0
        %1779 = vmatpush1.bf16.msra.mxu0 0
        %1780 = vmatprep.subr.bf16.mxu0 0
        %1781 = vmatpush1.bf16.msra.mxu0 0
        %1782 = vmatprep.subr.bf16.mxu0 0
        %1783 = vmatpush1.bf16.msra.mxu0 0
        %1784 = vmatprep.subr.bf16.mxu0 0
        %1785 = vmatpush1.bf16.msra.mxu0 0
        %1786 = vmatprep.subr.bf16.mxu0 0
        %1787 = vmatpush1.bf16.msra.mxu0 0
        %1788 = vmatprep.subr.bf16.mxu0 0
        %1789 = vmatpush1.bf16.msra.mxu0 0
        %1790 = vmatprep.mubr.bf16.mxu0 0
        %1791 = vmatmul.mubr.bf16.gmra.mrb[0].mxu0 %v1744
        %v1792 = vpop.f32.mrb[0].mxu0
        %v1793 = vadd.f32 0.0, %v1792
        %v1794 = vpop.f32.mrb[0].mxu0
        %v1795 = vadd.f32 0.0, %v1794
        %v1796 = vpop.f32.mrb[0].mxu0
        %v1797 = vadd.f32 0.0, %v1796
        %v1798 = vpop.f32.mrb[0].mxu0
        %v1799 = vadd.f32 0.0, %v1798
        %1800 = vmatprep.mubr.bf16.mxu0 0
        %1801 = vmatmul.mubr.bf16.gmra.mrb[0].mxu0 %v1747
        %v1802 = vpop.f32.mrb[0].mxu0
        %v1803 = vadd.f32 0.0, %v1802
        %v1804 = vpop.f32.mrb[0].mxu0
        %v1805 = vadd.f32 0.0, %v1804
        %v1806 = vpop.f32.mrb[0].mxu0
        %v1807 = vadd.f32 0.0, %v1806
        %v1808 = vpop.f32.mrb[0].mxu0
        %v1809 = vadd.f32 0.0, %v1808
        %1810 = vdwg.mxu0
        %1811 = vmatprep.subr.bf16.mxu0 0
        %1812 = vmatpush1.bf16.msra.mxu0 %v1756
        %1813 = vmatprep.subr.bf16.mxu0 0
        %1814 = vmatpush1.bf16.msra.mxu0 0
        %1815 = vmatprep.subr.bf16.mxu0 0
        %1816 = vmatpush1.bf16.msra.mxu0 0
        %1817 = vmatprep.subr.bf16.mxu0 0
        %1818 = vmatpush1.bf16.msra.mxu0 0
        %1819 = vmatprep.subr.bf16.mxu0 0
        %1820 = vmatpush1.bf16.msra.mxu0 0
        %1821 = vmatprep.subr.bf16.mxu0 0
        %1822 = vmatpush1.bf16.msra.mxu0 0
        %1823 = vmatprep.subr.bf16.mxu0 0
        %1824 = vmatpush1.bf16.msra.mxu0 0
        %1825 = vmatprep.subr.bf16.mxu0 0
        %1826 = vmatpush1.bf16.msra.mxu0 0
        %1827 = vmatprep.subr.bf16.mxu0 0
        %1828 = vmatpush1.bf16.msra.mxu0 0
        %1829 = vmatprep.subr.bf16.mxu0 0
        %1830 = vmatpush1.bf16.msra.mxu0 0
        %1831 = vmatprep.subr.bf16.mxu0 0
        %1832 = vmatpush1.bf16.msra.mxu0 0
        %1833 = vmatprep.subr.bf16.mxu0 0
        %1834 = vmatpush1.bf16.msra.mxu0 0
        %1835 = vmatprep.subr.bf16.mxu0 0
        %1836 = vmatpush1.bf16.msra.mxu0 0
        %1837 = vmatprep.subr.bf16.mxu0 0
        %1838 = vmatpush1.bf16.msra.mxu0 0
        %1839 = vmatprep.subr.bf16.mxu0 0
        %1840 = vmatpush1.bf16.msra.mxu0 0
        %1841 = vmatprep.subr.bf16.mxu0 0
        %1842 = vmatpush1.bf16.msra.mxu0 0
        %1843 = vmatprep.mubr.bf16.mxu0 0
        %1844 = vmatmul.mubr.bf16.gmra.mrb[0].mxu0 %v1744
        %v1845 = vpop.f32.mrb[0].mxu0
        %v1846 = vadd.f32 0.0, %v1845
        %v1847 = vpop.f32.mrb[0].mxu0
        %v1848 = vpop.f32.mrb[0].mxu0
        %v1849 = vadd.f32 0.0, %v1848
        %v1850 = vpop.f32.mrb[0].mxu0
        %1851 = vmatprep.mubr.bf16.mxu0 0
        %1852 = vmatmul.mubr.bf16.gmra.mrb[0].mxu0 %v1747
        %v1853 = vpop.f32.mrb[0].mxu0
        %v1854 = vadd.f32 0.0, %v1853
        %v1855 = vpop.f32.mrb[0].mxu0
        %v1856 = vpop.f32.mrb[0].mxu0
        %v1857 = vadd.f32 0.0, %v1856
        %v1858 = vpop.f32.mrb[0].mxu0
        %1859 = vdwg.mxu0
        %v1860 = vadd.f32 %v1707, %v1793
        %v1861 = vadd.f32 %v1708, %v1795
        %v1862 = vadd.f32 %v1709, %v1846
        %v1863 = vadd.f32 %v1710, %v1797
        %v1864 = vadd.f32 %v1711, %v1799
        %v1865 = vadd.f32 %v1712, %v1849
        %v1866 = vadd.f32 %v1713, %v1803
        %v1867 = vadd.f32 %v1714, %v1805
        %v1868 = vadd.f32 %v1715, %v1854
        %v1869 = vadd.f32 %v1716, %v1807
        %v1870 = vadd.f32 %v1717, %v1809
        %v1871 = vadd.f32 %v1718, %v1857
        %v1872 = vld [vmem:[#allocation7] sm:$0xff]
        %v1873 = vld [vmem:[#allocation7 + $0x8] sm:$0xff]
        %v1874 = vld [vmem:[#allocation7 + $0x10] sm:$0xff]
        %v1875 = vld [vmem:[#allocation7 + $0x18] sm:$0xff]
        %1877 = vset.pattern.permute.xlu0 0
        %1878 = vperm.xlu0 %1877, %v1872
        %v1879 = vpop.permute.xlu0 %1878
        %1882 = vset.pattern.permute.xlu0 0
        %1883 = vperm.xlu0 %1882, %v1873
        %v1884 = vpop.permute.xlu0 %1883
        %1887 = vset.pattern.permute.xlu0 0
        %1888 = vperm.xlu0 %1887, %v1874
        %v1889 = vpop.permute.xlu0 %1888
        %1892 = vset.pattern.permute.xlu0 0
        %1893 = vperm.xlu0 %1892, %v1875
        %v1894 = vpop.permute.xlu0 %1893
        %v1896 = vadd.f32 %v1860, %v1879
        %v1897 = vadd.f32 %v1861, %v1879
        %v1898 = vadd.f32 %v1862, %v1879
        %v1899 = vadd.f32 %v1863, %v1884
        %v1900 = vadd.f32 %v1864, %v1884
        %v1901 = vadd.f32 %v1865, %v1884
        %v1902 = vadd.f32 %v1866, %v1889
        %v1903 = vadd.f32 %v1867, %v1889
        %v1904 = vadd.f32 %v1868, %v1889
        %v1905 = vadd.f32 %v1869, %v1894
        %v1906 = vadd.f32 %v1870, %v1894
        %v1907 = vadd.f32 %v1871, %v1894
        %v1908 = vmax.f32 %v1896, 0.0
        %v1909 = vmax.f32 %v1897, 0.0
        %v1910 = vmax.f32 %v1898, 0.0
        %v1911 = vmax.f32 %v1899, 0.0
        %v1912 = vmax.f32 %v1900, 0.0
        %v1913 = vmax.f32 %v1901, 0.0
        %v1914 = vmax.f32 %v1902, 0.0
        %v1915 = vmax.f32 %v1903, 0.0
        %v1916 = vmax.f32 %v1904, 0.0
        %v1917 = vmax.f32 %v1905, 0.0
        %v1918 = vmax.f32 %v1906, 0.0
        %v1919 = vmax.f32 %v1907, 0.0
        %v1920 = vmul.f32 %v1908, %v293
        %v1921 = vmul.f32 %v1909, %v294
        %v1922 = vmul.f32 %v1910, %v295
        %v1923 = vmul.f32 %v1911, %v293
        %v1924 = vmul.f32 %v1912, %v294
        %v1925 = vmul.f32 %v1913, %v295
        %v1926 = vmul.f32 %v1914, %v293
        %v1927 = vmul.f32 %v1915, %v294
        %v1928 = vmul.f32 %v1916, %v295
        %v1929 = vmul.f32 %v1917, %v293
        %v1930 = vmul.f32 %v1918, %v294
        %v1931 = vmul.f32 %v1919, %v295
        %v1932 = vpack.c.bf16 %v1923, %v1920
        %v1933 = vpack.c.bf16 %v1924, %v1921
        %v1934 = vpack.c.bf16 %v1925, %v1922
        %v1935 = vpack.c.bf16 %v1929, %v1926
        %v1936 = vpack.c.bf16 %v1930, %v1927
        %v1937 = vpack.c.bf16 %v1931, %v1928
        %1938 = vst [vmem:[#allocation3 + $0x8] sm:$0xff] %v1932
        %1939 = vst [vmem:[#allocation3 + $0x10] sm:$0xff] %v1933
        %vm1940 = vcmask 261120
        %1941 = vst.msk [vmem:[#allocation3 + $0x18] sm:$0xff] %vm1940, %v1934
        %1942 = vst [vmem:[#allocation3 + $0x28] sm:$0xff] %v1935
        %1943 = vst [vmem:[#allocation3 + $0x30] sm:$0xff] %v1936
        %1944 = vst.msk [vmem:[#allocation3 + $0x38] sm:$0xff] %vm1940, %v1937
        %v1945 = vld [vmem:[%s4] sm:$0x3]
        %v1946 = vld [vmem:[#allocation3] sm:$0xff]
        %v1947 = vld [vmem:[#allocation3 + $0x8] sm:$0xff]
        %v1948 = vld [vmem:[#allocation3 + $0x10] sm:$0xff]
        %v1949 = vld [vmem:[#allocation3 + $0x18] sm:$0xff]
        %v1950 = vld [vmem:[#allocation3 + $0x20] sm:$0xff]
        %v1951 = vld [vmem:[#allocation3 + $0x28] sm:$0xff]
        %v1952 = vld [vmem:[#allocation3 + $0x30] sm:$0xff]
        %v1953 = vld [vmem:[#allocation3 + $0x38] sm:$0xff]
        %s1954 = scalar_lea.vmem %s4, 2
        %v1955 = vld [vmem:[%s1954] sm:$0x3]
        %1964 = vrot.lane.b32.xlu0 %v1946, 18
        %v1965 = vpop.permute.xlu0 %1964
        %1966 = vrot.lane.b32.xlu0 %v1947, 18
        %v1967 = vpop.permute.xlu0 %1966
        %1968 = vrot.lane.b32.xlu0 %v1948, 18
        %v1969 = vpop.permute.xlu0 %1968
        %1970 = vrot.lane.b32.xlu0 %v1949, 18
        %v1971 = vpop.permute.xlu0 %1970
        %1972 = vrot.lane.b32.xlu0 %v1950, 18
        %v1973 = vpop.permute.xlu0 %1972
        %1974 = vrot.lane.b32.xlu0 %v1951, 18
        %v1975 = vpop.permute.xlu0 %1974
        %1976 = vrot.lane.b32.xlu0 %v1952, 18
        %v1977 = vpop.permute.xlu0 %1976
        %1978 = vrot.lane.b32.xlu0 %v1953, 18
        %v1979 = vpop.permute.xlu0 %1978
        %v1980 = vsel %vm529, %v1965, %v1967
        %v1981 = vsel %vm529, %v1967, %v1969
        %v1982 = vsel %vm529, %v1969, %v1971
        %v1983 = vsel %vm529, %v1973, %v1975
        %v1984 = vsel %vm529, %v1975, %v1977
        %v1985 = vsel %vm529, %v1977, %v1979
        %v1993 = vsel %vm1940, %v1955, 0
        %1995 = vmatprep.subr.bf16.mxu0 %v1981
        %1996 = vmatpush1.bf16.msra.mxu0 %v1980
        %1997 = vmatprep.subr.bf16.mxu0 %v1984
        %1998 = vmatpush1.bf16.msra.mxu0 %v1983
        %1999 = vmatprep.subr.bf16.mxu0 0
        %2000 = vmatpush1.bf16.msra.mxu0 0
        %2001 = vmatprep.subr.bf16.mxu0 0
        %2002 = vmatpush1.bf16.msra.mxu0 0
        %2003 = vmatprep.subr.bf16.mxu0 0
        %2004 = vmatpush1.bf16.msra.mxu0 0
        %2005 = vmatprep.subr.bf16.mxu0 0
        %2006 = vmatpush1.bf16.msra.mxu0 0
        %2007 = vmatprep.subr.bf16.mxu0 0
        %2008 = vmatpush1.bf16.msra.mxu0 0
        %2009 = vmatprep.subr.bf16.mxu0 0
        %2010 = vmatpush1.bf16.msra.mxu0 0
        %2011 = vmatprep.subr.bf16.mxu0 0
        %2012 = vmatpush1.bf16.msra.mxu0 0
        %2013 = vmatprep.subr.bf16.mxu0 0
        %2014 = vmatpush1.bf16.msra.mxu0 0
        %2015 = vmatprep.subr.bf16.mxu0 0
        %2016 = vmatpush1.bf16.msra.mxu0 0
        %2017 = vmatprep.subr.bf16.mxu0 0
        %2018 = vmatpush1.bf16.msra.mxu0 0
        %2019 = vmatprep.subr.bf16.mxu0 0
        %2020 = vmatpush1.bf16.msra.mxu0 0
        %2021 = vmatprep.subr.bf16.mxu0 0
        %2022 = vmatpush1.bf16.msra.mxu0 0
        %2023 = vmatprep.subr.bf16.mxu0 0
        %2024 = vmatpush1.bf16.msra.mxu0 0
        %2025 = vmatprep.subr.bf16.mxu0 0
        %2026 = vmatpush1.bf16.msra.mxu0 0
        %2027 = vmatprep.mubr.bf16.mxu0 0
        %2028 = vmatmul.mubr.bf16.gmra.mrb[0].mxu0 %v1993
        %v2029 = vpop.f32.mrb[0].mxu0
        %v2030 = vadd.f32 0.0, %v2029
        %v2031 = vpop.f32.mrb[0].mxu0
        %v2032 = vadd.f32 0.0, %v2031
        %v2033 = vpop.f32.mrb[0].mxu0
        %v2034 = vpop.f32.mrb[0].mxu0
        %2035 = vdwg.mxu0
        %2036 = vmatprep.subr.bf16.mxu0 0
        %2037 = vmatpush1.bf16.msra.mxu0 %v1982
        %2038 = vmatprep.subr.bf16.mxu0 0
        %2039 = vmatpush1.bf16.msra.mxu0 %v1985
        %2040 = vmatprep.subr.bf16.mxu0 0
        %2041 = vmatpush1.bf16.msra.mxu0 0
        %2042 = vmatprep.subr.bf16.mxu0 0
        %2043 = vmatpush1.bf16.msra.mxu0 0
        %2044 = vmatprep.subr.bf16.mxu0 0
        %2045 = vmatpush1.bf16.msra.mxu0 0
        %2046 = vmatprep.subr.bf16.mxu0 0
        %2047 = vmatpush1.bf16.msra.mxu0 0
        %2048 = vmatprep.subr.bf16.mxu0 0
        %2049 = vmatpush1.bf16.msra.mxu0 0
        %2050 = vmatprep.subr.bf16.mxu0 0
        %2051 = vmatpush1.bf16.msra.mxu0 0
        %2052 = vmatprep.subr.bf16.mxu0 0
        %2053 = vmatpush1.bf16.msra.mxu0 0
        %2054 = vmatprep.subr.bf16.mxu0 0
        %2055 = vmatpush1.bf16.msra.mxu0 0
        %2056 = vmatprep.subr.bf16.mxu0 0
        %2057 = vmatpush1.bf16.msra.mxu0 0
        %2058 = vmatprep.subr.bf16.mxu0 0
        %2059 = vmatpush1.bf16.msra.mxu0 0
        %2060 = vmatprep.subr.bf16.mxu0 0
        %2061 = vmatpush1.bf16.msra.mxu0 0
        %2062 = vmatprep.subr.bf16.mxu0 0
        %2063 = vmatpush1.bf16.msra.mxu0 0
        %2064 = vmatprep.subr.bf16.mxu0 0
        %2065 = vmatpush1.bf16.msra.mxu0 0
        %2066 = vmatprep.subr.bf16.mxu0 0
        %2067 = vmatpush1.bf16.msra.mxu0 0
        %2068 = vmatprep.mubr.bf16.mxu0 0
        %2069 = vmatmul.mubr.bf16.gmra.mrb[0].mxu0 %v1993
        %v2070 = vpop.f32.mrb[0].mxu0
        %v2071 = vadd.f32 0.0, %v2070
        %v2072 = vpop.f32.mrb[0].mxu0
        %v2073 = vpop.f32.mrb[0].mxu0
        %v2074 = vpop.f32.mrb[0].mxu0
        %2075 = vdwg.mxu0
        %2076 = vrot.lane.b32.xlu0 %v1946, 19
        %v2077 = vpop.permute.xlu0 %2076
        %2078 = vrot.lane.b32.xlu0 %v1947, 19
        %v2079 = vpop.permute.xlu0 %2078
        %2080 = vrot.lane.b32.xlu0 %v1948, 19
        %v2081 = vpop.permute.xlu0 %2080
        %2082 = vrot.lane.b32.xlu0 %v1949, 19
        %v2083 = vpop.permute.xlu0 %2082
        %2084 = vrot.lane.b32.xlu0 %v1950, 19
        %v2085 = vpop.permute.xlu0 %2084
        %2086 = vrot.lane.b32.xlu0 %v1951, 19
        %v2087 = vpop.permute.xlu0 %2086
        %2088 = vrot.lane.b32.xlu0 %v1952, 19
        %v2089 = vpop.permute.xlu0 %2088
        %2090 = vrot.lane.b32.xlu0 %v1953, 19
        %v2091 = vpop.permute.xlu0 %2090
        %v2092 = vsel %vm673, %v2077, %v2079
        %v2093 = vsel %vm673, %v2079, %v2081
        %v2094 = vsel %vm673, %v2081, %v2083
        %v2095 = vsel %vm673, %v2085, %v2087
        %v2096 = vsel %vm673, %v2087, %v2089
        %v2097 = vsel %vm673, %v2089, %v2091
        %v2105 = vsel %vm1940, %v1945, 0
        %2107 = vmatprep.subr.bf16.mxu0 %v2093
        %2108 = vmatpush1.bf16.msra.mxu0 %v2092
        %2109 = vmatprep.subr.bf16.mxu0 %v2096
        %2110 = vmatpush1.bf16.msra.mxu0 %v2095
        %2111 = vmatprep.subr.bf16.mxu0 0
        %2112 = vmatpush1.bf16.msra.mxu0 0
        %2113 = vmatprep.subr.bf16.mxu0 0
        %2114 = vmatpush1.bf16.msra.mxu0 0
        %2115 = vmatprep.subr.bf16.mxu0 0
        %2116 = vmatpush1.bf16.msra.mxu0 0
        %2117 = vmatprep.subr.bf16.mxu0 0
        %2118 = vmatpush1.bf16.msra.mxu0 0
        %2119 = vmatprep.subr.bf16.mxu0 0
        %2120 = vmatpush1.bf16.msra.mxu0 0
        %2121 = vmatprep.subr.bf16.mxu0 0
        %2122 = vmatpush1.bf16.msra.mxu0 0
        %2123 = vmatprep.subr.bf16.mxu0 0
        %2124 = vmatpush1.bf16.msra.mxu0 0
        %2125 = vmatprep.subr.bf16.mxu0 0
        %2126 = vmatpush1.bf16.msra.mxu0 0
        %2127 = vmatprep.subr.bf16.mxu0 0
        %2128 = vmatpush1.bf16.msra.mxu0 0
        %2129 = vmatprep.subr.bf16.mxu0 0
        %2130 = vmatpush1.bf16.msra.mxu0 0
        %2131 = vmatprep.subr.bf16.mxu0 0
        %2132 = vmatpush1.bf16.msra.mxu0 0
        %2133 = vmatprep.subr.bf16.mxu0 0
        %2134 = vmatpush1.bf16.msra.mxu0 0
        %2135 = vmatprep.subr.bf16.mxu0 0
        %2136 = vmatpush1.bf16.msra.mxu0 0
        %2137 = vmatprep.subr.bf16.mxu0 0
        %2138 = vmatpush1.bf16.msra.mxu0 0
        %2139 = vmatprep.mubr.bf16.mxu0 0
        %2140 = vmatmul.mubr.bf16.gmra.mrb[0].mxu0 %v2105
        %v2141 = vpop.f32.mrb[0].mxu0
        %v2142 = vadd.f32 %v2030, %v2141
        %v2143 = vpop.f32.mrb[0].mxu0
        %v2144 = vadd.f32 %v2032, %v2143
        %v2145 = vpop.f32.mrb[0].mxu0
        %v2146 = vpop.f32.mrb[0].mxu0
        %2147 = vdwg.mxu0
        %2148 = vmatprep.subr.bf16.mxu0 0
        %2149 = vmatpush1.bf16.msra.mxu0 %v2094
        %2150 = vmatprep.subr.bf16.mxu0 0
        %2151 = vmatpush1.bf16.msra.mxu0 %v2097
        %2152 = vmatprep.subr.bf16.mxu0 0
        %2153 = vmatpush1.bf16.msra.mxu0 0
        %2154 = vmatprep.subr.bf16.mxu0 0
        %2155 = vmatpush1.bf16.msra.mxu0 0
        %2156 = vmatprep.subr.bf16.mxu0 0
        %2157 = vmatpush1.bf16.msra.mxu0 0
        %2158 = vmatprep.subr.bf16.mxu0 0
        %2159 = vmatpush1.bf16.msra.mxu0 0
        %2160 = vmatprep.subr.bf16.mxu0 0
        %2161 = vmatpush1.bf16.msra.mxu0 0
        %2162 = vmatprep.subr.bf16.mxu0 0
        %2163 = vmatpush1.bf16.msra.mxu0 0
        %2164 = vmatprep.subr.bf16.mxu0 0
        %2165 = vmatpush1.bf16.msra.mxu0 0
        %2166 = vmatprep.subr.bf16.mxu0 0
        %2167 = vmatpush1.bf16.msra.mxu0 0
        %2168 = vmatprep.subr.bf16.mxu0 0
        %2169 = vmatpush1.bf16.msra.mxu0 0
        %2170 = vmatprep.subr.bf16.mxu0 0
        %2171 = vmatpush1.bf16.msra.mxu0 0
        %2172 = vmatprep.subr.bf16.mxu0 0
        %2173 = vmatpush1.bf16.msra.mxu0 0
        %2174 = vmatprep.subr.bf16.mxu0 0
        %2175 = vmatpush1.bf16.msra.mxu0 0
        %2176 = vmatprep.subr.bf16.mxu0 0
        %2177 = vmatpush1.bf16.msra.mxu0 0
        %2178 = vmatprep.subr.bf16.mxu0 0
        %2179 = vmatpush1.bf16.msra.mxu0 0
        %2180 = vmatprep.mubr.bf16.mxu0 0
        %2181 = vmatmul.mubr.bf16.gmra.mrb[0].mxu0 %v2105
        %v2182 = vpop.f32.mrb[0].mxu0
        %v2183 = vadd.f32 %v2071, %v2182
        %v2184 = vpop.f32.mrb[0].mxu0
        %v2185 = vpop.f32.mrb[0].mxu0
        %v2186 = vpop.f32.mrb[0].mxu0
        %2187 = vdwg.mxu0
        %s2188 = scalar_lea.vmem %s4, 4
        %v2189 = vld [vmem:[%s2188] sm:$0x3]
        %2190 = vrot.lane.b32.xlu0 %v1946, 17
        %v2191 = vpop.permute.xlu0 %2190
        %2192 = vrot.lane.b32.xlu0 %v1947, 17
        %v2193 = vpop.permute.xlu0 %2192
        %2194 = vrot.lane.b32.xlu0 %v1948, 17
        %v2195 = vpop.permute.xlu0 %2194
        %2196 = vrot.lane.b32.xlu0 %v1949, 17
        %v2197 = vpop.permute.xlu0 %2196
        %2198 = vrot.lane.b32.xlu0 %v1950, 17
        %v2199 = vpop.permute.xlu0 %2198
        %2200 = vrot.lane.b32.xlu0 %v1951, 17
        %v2201 = vpop.permute.xlu0 %2200
        %2202 = vrot.lane.b32.xlu0 %v1952, 17
        %v2203 = vpop.permute.xlu0 %2202
        %2204 = vrot.lane.b32.xlu0 %v1953, 17
        %v2205 = vpop.permute.xlu0 %2204
        %v2206 = vsel %vm817, %v2191, %v2193
        %v2207 = vsel %vm817, %v2193, %v2195
        %v2208 = vsel %vm817, %v2195, %v2197
        %v2209 = vsel %vm817, %v2199, %v2201
        %v2210 = vsel %vm817, %v2201, %v2203
        %v2211 = vsel %vm817, %v2203, %v2205
        %v2219 = vsel %vm1940, %v2189, 0
        %2221 = vmatprep.subr.bf16.mxu0 %v2207
        %2222 = vmatpush1.bf16.msra.mxu0 %v2206
        %2223 = vmatprep.subr.bf16.mxu0 %v2210
        %2224 = vmatpush1.bf16.msra.mxu0 %v2209
        %2225 = vmatprep.subr.bf16.mxu0 0
        %2226 = vmatpush1.bf16.msra.mxu0 0
        %2227 = vmatprep.subr.bf16.mxu0 0
        %2228 = vmatpush1.bf16.msra.mxu0 0
        %2229 = vmatprep.subr.bf16.mxu0 0
        %2230 = vmatpush1.bf16.msra.mxu0 0
        %2231 = vmatprep.subr.bf16.mxu0 0
        %2232 = vmatpush1.bf16.msra.mxu0 0
        %2233 = vmatprep.subr.bf16.mxu0 0
        %2234 = vmatpush1.bf16.msra.mxu0 0
        %2235 = vmatprep.subr.bf16.mxu0 0
        %2236 = vmatpush1.bf16.msra.mxu0 0
        %2237 = vmatprep.subr.bf16.mxu0 0
        %2238 = vmatpush1.bf16.msra.mxu0 0
        %2239 = vmatprep.subr.bf16.mxu0 0
        %2240 = vmatpush1.bf16.msra.mxu0 0
        %2241 = vmatprep.subr.bf16.mxu0 0
        %2242 = vmatpush1.bf16.msra.mxu0 0
        %2243 = vmatprep.subr.bf16.mxu0 0
        %2244 = vmatpush1.bf16.msra.mxu0 0
        %2245 = vmatprep.subr.bf16.mxu0 0
        %2246 = vmatpush1.bf16.msra.mxu0 0
        %2247 = vmatprep.subr.bf16.mxu0 0
        %2248 = vmatpush1.bf16.msra.mxu0 0
        %2249 = vmatprep.subr.bf16.mxu0 0
        %2250 = vmatpush1.bf16.msra.mxu0 0
        %2251 = vmatprep.subr.bf16.mxu0 0
        %2252 = vmatpush1.bf16.msra.mxu0 0
        %2253 = vmatprep.mubr.bf16.mxu0 0
        %2254 = vmatmul.mubr.bf16.gmra.mrb[0].mxu0 %v2219
        %v2255 = vpop.f32.mrb[0].mxu0
        %v2256 = vadd.f32 0.0, %v2255
        %v2257 = vpop.f32.mrb[0].mxu0
        %v2258 = vadd.f32 0.0, %v2257
        %v2259 = vpop.f32.mrb[0].mxu0
        %v2260 = vpop.f32.mrb[0].mxu0
        %2261 = vdwg.mxu0
        %2262 = vmatprep.subr.bf16.mxu0 0
        %2263 = vmatpush1.bf16.msra.mxu0 %v2208
        %2264 = vmatprep.subr.bf16.mxu0 0
        %2265 = vmatpush1.bf16.msra.mxu0 %v2211
        %2266 = vmatprep.subr.bf16.mxu0 0
        %2267 = vmatpush1.bf16.msra.mxu0 0
        %2268 = vmatprep.subr.bf16.mxu0 0
        %2269 = vmatpush1.bf16.msra.mxu0 0
        %2270 = vmatprep.subr.bf16.mxu0 0
        %2271 = vmatpush1.bf16.msra.mxu0 0
        %2272 = vmatprep.subr.bf16.mxu0 0
        %2273 = vmatpush1.bf16.msra.mxu0 0
        %2274 = vmatprep.subr.bf16.mxu0 0
        %2275 = vmatpush1.bf16.msra.mxu0 0
        %2276 = vmatprep.subr.bf16.mxu0 0
        %2277 = vmatpush1.bf16.msra.mxu0 0
        %2278 = vmatprep.subr.bf16.mxu0 0
        %2279 = vmatpush1.bf16.msra.mxu0 0
        %2280 = vmatprep.subr.bf16.mxu0 0
        %2281 = vmatpush1.bf16.msra.mxu0 0
        %2282 = vmatprep.subr.bf16.mxu0 0
        %2283 = vmatpush1.bf16.msra.mxu0 0
        %2284 = vmatprep.subr.bf16.mxu0 0
        %2285 = vmatpush1.bf16.msra.mxu0 0
        %2286 = vmatprep.subr.bf16.mxu0 0
        %2287 = vmatpush1.bf16.msra.mxu0 0
        %2288 = vmatprep.subr.bf16.mxu0 0
        %2289 = vmatpush1.bf16.msra.mxu0 0
        %2290 = vmatprep.subr.bf16.mxu0 0
        %2291 = vmatpush1.bf16.msra.mxu0 0
        %2292 = vmatprep.subr.bf16.mxu0 0
        %2293 = vmatpush1.bf16.msra.mxu0 0
        %2294 = vmatprep.mubr.bf16.mxu0 0
        %2295 = vmatmul.mubr.bf16.gmra.mrb[0].mxu0 %v2219
        %v2296 = vpop.f32.mrb[0].mxu0
        %v2297 = vadd.f32 0.0, %v2296
        %v2298 = vpop.f32.mrb[0].mxu0
        %v2299 = vpop.f32.mrb[0].mxu0
        %v2300 = vpop.f32.mrb[0].mxu0
        %2301 = vdwg.mxu0
        %v2302 = vadd.f32 %v2142, %v2256
        %v2303 = vadd.f32 %v2144, %v2258
        %v2304 = vadd.f32 %v2183, %v2297
        %s2305 = scalar_lea.vmem %s4, 6
        %v2306 = vld [vmem:[%s2305] sm:$0x3]
        %2307 = vrot.lane.b32.xlu0 %v1946, 1
        %v2308 = vpop.permute.xlu0 %2307
        %2309 = vrot.lane.b32.xlu0 %v1947, 1
        %v2310 = vpop.permute.xlu0 %2309
        %2311 = vrot.lane.b32.xlu0 %v1948, 1
        %v2312 = vpop.permute.xlu0 %2311
        %2313 = vrot.lane.b32.xlu0 %v1949, 1
        %v2314 = vpop.permute.xlu0 %2313
        %2315 = vrot.lane.b32.xlu0 %v1950, 1
        %v2316 = vpop.permute.xlu0 %2315
        %2317 = vrot.lane.b32.xlu0 %v1951, 1
        %v2318 = vpop.permute.xlu0 %2317
        %2319 = vrot.lane.b32.xlu0 %v1952, 1
        %v2320 = vpop.permute.xlu0 %2319
        %2321 = vrot.lane.b32.xlu0 %v1953, 1
        %v2322 = vpop.permute.xlu0 %2321
        %v2323 = vsel %vm973, %v2308, %v2310
        %v2324 = vsel %vm973, %v2310, %v2312
        %v2325 = vsel %vm973, %v2312, %v2314
        %v2326 = vsel %vm973, %v2316, %v2318
        %v2327 = vsel %vm973, %v2318, %v2320
        %v2328 = vsel %vm973, %v2320, %v2322
        %v2336 = vsel %vm1940, %v2306, 0
        %2338 = vmatprep.subr.bf16.mxu0 %v2324
        %2339 = vmatpush1.bf16.msra.mxu0 %v2323
        %2340 = vmatprep.subr.bf16.mxu0 %v2327
        %2341 = vmatpush1.bf16.msra.mxu0 %v2326
        %2342 = vmatprep.subr.bf16.mxu0 0
        %2343 = vmatpush1.bf16.msra.mxu0 0
        %2344 = vmatprep.subr.bf16.mxu0 0
        %2345 = vmatpush1.bf16.msra.mxu0 0
        %2346 = vmatprep.subr.bf16.mxu0 0
        %2347 = vmatpush1.bf16.msra.mxu0 0
        %2348 = vmatprep.subr.bf16.mxu0 0
        %2349 = vmatpush1.bf16.msra.mxu0 0
        %2350 = vmatprep.subr.bf16.mxu0 0
        %2351 = vmatpush1.bf16.msra.mxu0 0
        %2352 = vmatprep.subr.bf16.mxu0 0
        %2353 = vmatpush1.bf16.msra.mxu0 0
        %2354 = vmatprep.subr.bf16.mxu0 0
        %2355 = vmatpush1.bf16.msra.mxu0 0
        %2356 = vmatprep.subr.bf16.mxu0 0
        %2357 = vmatpush1.bf16.msra.mxu0 0
        %2358 = vmatprep.subr.bf16.mxu0 0
        %2359 = vmatpush1.bf16.msra.mxu0 0
        %2360 = vmatprep.subr.bf16.mxu0 0
        %2361 = vmatpush1.bf16.msra.mxu0 0
        %2362 = vmatprep.subr.bf16.mxu0 0
        %2363 = vmatpush1.bf16.msra.mxu0 0
        %2364 = vmatprep.subr.bf16.mxu0 0
        %2365 = vmatpush1.bf16.msra.mxu0 0
        %2366 = vmatprep.subr.bf16.mxu0 0
        %2367 = vmatpush1.bf16.msra.mxu0 0
        %2368 = vmatprep.subr.bf16.mxu0 0
        %2369 = vmatpush1.bf16.msra.mxu0 0
        %2370 = vmatprep.mubr.bf16.mxu0 0
        %2371 = vmatmul.mubr.bf16.gmra.mrb[0].mxu0 %v2336
        %v2372 = vpop.f32.mrb[0].mxu0
        %v2373 = vadd.f32 0.0, %v2372
        %v2374 = vpop.f32.mrb[0].mxu0
        %v2375 = vadd.f32 0.0, %v2374
        %v2376 = vpop.f32.mrb[0].mxu0
        %v2377 = vpop.f32.mrb[0].mxu0
        %2378 = vdwg.mxu0
        %2379 = vmatprep.subr.bf16.mxu0 0
        %2380 = vmatpush1.bf16.msra.mxu0 %v2325
        %2381 = vmatprep.subr.bf16.mxu0 0
        %2382 = vmatpush1.bf16.msra.mxu0 %v2328
        %2383 = vmatprep.subr.bf16.mxu0 0
        %2384 = vmatpush1.bf16.msra.mxu0 0
        %2385 = vmatprep.subr.bf16.mxu0 0
        %2386 = vmatpush1.bf16.msra.mxu0 0
        %2387 = vmatprep.subr.bf16.mxu0 0
        %2388 = vmatpush1.bf16.msra.mxu0 0
        %2389 = vmatprep.subr.bf16.mxu0 0
        %2390 = vmatpush1.bf16.msra.mxu0 0
        %2391 = vmatprep.subr.bf16.mxu0 0
        %2392 = vmatpush1.bf16.msra.mxu0 0
        %2393 = vmatprep.subr.bf16.mxu0 0
        %2394 = vmatpush1.bf16.msra.mxu0 0
        %2395 = vmatprep.subr.bf16.mxu0 0
        %2396 = vmatpush1.bf16.msra.mxu0 0
        %2397 = vmatprep.subr.bf16.mxu0 0
        %2398 = vmatpush1.bf16.msra.mxu0 0
        %2399 = vmatprep.subr.bf16.mxu0 0
        %2400 = vmatpush1.bf16.msra.mxu0 0
        %2401 = vmatprep.subr.bf16.mxu0 0
        %2402 = vmatpush1.bf16.msra.mxu0 0
        %2403 = vmatprep.subr.bf16.mxu0 0
        %2404 = vmatpush1.bf16.msra.mxu0 0
        %2405 = vmatprep.subr.bf16.mxu0 0
        %2406 = vmatpush1.bf16.msra.mxu0 0
        %2407 = vmatprep.subr.bf16.mxu0 0
        %2408 = vmatpush1.bf16.msra.mxu0 0
        %2409 = vmatprep.subr.bf16.mxu0 0
        %2410 = vmatpush1.bf16.msra.mxu0 0
        %2411 = vmatprep.mubr.bf16.mxu0 0
        %2412 = vmatmul.mubr.bf16.gmra.mrb[0].mxu0 %v2336
        %v2413 = vpop.f32.mrb[0].mxu0
        %v2414 = vadd.f32 0.0, %v2413
        %v2415 = vpop.f32.mrb[0].mxu0
        %v2416 = vpop.f32.mrb[0].mxu0
        %v2417 = vpop.f32.mrb[0].mxu0
        %2418 = vdwg.mxu0
        %v2419 = vadd.f32 %v2302, %v2373
        %v2420 = vadd.f32 %v2303, %v2375
        %v2421 = vadd.f32 %v2304, %v2414
        %s2422 = scalar_lea.vmem %s4, 8
        %v2423 = vld [vmem:[%s2422] sm:$0x3]
        %v2425 = vsel %vm1940, %v2423, 0
        %2427 = vmatprep.subr.bf16.mxu0 %v1948
        %2428 = vmatpush1.bf16.msra.mxu0 %v1947
        %2429 = vmatprep.subr.bf16.mxu0 %v1952
        %2430 = vmatpush1.bf16.msra.mxu0 %v1951
        %2431 = vmatprep.subr.bf16.mxu0 0
        %2432 = vmatpush1.bf16.msra.mxu0 0
        %2433 = vmatprep.subr.bf16.mxu0 0
        %2434 = vmatpush1.bf16.msra.mxu0 0
        %2435 = vmatprep.subr.bf16.mxu0 0
        %2436 = vmatpush1.bf16.msra.mxu0 0
        %2437 = vmatprep.subr.bf16.mxu0 0
        %2438 = vmatpush1.bf16.msra.mxu0 0
        %2439 = vmatprep.subr.bf16.mxu0 0
        %2440 = vmatpush1.bf16.msra.mxu0 0
        %2441 = vmatprep.subr.bf16.mxu0 0
        %2442 = vmatpush1.bf16.msra.mxu0 0
        %2443 = vmatprep.subr.bf16.mxu0 0
        %2444 = vmatpush1.bf16.msra.mxu0 0
        %2445 = vmatprep.subr.bf16.mxu0 0
        %2446 = vmatpush1.bf16.msra.mxu0 0
        %2447 = vmatprep.subr.bf16.mxu0 0
        %2448 = vmatpush1.bf16.msra.mxu0 0
        %2449 = vmatprep.subr.bf16.mxu0 0
        %2450 = vmatpush1.bf16.msra.mxu0 0
        %2451 = vmatprep.subr.bf16.mxu0 0
        %2452 = vmatpush1.bf16.msra.mxu0 0
        %2453 = vmatprep.subr.bf16.mxu0 0
        %2454 = vmatpush1.bf16.msra.mxu0 0
        %2455 = vmatprep.subr.bf16.mxu0 0
        %2456 = vmatpush1.bf16.msra.mxu0 0
        %2457 = vmatprep.subr.bf16.mxu0 0
        %2458 = vmatpush1.bf16.msra.mxu0 0
        %2459 = vmatprep.mubr.bf16.mxu0 0
        %2460 = vmatmul.mubr.bf16.gmra.mrb[0].mxu0 %v2425
        %v2461 = vpop.f32.mrb[0].mxu0
        %v2462 = vadd.f32 0.0, %v2461
        %v2463 = vpop.f32.mrb[0].mxu0
        %v2464 = vadd.f32 0.0, %v2463
        %v2465 = vpop.f32.mrb[0].mxu0
        %v2466 = vpop.f32.mrb[0].mxu0
        %2467 = vdwg.mxu0
        %2468 = vmatprep.subr.bf16.mxu0 0
        %2469 = vmatpush1.bf16.msra.mxu0 %v1949
        %2470 = vmatprep.subr.bf16.mxu0 0
        %2471 = vmatpush1.bf16.msra.mxu0 %v1953
        %2472 = vmatprep.subr.bf16.mxu0 0
        %2473 = vmatpush1.bf16.msra.mxu0 0
        %2474 = vmatprep.subr.bf16.mxu0 0
        %2475 = vmatpush1.bf16.msra.mxu0 0
        %2476 = vmatprep.subr.bf16.mxu0 0
        %2477 = vmatpush1.bf16.msra.mxu0 0
        %2478 = vmatprep.subr.bf16.mxu0 0
        %2479 = vmatpush1.bf16.msra.mxu0 0
        %2480 = vmatprep.subr.bf16.mxu0 0
        %2481 = vmatpush1.bf16.msra.mxu0 0
        %2482 = vmatprep.subr.bf16.mxu0 0
        %2483 = vmatpush1.bf16.msra.mxu0 0
        %2484 = vmatprep.subr.bf16.mxu0 0
        %2485 = vmatpush1.bf16.msra.mxu0 0
        %2486 = vmatprep.subr.bf16.mxu0 0
        %2487 = vmatpush1.bf16.msra.mxu0 0
        %2488 = vmatprep.subr.bf16.mxu0 0
        %2489 = vmatpush1.bf16.msra.mxu0 0
        %2490 = vmatprep.subr.bf16.mxu0 0
        %2491 = vmatpush1.bf16.msra.mxu0 0
        %2492 = vmatprep.subr.bf16.mxu0 0
        %2493 = vmatpush1.bf16.msra.mxu0 0
        %2494 = vmatprep.subr.bf16.mxu0 0
        %2495 = vmatpush1.bf16.msra.mxu0 0
        %2496 = vmatprep.subr.bf16.mxu0 0
        %2497 = vmatpush1.bf16.msra.mxu0 0
        %2498 = vmatprep.subr.bf16.mxu0 0
        %2499 = vmatpush1.bf16.msra.mxu0 0
        %2500 = vmatprep.mubr.bf16.mxu0 0
        %2501 = vmatmul.mubr.bf16.gmra.mrb[0].mxu0 %v2425
        %v2502 = vpop.f32.mrb[0].mxu0
        %v2503 = vadd.f32 0.0, %v2502
        %v2504 = vpop.f32.mrb[0].mxu0
        %v2505 = vpop.f32.mrb[0].mxu0
        %v2506 = vpop.f32.mrb[0].mxu0
        %2507 = vdwg.mxu0
        %v2508 = vadd.f32 %v2419, %v2462
        %v2509 = vadd.f32 %v2420, %v2464
        %v2510 = vadd.f32 %v2421, %v2503
        %s2511 = scalar_lea.vmem %s4, 10
        %v2512 = vld [vmem:[%s2511] sm:$0x3]
        %2513 = vrot.lane.b32.xlu0 %v1947, 127
        %v2514 = vpop.permute.xlu0 %2513
        %2515 = vrot.lane.b32.xlu0 %v1948, 127
        %v2516 = vpop.permute.xlu0 %2515
        %2517 = vrot.lane.b32.xlu0 %v1949, 127
        %v2518 = vpop.permute.xlu0 %2517
        %2519 = vrot.lane.b32.xlu0 %v1951, 127
        %v2520 = vpop.permute.xlu0 %2519
        %2521 = vrot.lane.b32.xlu0 %v1952, 127
        %v2522 = vpop.permute.xlu0 %2521
        %2523 = vrot.lane.b32.xlu0 %v1953, 127
        %v2524 = vpop.permute.xlu0 %2523
        %v2525 = vsel %vm1281, %v2514, %v2516
        %v2526 = vsel %vm1281, %v2516, %v2518
        %v2527 = vsel %vm1281, %v2520, %v2522
        %v2528 = vsel %vm1281, %v2522, %v2524
        %v2536 = vsel %vm1940, %v2512, 0
        %2538 = vmatprep.subr.bf16.mxu0 %v2526
        %2539 = vmatpush1.bf16.msra.mxu0 %v2525
        %2540 = vmatprep.subr.bf16.mxu0 %v2528
        %2541 = vmatpush1.bf16.msra.mxu0 %v2527
        %2542 = vmatprep.subr.bf16.mxu0 0
        %2543 = vmatpush1.bf16.msra.mxu0 0
        %2544 = vmatprep.subr.bf16.mxu0 0
        %2545 = vmatpush1.bf16.msra.mxu0 0
        %2546 = vmatprep.subr.bf16.mxu0 0
        %2547 = vmatpush1.bf16.msra.mxu0 0
        %2548 = vmatprep.subr.bf16.mxu0 0
        %2549 = vmatpush1.bf16.msra.mxu0 0
        %2550 = vmatprep.subr.bf16.mxu0 0
        %2551 = vmatpush1.bf16.msra.mxu0 0
        %2552 = vmatprep.subr.bf16.mxu0 0
        %2553 = vmatpush1.bf16.msra.mxu0 0
        %2554 = vmatprep.subr.bf16.mxu0 0
        %2555 = vmatpush1.bf16.msra.mxu0 0
        %2556 = vmatprep.subr.bf16.mxu0 0
        %2557 = vmatpush1.bf16.msra.mxu0 0
        %2558 = vmatprep.subr.bf16.mxu0 0
        %2559 = vmatpush1.bf16.msra.mxu0 0
        %2560 = vmatprep.subr.bf16.mxu0 0
        %2561 = vmatpush1.bf16.msra.mxu0 0
        %2562 = vmatprep.subr.bf16.mxu0 0
        %2563 = vmatpush1.bf16.msra.mxu0 0
        %2564 = vmatprep.subr.bf16.mxu0 0
        %2565 = vmatpush1.bf16.msra.mxu0 0
        %2566 = vmatprep.subr.bf16.mxu0 0
        %2567 = vmatpush1.bf16.msra.mxu0 0
        %2568 = vmatprep.subr.bf16.mxu0 0
        %2569 = vmatpush1.bf16.msra.mxu0 0
        %2570 = vmatprep.mubr.bf16.mxu0 0
        %2571 = vmatmul.mubr.bf16.gmra.mrb[0].mxu0 %v2536
        %v2572 = vpop.f32.mrb[0].mxu0
        %v2573 = vadd.f32 0.0, %v2572
        %v2574 = vpop.f32.mrb[0].mxu0
        %v2575 = vadd.f32 0.0, %v2574
        %v2576 = vpop.f32.mrb[0].mxu0
        %v2577 = vpop.f32.mrb[0].mxu0
        %2578 = vdwg.mxu0
        %2579 = vmatprep.subr.bf16.mxu0 0
        %2580 = vmatpush1.bf16.msra.mxu0 %v2518
        %2581 = vmatprep.subr.bf16.mxu0 0
        %2582 = vmatpush1.bf16.msra.mxu0 %v2524
        %2583 = vmatprep.subr.bf16.mxu0 0
        %2584 = vmatpush1.bf16.msra.mxu0 0
        %2585 = vmatprep.subr.bf16.mxu0 0
        %2586 = vmatpush1.bf16.msra.mxu0 0
        %2587 = vmatprep.subr.bf16.mxu0 0
        %2588 = vmatpush1.bf16.msra.mxu0 0
        %2589 = vmatprep.subr.bf16.mxu0 0
        %2590 = vmatpush1.bf16.msra.mxu0 0
        %2591 = vmatprep.subr.bf16.mxu0 0
        %2592 = vmatpush1.bf16.msra.mxu0 0
        %2593 = vmatprep.subr.bf16.mxu0 0
        %2594 = vmatpush1.bf16.msra.mxu0 0
        %2595 = vmatprep.subr.bf16.mxu0 0
        %2596 = vmatpush1.bf16.msra.mxu0 0
        %2597 = vmatprep.subr.bf16.mxu0 0
        %2598 = vmatpush1.bf16.msra.mxu0 0
        %2599 = vmatprep.subr.bf16.mxu0 0
        %2600 = vmatpush1.bf16.msra.mxu0 0
        %2601 = vmatprep.subr.bf16.mxu0 0
        %2602 = vmatpush1.bf16.msra.mxu0 0
        %2603 = vmatprep.subr.bf16.mxu0 0
        %2604 = vmatpush1.bf16.msra.mxu0 0
        %2605 = vmatprep.subr.bf16.mxu0 0
        %2606 = vmatpush1.bf16.msra.mxu0 0
        %2607 = vmatprep.subr.bf16.mxu0 0
        %2608 = vmatpush1.bf16.msra.mxu0 0
        %2609 = vmatprep.subr.bf16.mxu0 0
        %2610 = vmatpush1.bf16.msra.mxu0 0
        %2611 = vmatprep.mubr.bf16.mxu0 0
        %2612 = vmatmul.mubr.bf16.gmra.mrb[0].mxu0 %v2536
        %v2613 = vpop.f32.mrb[0].mxu0
        %v2614 = vadd.f32 0.0, %v2613
        %v2615 = vpop.f32.mrb[0].mxu0
        %v2616 = vpop.f32.mrb[0].mxu0
        %v2617 = vpop.f32.mrb[0].mxu0
        %2618 = vdwg.mxu0
        %v2619 = vadd.f32 %v2508, %v2573
        %v2620 = vadd.f32 %v2509, %v2575
        %v2621 = vadd.f32 %v2510, %v2614
        %s2622 = scalar_lea.vmem %s4, 12
        %v2623 = vld [vmem:[%s2622] sm:$0x3]
        %2624 = vrot.lane.b32.xlu0 %v1947, 111
        %v2625 = vpop.permute.xlu0 %2624
        %2626 = vrot.lane.b32.xlu0 %v1948, 111
        %v2627 = vpop.permute.xlu0 %2626
        %2628 = vrot.lane.b32.xlu0 %v1949, 111
        %v2629 = vpop.permute.xlu0 %2628
        %2630 = vrot.lane.b32.xlu0 %v1951, 111
        %v2631 = vpop.permute.xlu0 %2630
        %2632 = vrot.lane.b32.xlu0 %v1952, 111
        %v2633 = vpop.permute.xlu0 %2632
        %2634 = vrot.lane.b32.xlu0 %v1953, 111
        %v2635 = vpop.permute.xlu0 %2634
        %v2636 = vsel %vm1434, %v2625, %v2627
        %v2637 = vsel %vm1434, %v2627, %v2629
        %v2638 = vsel %vm1434, %v2631, %v2633
        %v2639 = vsel %vm1434, %v2633, %v2635
        %v2647 = vsel %vm1940, %v2623, 0
        %2649 = vmatprep.subr.bf16.mxu0 %v2637
        %2650 = vmatpush1.bf16.msra.mxu0 %v2636
        %2651 = vmatprep.subr.bf16.mxu0 %v2639
        %2652 = vmatpush1.bf16.msra.mxu0 %v2638
        %2653 = vmatprep.subr.bf16.mxu0 0
        %2654 = vmatpush1.bf16.msra.mxu0 0
        %2655 = vmatprep.subr.bf16.mxu0 0
        %2656 = vmatpush1.bf16.msra.mxu0 0
        %2657 = vmatprep.subr.bf16.mxu0 0
        %2658 = vmatpush1.bf16.msra.mxu0 0
        %2659 = vmatprep.subr.bf16.mxu0 0
        %2660 = vmatpush1.bf16.msra.mxu0 0
        %2661 = vmatprep.subr.bf16.mxu0 0
        %2662 = vmatpush1.bf16.msra.mxu0 0
        %2663 = vmatprep.subr.bf16.mxu0 0
        %2664 = vmatpush1.bf16.msra.mxu0 0
        %2665 = vmatprep.subr.bf16.mxu0 0
        %2666 = vmatpush1.bf16.msra.mxu0 0
        %2667 = vmatprep.subr.bf16.mxu0 0
        %2668 = vmatpush1.bf16.msra.mxu0 0
        %2669 = vmatprep.subr.bf16.mxu0 0
        %2670 = vmatpush1.bf16.msra.mxu0 0
        %2671 = vmatprep.subr.bf16.mxu0 0
        %2672 = vmatpush1.bf16.msra.mxu0 0
        %2673 = vmatprep.subr.bf16.mxu0 0
        %2674 = vmatpush1.bf16.msra.mxu0 0
        %2675 = vmatprep.subr.bf16.mxu0 0
        %2676 = vmatpush1.bf16.msra.mxu0 0
        %2677 = vmatprep.subr.bf16.mxu0 0
        %2678 = vmatpush1.bf16.msra.mxu0 0
        %2679 = vmatprep.subr.bf16.mxu0 0
        %2680 = vmatpush1.bf16.msra.mxu0 0
        %2681 = vmatprep.mubr.bf16.mxu0 0
        %2682 = vmatmul.mubr.bf16.gmra.mrb[0].mxu0 %v2647
        %v2683 = vpop.f32.mrb[0].mxu0
        %v2684 = vadd.f32 0.0, %v2683
        %v2685 = vpop.f32.mrb[0].mxu0
        %v2686 = vadd.f32 0.0, %v2685
        %v2687 = vpop.f32.mrb[0].mxu0
        %v2688 = vpop.f32.mrb[0].mxu0
        %2689 = vdwg.mxu0
        %2690 = vmatprep.subr.bf16.mxu0 0
        %2691 = vmatpush1.bf16.msra.mxu0 %v2629
        %2692 = vmatprep.subr.bf16.mxu0 0
        %2693 = vmatpush1.bf16.msra.mxu0 %v2635
        %2694 = vmatprep.subr.bf16.mxu0 0
        %2695 = vmatpush1.bf16.msra.mxu0 0
        %2696 = vmatprep.subr.bf16.mxu0 0
        %2697 = vmatpush1.bf16.msra.mxu0 0
        %2698 = vmatprep.subr.bf16.mxu0 0
        %2699 = vmatpush1.bf16.msra.mxu0 0
        %2700 = vmatprep.subr.bf16.mxu0 0
        %2701 = vmatpush1.bf16.msra.mxu0 0
        %2702 = vmatprep.subr.bf16.mxu0 0
        %2703 = vmatpush1.bf16.msra.mxu0 0
        %2704 = vmatprep.subr.bf16.mxu0 0
        %2705 = vmatpush1.bf16.msra.mxu0 0
        %2706 = vmatprep.subr.bf16.mxu0 0
        %2707 = vmatpush1.bf16.msra.mxu0 0
        %2708 = vmatprep.subr.bf16.mxu0 0
        %2709 = vmatpush1.bf16.msra.mxu0 0
        %2710 = vmatprep.subr.bf16.mxu0 0
        %2711 = vmatpush1.bf16.msra.mxu0 0
        %2712 = vmatprep.subr.bf16.mxu0 0
        %2713 = vmatpush1.bf16.msra.mxu0 0
        %2714 = vmatprep.subr.bf16.mxu0 0
        %2715 = vmatpush1.bf16.msra.mxu0 0
        %2716 = vmatprep.subr.bf16.mxu0 0
        %2717 = vmatpush1.bf16.msra.mxu0 0
        %2718 = vmatprep.subr.bf16.mxu0 0
        %2719 = vmatpush1.bf16.msra.mxu0 0
        %2720 = vmatprep.subr.bf16.mxu0 0
        %2721 = vmatpush1.bf16.msra.mxu0 0
        %2722 = vmatprep.mubr.bf16.mxu0 0
        %2723 = vmatmul.mubr.bf16.gmra.mrb[0].mxu0 %v2647
        %v2724 = vpop.f32.mrb[0].mxu0
        %v2725 = vadd.f32 0.0, %v2724
        %v2726 = vpop.f32.mrb[0].mxu0
        %v2727 = vpop.f32.mrb[0].mxu0
        %v2728 = vpop.f32.mrb[0].mxu0
        %2729 = vdwg.mxu0
        %v2730 = vadd.f32 %v2619, %v2684
        %v2731 = vadd.f32 %v2620, %v2686
        %v2732 = vadd.f32 %v2621, %v2725
        %s2733 = scalar_lea.vmem %s4, 14
        %v2734 = vld [vmem:[%s2733] sm:$0x3]
        %2735 = vrot.lane.b32.xlu0 %v1947, 110
        %v2736 = vpop.permute.xlu0 %2735
        %2737 = vrot.lane.b32.xlu0 %v1948, 110
        %v2738 = vpop.permute.xlu0 %2737
        %2739 = vrot.lane.b32.xlu0 %v1949, 110
        %v2740 = vpop.permute.xlu0 %2739
        %2741 = vrot.lane.b32.xlu0 %v1951, 110
        %v2742 = vpop.permute.xlu0 %2741
        %2743 = vrot.lane.b32.xlu0 %v1952, 110
        %v2744 = vpop.permute.xlu0 %2743
        %2745 = vrot.lane.b32.xlu0 %v1953, 110
        %v2746 = vpop.permute.xlu0 %2745
        %v2747 = vsel %vm1587, %v2736, %v2738
        %v2748 = vsel %vm1587, %v2738, %v2740
        %v2749 = vsel %vm1587, %v2742, %v2744
        %v2750 = vsel %vm1587, %v2744, %v2746
        %v2758 = vsel %vm1940, %v2734, 0
        %2760 = vmatprep.subr.bf16.mxu0 %v2748
        %2761 = vmatpush1.bf16.msra.mxu0 %v2747
        %2762 = vmatprep.subr.bf16.mxu0 %v2750
        %2763 = vmatpush1.bf16.msra.mxu0 %v2749
        %2764 = vmatprep.subr.bf16.mxu0 0
        %2765 = vmatpush1.bf16.msra.mxu0 0
        %2766 = vmatprep.subr.bf16.mxu0 0
        %2767 = vmatpush1.bf16.msra.mxu0 0
        %2768 = vmatprep.subr.bf16.mxu0 0
        %2769 = vmatpush1.bf16.msra.mxu0 0
        %2770 = vmatprep.subr.bf16.mxu0 0
        %2771 = vmatpush1.bf16.msra.mxu0 0
        %2772 = vmatprep.subr.bf16.mxu0 0
        %2773 = vmatpush1.bf16.msra.mxu0 0
        %2774 = vmatprep.subr.bf16.mxu0 0
        %2775 = vmatpush1.bf16.msra.mxu0 0
        %2776 = vmatprep.subr.bf16.mxu0 0
        %2777 = vmatpush1.bf16.msra.mxu0 0
        %2778 = vmatprep.subr.bf16.mxu0 0
        %2779 = vmatpush1.bf16.msra.mxu0 0
        %2780 = vmatprep.subr.bf16.mxu0 0
        %2781 = vmatpush1.bf16.msra.mxu0 0
        %2782 = vmatprep.subr.bf16.mxu0 0
        %2783 = vmatpush1.bf16.msra.mxu0 0
        %2784 = vmatprep.subr.bf16.mxu0 0
        %2785 = vmatpush1.bf16.msra.mxu0 0
        %2786 = vmatprep.subr.bf16.mxu0 0
        %2787 = vmatpush1.bf16.msra.mxu0 0
        %2788 = vmatprep.subr.bf16.mxu0 0
        %2789 = vmatpush1.bf16.msra.mxu0 0
        %2790 = vmatprep.subr.bf16.mxu0 0
        %2791 = vmatpush1.bf16.msra.mxu0 0
        %2792 = vmatprep.mubr.bf16.mxu0 0
        %2793 = vmatmul.mubr.bf16.gmra.mrb[0].mxu0 %v2758
        %v2794 = vpop.f32.mrb[0].mxu0
        %v2795 = vadd.f32 0.0, %v2794
        %v2796 = vpop.f32.mrb[0].mxu0
        %v2797 = vadd.f32 0.0, %v2796
        %v2798 = vpop.f32.mrb[0].mxu0
        %v2799 = vpop.f32.mrb[0].mxu0
        %2800 = vdwg.mxu0
        %2801 = vmatprep.subr.bf16.mxu0 0
        %2802 = vmatpush1.bf16.msra.mxu0 %v2740
        %2803 = vmatprep.subr.bf16.mxu0 0
        %2804 = vmatpush1.bf16.msra.mxu0 %v2746
        %2805 = vmatprep.subr.bf16.mxu0 0
        %2806 = vmatpush1.bf16.msra.mxu0 0
        %2807 = vmatprep.subr.bf16.mxu0 0
        %2808 = vmatpush1.bf16.msra.mxu0 0
        %2809 = vmatprep.subr.bf16.mxu0 0
        %2810 = vmatpush1.bf16.msra.mxu0 0
        %2811 = vmatprep.subr.bf16.mxu0 0
        %2812 = vmatpush1.bf16.msra.mxu0 0
        %2813 = vmatprep.subr.bf16.mxu0 0
        %2814 = vmatpush1.bf16.msra.mxu0 0
        %2815 = vmatprep.subr.bf16.mxu0 0
        %2816 = vmatpush1.bf16.msra.mxu0 0
        %2817 = vmatprep.subr.bf16.mxu0 0
        %2818 = vmatpush1.bf16.msra.mxu0 0
        %2819 = vmatprep.subr.bf16.mxu0 0
        %2820 = vmatpush1.bf16.msra.mxu0 0
        %2821 = vmatprep.subr.bf16.mxu0 0
        %2822 = vmatpush1.bf16.msra.mxu0 0
        %2823 = vmatprep.subr.bf16.mxu0 0
        %2824 = vmatpush1.bf16.msra.mxu0 0
        %2825 = vmatprep.subr.bf16.mxu0 0
        %2826 = vmatpush1.bf16.msra.mxu0 0
        %2827 = vmatprep.subr.bf16.mxu0 0
        %2828 = vmatpush1.bf16.msra.mxu0 0
        %2829 = vmatprep.subr.bf16.mxu0 0
        %2830 = vmatpush1.bf16.msra.mxu0 0
        %2831 = vmatprep.subr.bf16.mxu0 0
        %2832 = vmatpush1.bf16.msra.mxu0 0
        %2833 = vmatprep.mubr.bf16.mxu0 0
        %2834 = vmatmul.mubr.bf16.gmra.mrb[0].mxu0 %v2758
        %v2835 = vpop.f32.mrb[0].mxu0
        %v2836 = vadd.f32 0.0, %v2835
        %v2837 = vpop.f32.mrb[0].mxu0
        %v2838 = vpop.f32.mrb[0].mxu0
        %v2839 = vpop.f32.mrb[0].mxu0
        %2840 = vdwg.mxu0
        %v2841 = vadd.f32 %v2730, %v2795
        %v2842 = vadd.f32 %v2731, %v2797
        %v2843 = vadd.f32 %v2732, %v2836
        %s2844 = scalar_lea.vmem %s4, 16
        %v2845 = vld [vmem:[%s2844] sm:$0x3]
        %2846 = vrot.lane.b32.xlu0 %v1947, 109
        %v2847 = vpop.permute.xlu0 %2846
        %2848 = vrot.lane.b32.xlu0 %v1948, 109
        %v2849 = vpop.permute.xlu0 %2848
        %2850 = vrot.lane.b32.xlu0 %v1949, 109
        %v2851 = vpop.permute.xlu0 %2850
        %2852 = vrot.lane.b32.xlu0 %v1951, 109
        %v2853 = vpop.permute.xlu0 %2852
        %2854 = vrot.lane.b32.xlu0 %v1952, 109
        %v2855 = vpop.permute.xlu0 %2854
        %2856 = vrot.lane.b32.xlu0 %v1953, 109
        %v2857 = vpop.permute.xlu0 %2856
        %v2858 = vsel %vm1740, %v2847, %v2849
        %v2859 = vsel %vm1740, %v2849, %v2851
        %v2860 = vsel %vm1740, %v2853, %v2855
        %v2861 = vsel %vm1740, %v2855, %v2857
        %v2869 = vsel %vm1940, %v2845, 0
        %2871 = vmatprep.subr.bf16.mxu0 %v2859
        %2872 = vmatpush1.bf16.msra.mxu0 %v2858
        %2873 = vmatprep.subr.bf16.mxu0 %v2861
        %2874 = vmatpush1.bf16.msra.mxu0 %v2860
        %2875 = vmatprep.subr.bf16.mxu0 0
        %2876 = vmatpush1.bf16.msra.mxu0 0
        %2877 = vmatprep.subr.bf16.mxu0 0
        %2878 = vmatpush1.bf16.msra.mxu0 0
        %2879 = vmatprep.subr.bf16.mxu0 0
        %2880 = vmatpush1.bf16.msra.mxu0 0
        %2881 = vmatprep.subr.bf16.mxu0 0
        %2882 = vmatpush1.bf16.msra.mxu0 0
        %2883 = vmatprep.subr.bf16.mxu0 0
        %2884 = vmatpush1.bf16.msra.mxu0 0
        %2885 = vmatprep.subr.bf16.mxu0 0
        %2886 = vmatpush1.bf16.msra.mxu0 0
        %2887 = vmatprep.subr.bf16.mxu0 0
        %2888 = vmatpush1.bf16.msra.mxu0 0
        %2889 = vmatprep.subr.bf16.mxu0 0
        %2890 = vmatpush1.bf16.msra.mxu0 0
        %2891 = vmatprep.subr.bf16.mxu0 0
        %2892 = vmatpush1.bf16.msra.mxu0 0
        %2893 = vmatprep.subr.bf16.mxu0 0
        %2894 = vmatpush1.bf16.msra.mxu0 0
        %2895 = vmatprep.subr.bf16.mxu0 0
        %2896 = vmatpush1.bf16.msra.mxu0 0
        %2897 = vmatprep.subr.bf16.mxu0 0
        %2898 = vmatpush1.bf16.msra.mxu0 0
        %2899 = vmatprep.subr.bf16.mxu0 0
        %2900 = vmatpush1.bf16.msra.mxu0 0
        %2901 = vmatprep.subr.bf16.mxu0 0
        %2902 = vmatpush1.bf16.msra.mxu0 0
        %2903 = vmatprep.mubr.bf16.mxu0 0
        %2904 = vmatmul.mubr.bf16.gmra.mrb[0].mxu0 %v2869
        %v2905 = vpop.f32.mrb[0].mxu0
        %v2906 = vadd.f32 0.0, %v2905
        %v2907 = vpop.f32.mrb[0].mxu0
        %v2908 = vadd.f32 0.0, %v2907
        %v2909 = vpop.f32.mrb[0].mxu0
        %v2910 = vpop.f32.mrb[0].mxu0
        %2911 = vdwg.mxu0
        %2912 = vmatprep.subr.bf16.mxu0 0
        %2913 = vmatpush1.bf16.msra.mxu0 %v2851
        %2914 = vmatprep.subr.bf16.mxu0 0
        %2915 = vmatpush1.bf16.msra.mxu0 %v2857
        %2916 = vmatprep.subr.bf16.mxu0 0
        %2917 = vmatpush1.bf16.msra.mxu0 0
        %2918 = vmatprep.subr.bf16.mxu0 0
        %2919 = vmatpush1.bf16.msra.mxu0 0
        %2920 = vmatprep.subr.bf16.mxu0 0
        %2921 = vmatpush1.bf16.msra.mxu0 0
        %2922 = vmatprep.subr.bf16.mxu0 0
        %2923 = vmatpush1.bf16.msra.mxu0 0
        %2924 = vmatprep.subr.bf16.mxu0 0
        %2925 = vmatpush1.bf16.msra.mxu0 0
        %2926 = vmatprep.subr.bf16.mxu0 0
        %2927 = vmatpush1.bf16.msra.mxu0 0
        %2928 = vmatprep.subr.bf16.mxu0 0
        %2929 = vmatpush1.bf16.msra.mxu0 0
        %2930 = vmatprep.subr.bf16.mxu0 0
        %2931 = vmatpush1.bf16.msra.mxu0 0
        %2932 = vmatprep.subr.bf16.mxu0 0
        %2933 = vmatpush1.bf16.msra.mxu0 0
        %2934 = vmatprep.subr.bf16.mxu0 0
        %2935 = vmatpush1.bf16.msra.mxu0 0
        %2936 = vmatprep.subr.bf16.mxu0 0
        %2937 = vmatpush1.bf16.msra.mxu0 0
        %2938 = vmatprep.subr.bf16.mxu0 0
        %2939 = vmatpush1.bf16.msra.mxu0 0
        %2940 = vmatprep.subr.bf16.mxu0 0
        %2941 = vmatpush1.bf16.msra.mxu0 0
        %2942 = vmatprep.subr.bf16.mxu0 0
        %2943 = vmatpush1.bf16.msra.mxu0 0
        %2944 = vmatprep.mubr.bf16.mxu0 0
        %2945 = vmatmul.mubr.bf16.gmra.mrb[0].mxu0 %v2869
        %v2946 = vpop.f32.mrb[0].mxu0
        %v2947 = vadd.f32 0.0, %v2946
        %v2948 = vpop.f32.mrb[0].mxu0
        %v2949 = vpop.f32.mrb[0].mxu0
        %v2950 = vpop.f32.mrb[0].mxu0
        %2951 = vdwg.mxu0
        %v2952 = vadd.f32 %v2841, %v2906
        %v2953 = vadd.f32 %v2842, %v2908
        %v2954 = vadd.f32 %v2843, %v2947
        %v2955 = vld [vmem:[%s5] sm:$0xf]
        %2957 = vset.pattern.permute.xlu0 0
        %2958 = vperm.xlu0 %2957, %v2955
        %v2959 = vpop.permute.xlu0 %2958
        %v2961 = vadd.f32 %v2952, %v2959
        %v2962 = vadd.f32 %v2953, %v2959
        %v2963 = vadd.f32 %v2954, %v2959
        %v2966 = vcombine.low %v2961, %v2962
        %2968 = vst [vmem:[#allocation4] sm:$0xff] %v2966
        %vm2969 = vcmask 257024
        %2970 = vst.msk [vmem:[#allocation4 + $0x8] sm:$0xf] %vm2969, %v2963
        %v2971 = vld [vmem:[%s239] sm:$0xf]
        %v2972 = vld [vmem:[#allocation4] sm:$0xf]
        %v2973 = vsub.f32 %v2971, %v2972
        %vm2974 = vcmask 125952
        %2975 = vst.msk [vmem:[%s244] sm:$0xf] %vm2974, %v2973
        %v2976 = vld [vmem:[%s239] sm:$0xf]
        %v2977 = vld [vmem:[#allocation4] sm:$0xf]
        %2979 = vrot.lane.b32.xlu0 %v2977, 126
        %v2980 = vpop.permute.xlu0 %2979
        %v2982 = vsub.f32 %v2976, %v2980
        %vm2983 = vcmask 257152
        %2984 = vst.msk [vmem:[%s244] sm:$0xf] %vm2983, %v2982
        %v2985 = vld [vmem:[%s239] sm:$0xf]
        %v2986 = vld [vmem:[#allocation4] sm:$0xf]
        %2988 = vrot.lane.b32.xlu0 %v2986, 124
        %v2989 = vpop.permute.xlu0 %2988
        %v2991 = vsub.f32 %v2985, %v2989
        %vm2992 = vcmask 388352
        %2993 = vst.msk [vmem:[%s244] sm:$0xf] %vm2992, %v2991
        %v2994 = vld [vmem:[%s239] sm:$0xf]
        %v2995 = vld [vmem:[#allocation4] sm:$0xf]
        %2997 = vrot.lane.b32.xlu0 %v2995, 122
        %v2998 = vpop.permute.xlu0 %2997
        %v3000 = vsub.f32 %v2994, %v2998
        %vm3001 = vcmask 519552
        %3002 = vst.msk [vmem:[%s244] sm:$0xf] %vm3001, %v3000
        %v3003 = vld [vmem:[%s239] sm:$0xf]
        %v3004 = vld [vmem:[#allocation4] sm:$0xf]
        %3006 = vrot.lane.b32.xlu0 %v3004, 120
        %v3007 = vpop.permute.xlu0 %3006
        %v3009 = vsub.f32 %v3003, %v3007
        %vm3010 = vcmask 650752
        %3011 = vst.msk [vmem:[%s244] sm:$0xf] %vm3010, %v3009
        %v3012 = vld [vmem:[%s239] sm:$0xf]
        %v3013 = vld [vmem:[#allocation4] sm:$0xf]
        %3015 = vrot.lane.b32.xlu0 %v3013, 118
        %v3016 = vpop.permute.xlu0 %3015
        %v3018 = vsub.f32 %v3012, %v3016
        %vm3019 = vcmask 781952
        %3020 = vst.msk [vmem:[%s244] sm:$0xf] %vm3019, %v3018
        %v3021 = vld [vmem:[%s239] sm:$0xf]
        %v3022 = vld [vmem:[#allocation4] sm:$0xf]
        %3024 = vrot.lane.b32.xlu0 %v3022, 116
        %v3025 = vpop.permute.xlu0 %3024
        %v3027 = vsub.f32 %v3021, %v3025
        %vm3028 = vcmask 913152
        %3029 = vst.msk [vmem:[%s244] sm:$0xf] %vm3028, %v3027
        %v3030 = vld [vmem:[%s239] sm:$0xf]
        %v3031 = vld [vmem:[#allocation4] sm:$0xff]
        %3033 = vrot.lane.b32.xlu0 %v3031, 114
        %v3034 = vpop.permute.xlu0 %3033
        %v3035 = vrot.slane %v3034, 4
        %vm3036 = vcmask 932864
        %v3037 = vsel %vm3036, %v3034, %v3035
        %v3039 = vsub.f32 %v3030, %v3037
        %vm3040 = vcmask 1044352
        %3041 = vst.msk [vmem:[%s244] sm:$0xf] %vm3040, %v3039
        %v3042 = vld [vmem:[%s239 + $0x4] sm:$0xf]
        %v3043 = vld [vmem:[#allocation4 + $0x4] sm:$0xf]
        %3045 = vrot.lane.b32.xlu0 %v3043, 112
        %v3046 = vpop.permute.xlu0 %3045
        %v3048 = vsub.f32 %v3042, %v3046
        %3049 = vst.msk [vmem:[%s244 + $0x4] sm:$0xf] %vm2974, %v3048
        %v3050 = vld [vmem:[%s239 + $0x4] sm:$0xf]
        %v3051 = vld [vmem:[#allocation4 + $0x4] sm:$0xf]
        %3053 = vrot.lane.b32.xlu0 %v3051, 110
        %v3054 = vpop.permute.xlu0 %3053
        %v3056 = vsub.f32 %v3050, %v3054
        %3057 = vst.msk [vmem:[%s244 + $0x4] sm:$0xf] %vm2983, %v3056
        %v3058 = vld [vmem:[%s239 + $0x4] sm:$0xf]
        %v3059 = vld [vmem:[#allocation4 + $0x4] sm:$0xf]
        %3061 = vrot.lane.b32.xlu0 %v3059, 108
        %v3062 = vpop.permute.xlu0 %3061
        %v3064 = vsub.f32 %v3058, %v3062
        %3065 = vst.msk [vmem:[%s244 + $0x4] sm:$0xf] %vm2992, %v3064
        %v3066 = vld [vmem:[%s239 + $0x4] sm:$0xf]
        %v3067 = vld [vmem:[#allocation4 + $0x4] sm:$0xf]
        %3069 = vrot.lane.b32.xlu0 %v3067, 106
        %v3070 = vpop.permute.xlu0 %3069
        %v3072 = vsub.f32 %v3066, %v3070
        %3073 = vst.msk [vmem:[%s244 + $0x4] sm:$0xf] %vm3001, %v3072
        %v3074 = vld [vmem:[%s239 + $0x4] sm:$0xf]
        %v3075 = vld [vmem:[#allocation4 + $0x4] sm:$0xf]
        %3077 = vrot.lane.b32.xlu0 %v3075, 104
        %v3078 = vpop.permute.xlu0 %3077
        %v3080 = vsub.f32 %v3074, %v3078
        %3081 = vst.msk [vmem:[%s244 + $0x4] sm:$0xf] %vm3010, %v3080
        %v3082 = vld [vmem:[%s239 + $0x4] sm:$0xf]
        %v3083 = vld [vmem:[#allocation4 + $0x4] sm:$0xf]
        %3085 = vrot.lane.b32.xlu0 %v3083, 102
        %v3086 = vpop.permute.xlu0 %3085
        %v3088 = vsub.f32 %v3082, %v3086
        %3089 = vst.msk [vmem:[%s244 + $0x4] sm:$0xf] %vm3019, %v3088
        %v3090 = vld [vmem:[%s239 + $0x4] sm:$0xf]
        %v3091 = vld [vmem:[#allocation4 + $0x4] sm:$0xff]
        %3093 = vrot.lane.b32.xlu0 %v3091, 100
        %v3094 = vpop.permute.xlu0 %3093
        %v3095 = vrot.slane %v3094, 4
        %vm3096 = vcmask 818176
        %v3097 = vsel %vm3096, %v3094, %v3095
        %v3099 = vsub.f32 %v3090, %v3097
        %3100 = vst.msk [vmem:[%s244 + $0x4] sm:$0xf] %vm3028, %v3099
        %v3101 = vld [vmem:[%s239 + $0x4] sm:$0xf]
        %v3102 = vld [vmem:[#allocation4 + $0x8] sm:$0xf]
        %3104 = vrot.lane.b32.xlu0 %v3102, 98
        %v3105 = vpop.permute.xlu0 %3104
        %v3107 = vsub.f32 %v3101, %v3105
        %3108 = vst.msk [vmem:[%s244 + $0x4] sm:$0xf] %vm3040, %v3107
        %p3109 = scmp.lt.s32.totalorder %s22, 1
        %s3110 = scalar_select %p3109, %s22, 1
        %s3111 = smul.addr %s3110, 2
        %s3112 = smul.addr %s3111, 4
        %s3113 = scalar_lea.vmem %s6, %s3112
        // Predicated region
        $region45: #{denoiser.1} parent=39 // pred_check
          %p3114 = pneg %p150
        $region46: #{denoiser.1} parent=39 // pred_check_branch
          %3116 = sbr.rel (%p3114) target = $region48
        $region47: #{denoiser.1} parent=39 // pred_region
          _
        $region48: #{denoiser.1} parent=39 // pred_fallthru
          _
      $region40: #{denoiser.1} parent=5 // pred_fallthru
        _
      %p3117 = scmp.le.s32.totalorder 2, %s17
      // Predicated region
      $region49: #{denoiser.1} parent=5 // pred_check
        %p3118 = pneg %p3117
      $region50: #{denoiser.1} parent=5 // pred_check_branch
        %3120 = sbr.rel (%p3118) target = $region52
      $region51: #{denoiser.1} parent=5 // pred_region
        %s3121 = ssub.s32 %s17, 2
        // Predicated region
        $region53: #{denoiser.1} parent=51 // pred_check
          %p3122 = pneg %p156
        $region54: #{denoiser.1} parent=51 // pred_check_branch
          %3124 = sbr.rel (%p3122) target = $region56
        $region55: #{denoiser.1} parent=51 // pred_region
          %p3125 = scmp.lt.s32.totalorder %s23, 1
          %s3126 = scalar_select %p3125, %s23, 1
          %s3127 = smul.addr %s3126, 2
          %s3128 = smul.addr %s3127, 4
          %s3129 = scalar_lea.vmem %s6, %s3128
        $region56: #{denoiser.1} parent=51 // pred_fallthru
          _
      $region52: #{denoiser.1} parent=5 // pred_fallthru
        _
    $region6: #{denoiser.1} parent=1 // loop_footer
      %s21 = sadd.s32 1, %s17
    $region7: #{denoiser.1} parent=1 // loop_footer_branch
      %16 = sbr.rel target = $region3
    $region8: #{denoiser.1} parent=1 // loop_exit
      _
    %3130 = vsyncpa [#allocation8], 1
    %s3131 = scalar_lea.sflag [#allocation8], 1
    %3132 = vsyncpa %s3131, 1

</llo_original>
